<compile_context>
chip_gen: v6e
topology: v6e:2x2x1
jax: 0.10.0
libtpu: 0.0.40
codegen_flags: <defaults>
</compile_context>

<pallas_src>
import math

import jax
import jax.numpy as jnp
from jax.experimental import pallas as pl
from jax.experimental.pallas import tpu as pltpu


# ----------------------------------------------------------------------------
# Pallas kernel: batched att-conv -> sigmoid -> gate -> post-conv -> grad loss
# ----------------------------------------------------------------------------
def _make_varloss_kernel(w, M, M_ext, PADL, RPS, ROWS_OUT):
    """Kernel closure.

    w        : width of the depth map (for the 3x3-shift lane offsets)
    M        : N*h*w flattened spatial size of one repetition
    M_ext    : M + 2*PADL (lane-padded repetition stride, multiple of 128)
    PADL     : lane zero-padding on each side of a repetition (>= w+1)
    RPS      : repetitions handled by one grid step
    ROWS_OUT : sublane rows of the per-step output block (multiple of 8)
    """

    def kernel(a_ref, gt_ref, d_ref, mask_ref, watt_ref, batt_ref,
               wpost_ref, bpost_ref, out_ref):
        # ---- att conv for ALL reps of this step: one bf16 MXU matmul --------
        # a_ref    : (K1, RPS*M_ext) bf16 im2col patch matrix (lane-concat reps)
        # watt_ref : (8, K1)         bf16 conv weights (rows >= CD are zero)
        att = jnp.dot(watt_ref[...], a_ref[...],
                      preferred_element_type=jnp.float32)       # (8, RPS*M_ext)
        sig = jax.nn.sigmoid(att + batt_ref[...])                # f32

        d_map = d_ref[...]                                       # (8, M_ext) f32
        masks = mask_ref[...]                                    # (9, M)
        wpost = wpost_ref[...]                                   # (8, 72) f32
        bpost = bpost_ref[...]                                   # (8, 1)
        gt_all = gt_ref[...]                                     # (3, RPS*M)

        beta = 0.01                                              # smooth-L1 beta
        eps = 1e-6

        def sl1(p, t):
            e = jnp.abs(p - t)
            return jnp.where(e < beta, 0.5 * e * e / beta, e - 0.5 * beta)

        nums, dens = [], []
        for r in range(RPS):                                     # unrolled
            # -------- ds = sigmoid(att) * d for rep r (128-aligned slice) ----
            ds = sig[:, r * M_ext:(r + 1) * M_ext] * d_map       # (8, M_ext)

            # -------- post conv3x3 (CD -> 2) via masked shifts + one matmul --
            pieces = []
            for k in range(9):
                off = (k // 3 - 1) * w + (k % 3 - 1)
                start = PADL + off
                pieces.append(ds[:, start:start + M] * masks[k:k + 1, :])
            patch2 = jnp.concatenate(pieces, axis=0)             # (72, M)
            post = jnp.dot(wpost, patch2,
                           preferred_element_type=jnp.float32) + bpost  # (8, M)

            # -------- log-gradients of pooled GT + validity masks ------------
            g = gt_all[:, r * M:(r + 1) * M]                     # (3, M)
            center, right, down = g[0:1, :], g[1:2, :], g[2:3, :]
            valid_c = center > 0.1
            mx = jnp.logical_and(valid_c, right > 0.1).astype(jnp.float32)
            my = jnp.logical_and(valid_c, down > 0.1).astype(jnp.float32)
            log_c = jnp.log(center + eps)
            gx = log_c - jnp.log(right + eps)                    # width diff
            gy = log_c - jnp.log(down + eps)                     # height diff

            # -------- fused masked smooth-L1 rows, two lane reductions -------
            s_num = sl1(post[0:1, :], gx) * mx + sl1(post[1:2, :], gy) * my
            s_den = mx + my
            nums.append(jnp.sum(s_num))
            dens.append(jnp.sum(s_den))

        # ---- one dense (ROWS_OUT, 128) store: row r = [num_r, den_r, 0...] --
        rowi = jax.lax.broadcasted_iota(jnp.int32, (ROWS_OUT, 128), 0)
        lane = jax.lax.broadcasted_iota(jnp.int32, (ROWS_OUT, 128), 1)
        acc = jnp.zeros((ROWS_OUT, 128), jnp.float32)
        for r in range(RPS):
            acc = jnp.where((rowi == r) & (lane == 0), nums[r], acc)
            acc = jnp.where((rowi == r) & (lane == 1), dens[r], acc)
        out_ref[...] = acc

    return kernel


def varloss_pallas(a_cat, gt_cat, d, params, *, R, G, RPS, M, M_ext, PADL):
    """a_cat: (K1, R*M_ext) bf16 patch matrices, gt_cat: (3, R*M) f32 planes."""
    w_att, b_att, w_post, b_post = params
    K1 = a_cat.shape[0]
    N, CD, h, w = d.shape
    CF = w_att.shape[1]
    f32, bf16 = jnp.float32, jnp.bfloat16

    # d in lane-dense (channel, N*h*w) layout, rows padded to 8, lanes to M_ext.
    d_t = d.transpose(1, 0, 2, 3).reshape(CD, M).astype(f32)
    d_ext = jnp.pad(d_t, ((0, 8 - CD), (PADL, PADL)))            # (8, M_ext)

    # Structural validity masks for the 9 post-conv shifts (zero-pad border).
    yy = jnp.arange(h)[:, None]
    xx = jnp.arange(w)[None, :]
    mrows = []
    for ky in range(3):
        for kx in range(3):
            sy, sx = ky - 1, kx - 1
            mm = ((yy + sy >= 0) & (yy + sy < h)
                  & (xx + sx >= 0) & (xx + sx < w))
            mrows.append(jnp.broadcast_to(mm[None], (N, h, w)).reshape(M))
    shift_mask = jnp.stack(mrows, axis=0).astype(f32)            # (9, M)

    # Conv weights as small VMEM matrices (rows padded to 8 sublanes).
    wa = jnp.pad(w_att.astype(f32), ((0, 8 - CD), (0, 0), (0, 0), (0, 0)))
    wa = wa.transpose(0, 2, 3, 1).reshape(8, 9 * CF)             # col = k*CF+ci
    wa = jnp.pad(wa, ((0, 0), (0, K1 - 9 * CF))).astype(bf16)    # (8, K1) bf16
    ba = jnp.pad(b_att.astype(f32).reshape(CD, 1), ((0, 8 - CD), (0, 0)))

    wp = jnp.pad(w_post.astype(f32), ((0, 6), (0, 8 - CD), (0, 0), (0, 0)))
    wp = wp.transpose(0, 2, 3, 1).reshape(8, 9 * 8)              # col = k*8+ci
    bp = jnp.pad(b_post.astype(f32).reshape(2, 1), ((0, 6), (0, 0)))

    ROWS_OUT = ((RPS + 7) // 8) * 8
    kernel = _make_varloss_kernel(w, M, M_ext, PADL, RPS, ROWS_OUT)

    out = pl.pallas_call(
        kernel,
        out_shape=jax.ShapeDtypeStruct((G * ROWS_OUT, 128), f32),
        grid=(G,),
        in_specs=[
            pl.BlockSpec((K1, RPS * M_ext), lambda g: (0, g)),   # patches (bf16)
            pl.BlockSpec((3, RPS * M), lambda g: (0, g)),        # gt planes
            pl.BlockSpec((8, M_ext), lambda g: (0, 0)),          # d (const)
            pl.BlockSpec((9, M), lambda g: (0, 0)),              # shift masks
            pl.BlockSpec((8, K1), lambda g: (0, 0)),             # w_att (bf16)
            pl.BlockSpec((8, 1), lambda g: (0, 0)),              # b_att
            pl.BlockSpec((8, 9 * 8), lambda g: (0, 0)),          # w_post
            pl.BlockSpec((8, 1), lambda g: (0, 0)),              # b_post
        ],
        out_specs=pl.BlockSpec((ROWS_OUT, 128), lambda g: (g, 0)),
        compiler_params=pltpu.CompilerParams(
            dimension_semantics=("parallel",)),                   # v7x: 2 TCs
    )(a_cat, gt_cat, d_ext, shift_mask, wa, ba, wp, bp)
    return out


# ----------------------------------------------------------------------------
# Plain-JAX glue (data-dependent gathers: random pooling + grid_sample + im2col)
# ----------------------------------------------------------------------------
def random_pooling(gt, out_h, out_w, key):
    # Equivalent of rand*mask + adaptive_max_pool2d(return_indices) + gather,
    # assuming H % out_h == 0 and W % out_w == 0.
    n, c, H, W = gt.shape
    kH, kW = H // out_h, W // out_w
    rand = jax.random.uniform(key, (n, c, H, W), dtype=gt.dtype)
    r = rand * (gt > 0.1).astype(gt.dtype)
    rw = r.reshape(n, c, out_h, kH, out_w, kW)
    rw = rw.transpose(0, 1, 2, 4, 3, 5).reshape(n, c, out_h, out_w, kH * kW)
    local = jnp.argmax(rw, axis=-1)
    ly, lx = local // kW, local % kW
    oy = jnp.arange(out_h, dtype=jnp.int32)[None, None, :, None] * kH + ly
    ox = jnp.arange(out_w, dtype=jnp.int32)[None, None, None, :] * kW + lx
    indices = oy * W + ox                                   # (n, c, out_h, out_w)
    flat_gt = gt.reshape(n, c, H * W)
    reshaped_gt = jnp.take_along_axis(flat_gt, indices.reshape(n, c, -1), axis=-1)
    reshaped_gt = reshaped_gt.reshape(n, c, out_h, out_w)
    reshaped_gt = jnp.where(reshaped_gt < 0.1, 0.0, reshaped_gt)
    return reshaped_gt, indices


def grid_sample_bilinear(feat, grid):
    # mode='bilinear', align_corners=True, padding_mode='zeros'
    # Four corner gathers merged into a single take_along_axis.
    n, C, Hf, Wf = feat.shape
    h, w = grid.shape[1], grid.shape[2]
    gx, gy = grid[..., 0], grid[..., 1]
    x = (gx + 1.0) * 0.5 * (Wf - 1)
    y = (gy + 1.0) * 0.5 * (Hf - 1)
    x0, y0 = jnp.floor(x), jnp.floor(y)
    x1, y1 = x0 + 1.0, y0 + 1.0
    wx1, wy1 = x - x0, y - y0
    wx0, wy0 = 1.0 - wx1, 1.0 - wy1

    xs = jnp.stack([x0, x1, x0, x1], axis=1)                 # (n, 4, h, w)
    ys = jnp.stack([y0, y0, y1, y1], axis=1)
    ws = jnp.stack([wx0 * wy0, wx1 * wy0, wx0 * wy1, wx1 * wy1], axis=1)
    valid = ((xs >= 0) & (xs <= Wf - 1)
             & (ys >= 0) & (ys <= Hf - 1)).astype(feat.dtype)
    xc = jnp.clip(xs, 0, Wf - 1).astype(jnp.int32)
    yc = jnp.clip(ys, 0, Hf - 1).astype(jnp.int32)
    idx = (yc * Wf + xc).reshape(n, 1, 4 * h * w)

    flat = feat.reshape(n, C, Hf * Wf)
    v = jnp.take_along_axis(flat, jnp.broadcast_to(idx, (n, C, 4 * h * w)),
                            axis=-1)
    v = v.reshape(n, C, 4, h, w)
    wv = (ws * valid).reshape(n, 1, 4, h, w)
    return jnp.sum(v * wv, axis=2)                           # (n, C, h, w)


def _prepare_single(feat, d, gts, key, padl, k1):
    """Per-repetition glue: pooling + grid_sample + im2col + GT shift planes."""
    n, cd, h, w = d.shape
    CF = feat.shape[1]
    H, W = gts.shape[2], gts.shape[3]
    M = n * h * w

    reshaped_gt, indices = random_pooling(gts, h, w, key)
    bias_x = W // w // 2
    bias_y = (H // h // 2) * W
    indices = indices + bias_x + bias_y
    ind_x = (indices % W).astype(d.dtype) / W
    ind_y = (indices // W).astype(d.dtype) / H
    ind_x = 2.0 * (ind_x - 0.5)
    ind_y = 2.0 * (ind_y - 0.5)
    grid = jnp.concatenate([ind_x, ind_y], axis=1)           # (n, 2, h, w)
    grid = jnp.transpose(grid, (0, 2, 3, 1))                  # (n, h, w, 2)
    feat_s = grid_sample_bilinear(feat, grid)                 # (n, CF, h, w)

    # im2col of the sampled features (zero-padded 3x3 neighbourhood).
    fp = jnp.pad(feat_s, ((0, 0), (0, 0), (1, 1), (1, 1)))
    cols = []
    for ky in range(3):
        for kx in range(3):
            cols.append(fp[:, :, ky:ky + h, kx:kx + w])       # (n, CF, h, w)
    A = jnp.stack(cols, axis=0)                               # (9, n, CF, h, w)
    A = A.transpose(0, 2, 1, 3, 4).reshape(9 * CF, M)         # row = k*CF + ci
    A = jnp.pad(A, ((0, k1 - 9 * CF), (padl, padl)))          # (K1, M + 2*padl)

    # GT center/right/down planes (exactly PyTorch's F.pad + slices).
    gpad = jnp.pad(reshaped_gt, ((0, 0), (0, 0), (1, 1), (1, 1)))
    center = gpad[:, 0, 1:1 + h, 1:1 + w]
    right = gpad[:, 0, 1:1 + h, 2:2 + w]
    down = gpad[:, 0, 2:2 + h, 1:1 + w]
    gt3 = jnp.stack([center, right, down], axis=0).reshape(3, M)
    return A, gt3


def var_loss_forward(params, x, d, gts, key, r=10):
    n, cd, h, w = d.shape
    cf = x.shape[1]
    M = n * h * w
    PADL = 64                    # lane pad; must cover the widest conv shift
    assert PADL >= w + 1, "PADL must be >= w+1 for the shifted-slice post conv"
    M_ext = M + 2 * PADL
    assert M % 128 == 0 and M_ext % 128 == 0, "flattened sizes must be lane tiles"
    K1 = ((9 * cf + 7) // 8) * 8

    G = 2 if r % 2 == 0 else 1   # 2 grid steps keep both v7x TensorCores busy
    RPS = r // G

    keys = jax.random.split(key, r)
    A_all, gt_all = jax.vmap(
        lambda k: _prepare_single(x, d, gts, k, PADL, K1),
        out_axes=(1, 1))(keys)                    # (K1, r, M_ext), (3, r, M)
    a_cat = A_all.reshape(K1, r * M_ext).astype(jnp.bfloat16)  # halves input DMA
    gt_cat = gt_all.reshape(3, r * M).astype(jnp.float32)

    sums = varloss_pallas(a_cat, gt_cat, d, params, R=r, G=G, RPS=RPS,
                          M=M, M_ext=M_ext, PADL=PADL)   # (G*ROWS_OUT, 128)
    ROWS_OUT = sums.shape[0] // G
    sums = sums.reshape(G, ROWS_OUT, 128)[:, :RPS, :2].reshape(r, 2)
    num, den = sums[:, 0], sums[:, 1]
    # NOTE: like the original module, den == 0 (no valid GT pixels) gives NaN.
    return jnp.mean(num / den)


def init_params(key, depth_channel, feat_channel):
    k1, k2, k3, k4 = jax.random.split(key, 4)
    b_att_bound = 1.0 / math.sqrt(feat_channel * 9)
    b_post_bound = 1.0 / math.sqrt(depth_channel * 9)
    w_att = jax.random.uniform(k1, (depth_channel, feat_channel, 3, 3),
                               jnp.float32, -b_att_bound, b_att_bound)
    b_att = jax.random.uniform(k2, (depth_channel,), jnp.float32,
                               -b_att_bound, b_att_bound)
    w_post = jax.random.uniform(k3, (2, depth_channel, 3, 3), jnp.float32,
                                -b_post_bound, b_post_bound)
    b_post = jax.random.uniform(k4, (2,), jnp.float32,
                                -b_post_bound, b_post_bound)
    return (w_att, b_att, w_post, b_post)


if __name__ == "__main__":
    key = jax.random.PRNGKey(0)
    kx, kd, kg, kp, kr = jax.random.split(key, 5)

    N, FEAT_C, DEPTH_C = 2, 4, 4
    h = w = 16          # d / feature spatial size
    H = W = 32          # ground-truth spatial size (2x2 pooling windows)

    x = jax.random.normal(kx, (N, FEAT_C, h, w), jnp.float32)
    d = jax.random.normal(kd, (N, DEPTH_C, h, w), jnp.float32)
    gts = jax.random.uniform(kg, (N, 1, H, W), jnp.float32, 0.0, 10.0)

    params = init_params(kp, DEPTH_C, FEAT_C)

    loss_fn = jax.jit(
        lambda p, xx, dd, gg, kk: var_loss_forward(p, xx, dd, gg, kk, r=10))
    loss = loss_fn(params, x, d, gts, kr)
    loss = jax.block_until_ready(loss)
    print("KERNEL_OK")
</pallas_src>

<mosaic_0001>
module attributes {stable_mosaic.version = 11 : i64} {
  func.func @kernel(%arg0: i32, %arg1: memref<40x3200xbf16, #tpu.memory_space<vmem>>, %arg2: memref<3x2560xf32, #tpu.memory_space<vmem>>, %arg3: memref<8x640xf32, #tpu.memory_space<vmem>>, %arg4: memref<9x512xf32, #tpu.memory_space<vmem>>, %arg5: memref<8x40xbf16, #tpu.memory_space<vmem>>, %arg6: memref<8x1xf32, #tpu.memory_space<vmem>>, %arg7: memref<8x72xf32, #tpu.memory_space<vmem>>, %arg8: memref<8x1xf32, #tpu.memory_space<vmem>>, %arg9: memref<8x128xf32, #tpu.memory_space<vmem>>) attributes {dimension_semantics = [#tpu.dimension_semantics<parallel>], iteration_bounds = array<i64: 2>, scalar_prefetch = 0 : i64, scratch_operands = 0 : i64, tpu.core_type = #tpu.core_type<tc>, window_params = [{transform_indices = @transform_0, window_bounds = array<i64: 40, 3200>}, {transform_indices = @transform_1, window_bounds = array<i64: 3, 2560>}, {pipeline_mode = #tpu.pipeline_mode<synchronous>, transform_indices = @transform_2, window_bounds = array<i64: 8, 640>}, {pipeline_mode = #tpu.pipeline_mode<synchronous>, transform_indices = @transform_3, window_bounds = array<i64: 9, 512>}, {pipeline_mode = #tpu.pipeline_mode<synchronous>, transform_indices = @transform_4, window_bounds = array<i64: 8, 40>}, {pipeline_mode = #tpu.pipeline_mode<synchronous>, transform_indices = @transform_5, window_bounds = array<i64: 8, 1>}, {pipeline_mode = #tpu.pipeline_mode<synchronous>, transform_indices = @transform_6, window_bounds = array<i64: 8, 72>}, {pipeline_mode = #tpu.pipeline_mode<synchronous>, transform_indices = @transform_7, window_bounds = array<i64: 8, 1>}, {transform_indices = @transform_8, window_bounds = array<i64: 8, 128>}]} {
    %c0 = arith.constant 0 : index
    %c0_0 = arith.constant 0 : index
    %0 = vector.load %arg5[%c0, %c0_0] : memref<8x40xbf16, #tpu.memory_space<vmem>>, vector<8x40xbf16>
    %c0_1 = arith.constant 0 : index
    %c0_2 = arith.constant 0 : index
    %1 = vector.load %arg1[%c0_1, %c0_2] : memref<40x3200xbf16, #tpu.memory_space<vmem>>, vector<40x3200xbf16>
    %cst = arith.constant dense<0.000000e+00> : vector<8x3200xf32>
    %2 = tpu.matmul %0, %1, %cst {dimension_numbers = #tpu.dot_dimension_numbers<[1], [0], [0], [1], [0, 0, 1, 1], [], []>} : vector<8x40xbf16>, vector<40x3200xbf16>, vector<8x3200xf32> -> vector<8x3200xf32>
    %c0_3 = arith.constant 0 : index
    %c0_4 = arith.constant 0 : index
    %3 = vector.load %arg6[%c0_3, %c0_4] : memref<8x1xf32, #tpu.memory_space<vmem>>, vector<8x1xf32>
    %4 = vector.broadcast %3 : vector<8x1xf32> to vector<8x3200xf32>
    %5 = arith.addf %2, %4 : vector<8x3200xf32>
    %6 = arith.negf %5 : vector<8x3200xf32>
    %7 = math.exp %6 : vector<8x3200xf32>
    %cst_5 = arith.constant 1.000000e+00 : f32
    %8 = vector.broadcast %cst_5 : f32 to vector<8x3200xf32>
    %9 = arith.addf %8, %7 : vector<8x3200xf32>
    %10 = arith.divf %8, %9 : vector<8x3200xf32>
    %c0_6 = arith.constant 0 : index
    %c0_7 = arith.constant 0 : index
    %11 = vector.load %arg3[%c0_6, %c0_7] : memref<8x640xf32, #tpu.memory_space<vmem>>, vector<8x640xf32>
    %c0_8 = arith.constant 0 : index
    %c0_9 = arith.constant 0 : index
    %12 = vector.load %arg4[%c0_8, %c0_9] : memref<9x512xf32, #tpu.memory_space<vmem>>, vector<9x512xf32>
    %c0_10 = arith.constant 0 : index
    %c0_11 = arith.constant 0 : index
    %13 = vector.load %arg7[%c0_10, %c0_11] : memref<8x72xf32, #tpu.memory_space<vmem>>, vector<8x72xf32>
    %c0_12 = arith.constant 0 : index
    %c0_13 = arith.constant 0 : index
    %14 = vector.load %arg8[%c0_12, %c0_13] : memref<8x1xf32, #tpu.memory_space<vmem>>, vector<8x1xf32>
    %c0_14 = arith.constant 0 : index
    %c0_15 = arith.constant 0 : index
    %15 = vector.load %arg2[%c0_14, %c0_15] : memref<3x2560xf32, #tpu.memory_space<vmem>>, vector<3x2560xf32>
    %16 = vector.extract_strided_slice %10 {offsets = [0, 0], sizes = [8, 640], strides = [1, 1]} : vector<8x3200xf32> to vector<8x640xf32>
    %17 = arith.mulf %16, %11 : vector<8x640xf32>
    %18 = vector.extract_strided_slice %17 {offsets = [0, 47], sizes = [8, 512], strides = [1, 1]} : vector<8x640xf32> to vector<8x512xf32>
    %19 = vector.extract_strided_slice %12 {offsets = [0, 0], sizes = [1, 512], strides = [1, 1]} : vector<9x512xf32> to vector<1x512xf32>
    %20 = vector.broadcast %19 : vector<1x512xf32> to vector<8x512xf32>
    %21 = arith.mulf %18, %20 : vector<8x512xf32>
    %22 = vector.extract_strided_slice %17 {offsets = [0, 48], sizes = [8, 512], strides = [1, 1]} : vector<8x640xf32> to vector<8x512xf32>
    %23 = vector.extract_strided_slice %12 {offsets = [1, 0], sizes = [1, 512], strides = [1, 1]} : vector<9x512xf32> to vector<1x512xf32>
    %24 = vector.broadcast %23 : vector<1x512xf32> to vector<8x512xf32>
    %25 = arith.mulf %22, %24 : vector<8x512xf32>
    %26 = vector.extract_strided_slice %17 {offsets = [0, 49], sizes = [8, 512], strides = [1, 1]} : vector<8x640xf32> to vector<8x512xf32>
    %27 = vector.extract_strided_slice %12 {offsets = [2, 0], sizes = [1, 512], strides = [1, 1]} : vector<9x512xf32> to vector<1x512xf32>
    %28 = vector.broadcast %27 : vector<1x512xf32> to vector<8x512xf32>
    %29 = arith.mulf %26, %28 : vector<8x512xf32>
    %30 = vector.extract_strided_slice %17 {offsets = [0, 63], sizes = [8, 512], strides = [1, 1]} : vector<8x640xf32> to vector<8x512xf32>
    %31 = vector.extract_strided_slice %12 {offsets = [3, 0], sizes = [1, 512], strides = [1, 1]} : vector<9x512xf32> to vector<1x512xf32>
    %32 = vector.broadcast %31 : vector<1x512xf32> to vector<8x512xf32>
    %33 = arith.mulf %30, %32 : vector<8x512xf32>
    %34 = vector.extract_strided_slice %17 {offsets = [0, 64], sizes = [8, 512], strides = [1, 1]} : vector<8x640xf32> to vector<8x512xf32>
    %35 = vector.extract_strided_slice %12 {offsets = [4, 0], sizes = [1, 512], strides = [1, 1]} : vector<9x512xf32> to vector<1x512xf32>
    %36 = vector.broadcast %35 : vector<1x512xf32> to vector<8x512xf32>
    %37 = arith.mulf %34, %36 : vector<8x512xf32>
    %38 = vector.extract_strided_slice %17 {offsets = [0, 65], sizes = [8, 512], strides = [1, 1]} : vector<8x640xf32> to vector<8x512xf32>
    %39 = vector.extract_strided_slice %12 {offsets = [5, 0], sizes = [1, 512], strides = [1, 1]} : vector<9x512xf32> to vector<1x512xf32>
    %40 = vector.broadcast %39 : vector<1x512xf32> to vector<8x512xf32>
    %41 = arith.mulf %38, %40 : vector<8x512xf32>
    %42 = vector.extract_strided_slice %17 {offsets = [0, 79], sizes = [8, 512], strides = [1, 1]} : vector<8x640xf32> to vector<8x512xf32>
    %43 = vector.extract_strided_slice %12 {offsets = [6, 0], sizes = [1, 512], strides = [1, 1]} : vector<9x512xf32> to vector<1x512xf32>
    %44 = vector.broadcast %43 : vector<1x512xf32> to vector<8x512xf32>
    %45 = arith.mulf %42, %44 : vector<8x512xf32>
    %46 = vector.extract_strided_slice %17 {offsets = [0, 80], sizes = [8, 512], strides = [1, 1]} : vector<8x640xf32> to vector<8x512xf32>
    %47 = vector.extract_strided_slice %12 {offsets = [7, 0], sizes = [1, 512], strides = [1, 1]} : vector<9x512xf32> to vector<1x512xf32>
    %48 = vector.broadcast %47 : vector<1x512xf32> to vector<8x512xf32>
    %49 = arith.mulf %46, %48 : vector<8x512xf32>
    %50 = vector.extract_strided_slice %17 {offsets = [0, 81], sizes = [8, 512], strides = [1, 1]} : vector<8x640xf32> to vector<8x512xf32>
    %51 = vector.extract_strided_slice %12 {offsets = [8, 0], sizes = [1, 512], strides = [1, 1]} : vector<9x512xf32> to vector<1x512xf32>
    %52 = vector.broadcast %51 : vector<1x512xf32> to vector<8x512xf32>
    %53 = arith.mulf %50, %52 : vector<8x512xf32>
    %54 = tpu.concatenate %21, %25, %29, %33, %37, %41, %45, %49, %53 in 0 : vector<8x512xf32>, vector<8x512xf32>, vector<8x512xf32>, vector<8x512xf32>, vector<8x512xf32>, vector<8x512xf32>, vector<8x512xf32>, vector<8x512xf32>, vector<8x512xf32> -> vector<72x512xf32>
    %cst_16 = arith.constant dense<0.000000e+00> : vector<8x512xf32>
    %55 = tpu.matmul %13, %54, %cst_16 {dimension_numbers = #tpu.dot_dimension_numbers<[1], [0], [0], [1], [0, 0, 1, 1], [], []>} : vector<8x72xf32>, vector<72x512xf32>, vector<8x512xf32> -> vector<8x512xf32>
    %56 = vector.broadcast %14 : vector<8x1xf32> to vector<8x512xf32>
    %57 = arith.addf %55, %56 : vector<8x512xf32>
    %58 = vector.extract_strided_slice %15 {offsets = [0, 0], sizes = [3, 512], strides = [1, 1]} : vector<3x2560xf32> to vector<3x512xf32>
    %59 = vector.extract_strided_slice %58 {offsets = [0, 0], sizes = [1, 512], strides = [1, 1]} : vector<3x512xf32> to vector<1x512xf32>
    %60 = vector.extract_strided_slice %58 {offsets = [1, 0], sizes = [1, 512], strides = [1, 1]} : vector<3x512xf32> to vector<1x512xf32>
    %61 = vector.extract_strided_slice %58 {offsets = [2, 0], sizes = [1, 512], strides = [1, 1]} : vector<3x512xf32> to vector<1x512xf32>
    %cst_17 = arith.constant 1.000000e-01 : f32
    %62 = vector.broadcast %cst_17 : f32 to vector<1x512xf32>
    %63 = arith.cmpf ogt, %59, %62 : vector<1x512xf32>
    %cst_18 = arith.constant 1.000000e-01 : f32
    %64 = vector.broadcast %cst_18 : f32 to vector<1x512xf32>
    %65 = arith.cmpf ogt, %60, %64 : vector<1x512xf32>
    %66 = arith.andi %63, %65 : vector<1x512xi1>
    %67 = arith.extui %66 : vector<1x512xi1> to vector<1x512xi32>
    %68 = arith.sitofp %67 : vector<1x512xi32> to vector<1x512xf32>
    %cst_19 = arith.constant 1.000000e-01 : f32
    %69 = vector.broadcast %cst_19 : f32 to vector<1x512xf32>
    %70 = arith.cmpf ogt, %61, %69 : vector<1x512xf32>
    %71 = arith.andi %63, %70 : vector<1x512xi1>
    %72 = arith.extui %71 : vector<1x512xi1> to vector<1x512xi32>
    %73 = arith.sitofp %72 : vector<1x512xi32> to vector<1x512xf32>
    %cst_20 = arith.constant 9.99999997E-7 : f32
    %74 = vector.broadcast %cst_20 : f32 to vector<1x512xf32>
    %75 = arith.addf %59, %74 : vector<1x512xf32>
    %76 = math.log %75 : vector<1x512xf32>
    %cst_21 = arith.constant 9.99999997E-7 : f32
    %77 = vector.broadcast %cst_21 : f32 to vector<1x512xf32>
    %78 = arith.addf %60, %77 : vector<1x512xf32>
    %79 = math.log %78 : vector<1x512xf32>
    %80 = arith.subf %76, %79 : vector<1x512xf32>
    %cst_22 = arith.constant 9.99999997E-7 : f32
    %81 = vector.broadcast %cst_22 : f32 to vector<1x512xf32>
    %82 = arith.addf %61, %81 : vector<1x512xf32>
    %83 = math.log %82 : vector<1x512xf32>
    %84 = arith.subf %76, %83 : vector<1x512xf32>
    %85 = vector.extract_strided_slice %57 {offsets = [0, 0], sizes = [1, 512], strides = [1, 1]} : vector<8x512xf32> to vector<1x512xf32>
    %86 = arith.subf %85, %80 : vector<1x512xf32>
    %87 = math.absf %86 : vector<1x512xf32>
    %cst_23 = arith.constant 0.00999999977 : f32
    %88 = vector.broadcast %cst_23 : f32 to vector<1x512xf32>
    %89 = arith.cmpf olt, %87, %88 : vector<1x512xf32>
    %cst_24 = arith.constant 5.000000e-01 : f32
    %90 = vector.broadcast %cst_24 : f32 to vector<1x512xf32>
    %91 = arith.mulf %90, %87 : vector<1x512xf32>
    %92 = arith.mulf %91, %87 : vector<1x512xf32>
    %cst_25 = arith.constant 0.00999999977 : f32
    %93 = vector.broadcast %cst_25 : f32 to vector<1x512xf32>
    %94 = arith.divf %92, %93 : vector<1x512xf32>
    %cst_26 = arith.constant 5.000000e-03 : f32
    %95 = vector.broadcast %cst_26 : f32 to vector<1x512xf32>
    %96 = arith.subf %87, %95 : vector<1x512xf32>
    %97 = arith.select %89, %94, %96 : vector<1x512xi1>, vector<1x512xf32>
    %98 = arith.mulf %97, %68 : vector<1x512xf32>
    %99 = vector.extract_strided_slice %57 {offsets = [1, 0], sizes = [1, 512], strides = [1, 1]} : vector<8x512xf32> to vector<1x512xf32>
    %100 = arith.subf %99, %84 : vector<1x512xf32>
    %101 = math.absf %100 : vector<1x512xf32>
    %cst_27 = arith.constant 0.00999999977 : f32
    %102 = vector.broadcast %cst_27 : f32 to vector<1x512xf32>
    %103 = arith.cmpf olt, %101, %102 : vector<1x512xf32>
    %cst_28 = arith.constant 5.000000e-01 : f32
    %104 = vector.broadcast %cst_28 : f32 to vector<1x512xf32>
    %105 = arith.mulf %104, %101 : vector<1x512xf32>
    %106 = arith.mulf %105, %101 : vector<1x512xf32>
    %cst_29 = arith.constant 0.00999999977 : f32
    %107 = vector.broadcast %cst_29 : f32 to vector<1x512xf32>
    %108 = arith.divf %106, %107 : vector<1x512xf32>
    %cst_30 = arith.constant 5.000000e-03 : f32
    %109 = vector.broadcast %cst_30 : f32 to vector<1x512xf32>
    %110 = arith.subf %101, %109 : vector<1x512xf32>
    %111 = arith.select %103, %108, %110 : vector<1x512xi1>, vector<1x512xf32>
    %112 = arith.mulf %111, %73 : vector<1x512xf32>
    %113 = arith.addf %98, %112 : vector<1x512xf32>
    %114 = arith.addf %68, %73 : vector<1x512xf32>
    %115 = vector.shape_cast %113 : vector<1x512xf32> to vector<1x1x512xf32>
    %cst_31 = arith.constant dense<0.000000e+00> : vector<1xf32>
    %116 = vector.multi_reduction <add>, %115, %cst_31 [1, 2] : vector<1x1x512xf32> to vector<1xf32>
    %117 = vector.shape_cast %116 : vector<1xf32> to vector<1x1x1xf32>
    %118 = vector.extract %117[0, 0, 0] : f32 from vector<1x1x1xf32>
    %119 = vector.shape_cast %114 : vector<1x512xf32> to vector<1x1x512xf32>
    %cst_32 = arith.constant dense<0.000000e+00> : vector<1xf32>
    %120 = vector.multi_reduction <add>, %119, %cst_32 [1, 2] : vector<1x1x512xf32> to vector<1xf32>
    %121 = vector.shape_cast %120 : vector<1xf32> to vector<1x1x1xf32>
    %122 = vector.extract %121[0, 0, 0] : f32 from vector<1x1x1xf32>
    %123 = vector.extract_strided_slice %10 {offsets = [0, 640], sizes = [8, 640], strides = [1, 1]} : vector<8x3200xf32> to vector<8x640xf32>
    %124 = arith.mulf %123, %11 : vector<8x640xf32>
    %125 = vector.extract_strided_slice %124 {offsets = [0, 47], sizes = [8, 512], strides = [1, 1]} : vector<8x640xf32> to vector<8x512xf32>
    %126 = vector.extract_strided_slice %12 {offsets = [0, 0], sizes = [1, 512], strides = [1, 1]} : vector<9x512xf32> to vector<1x512xf32>
    %127 = vector.broadcast %126 : vector<1x512xf32> to vector<8x512xf32>
    %128 = arith.mulf %125, %127 : vector<8x512xf32>
    %129 = vector.extract_strided_slice %124 {offsets = [0, 48], sizes = [8, 512], strides = [1, 1]} : vector<8x640xf32> to vector<8x512xf32>
    %130 = vector.extract_strided_slice %12 {offsets = [1, 0], sizes = [1, 512], strides = [1, 1]} : vector<9x512xf32> to vector<1x512xf32>
    %131 = vector.broadcast %130 : vector<1x512xf32> to vector<8x512xf32>
    %132 = arith.mulf %129, %131 : vector<8x512xf32>
    %133 = vector.extract_strided_slice %124 {offsets = [0, 49], sizes = [8, 512], strides = [1, 1]} : vector<8x640xf32> to vector<8x512xf32>
    %134 = vector.extract_strided_slice %12 {offsets = [2, 0], sizes = [1, 512], strides = [1, 1]} : vector<9x512xf32> to vector<1x512xf32>
    %135 = vector.broadcast %134 : vector<1x512xf32> to vector<8x512xf32>
    %136 = arith.mulf %133, %135 : vector<8x512xf32>
    %137 = vector.extract_strided_slice %124 {offsets = [0, 63], sizes = [8, 512], strides = [1, 1]} : vector<8x640xf32> to vector<8x512xf32>
    %138 = vector.extract_strided_slice %12 {offsets = [3, 0], sizes = [1, 512], strides = [1, 1]} : vector<9x512xf32> to vector<1x512xf32>
    %139 = vector.broadcast %138 : vector<1x512xf32> to vector<8x512xf32>
    %140 = arith.mulf %137, %139 : vector<8x512xf32>
    %141 = vector.extract_strided_slice %124 {offsets = [0, 64], sizes = [8, 512], strides = [1, 1]} : vector<8x640xf32> to vector<8x512xf32>
    %142 = vector.extract_strided_slice %12 {offsets = [4, 0], sizes = [1, 512], strides = [1, 1]} : vector<9x512xf32> to vector<1x512xf32>
    %143 = vector.broadcast %142 : vector<1x512xf32> to vector<8x512xf32>
    %144 = arith.mulf %141, %143 : vector<8x512xf32>
    %145 = vector.extract_strided_slice %124 {offsets = [0, 65], sizes = [8, 512], strides = [1, 1]} : vector<8x640xf32> to vector<8x512xf32>
    %146 = vector.extract_strided_slice %12 {offsets = [5, 0], sizes = [1, 512], strides = [1, 1]} : vector<9x512xf32> to vector<1x512xf32>
    %147 = vector.broadcast %146 : vector<1x512xf32> to vector<8x512xf32>
    %148 = arith.mulf %145, %147 : vector<8x512xf32>
    %149 = vector.extract_strided_slice %124 {offsets = [0, 79], sizes = [8, 512], strides = [1, 1]} : vector<8x640xf32> to vector<8x512xf32>
    %150 = vector.extract_strided_slice %12 {offsets = [6, 0], sizes = [1, 512], strides = [1, 1]} : vector<9x512xf32> to vector<1x512xf32>
    %151 = vector.broadcast %150 : vector<1x512xf32> to vector<8x512xf32>
    %152 = arith.mulf %149, %151 : vector<8x512xf32>
    %153 = vector.extract_strided_slice %124 {offsets = [0, 80], sizes = [8, 512], strides = [1, 1]} : vector<8x640xf32> to vector<8x512xf32>
    %154 = vector.extract_strided_slice %12 {offsets = [7, 0], sizes = [1, 512], strides = [1, 1]} : vector<9x512xf32> to vector<1x512xf32>
    %155 = vector.broadcast %154 : vector<1x512xf32> to vector<8x512xf32>
    %156 = arith.mulf %153, %155 : vector<8x512xf32>
    %157 = vector.extract_strided_slice %124 {offsets = [0, 81], sizes = [8, 512], strides = [1, 1]} : vector<8x640xf32> to vector<8x512xf32>
    %158 = vector.extract_strided_slice %12 {offsets = [8, 0], sizes = [1, 512], strides = [1, 1]} : vector<9x512xf32> to vector<1x512xf32>
    %159 = vector.broadcast %158 : vector<1x512xf32> to vector<8x512xf32>
    %160 = arith.mulf %157, %159 : vector<8x512xf32>
    %161 = tpu.concatenate %128, %132, %136, %140, %144, %148, %152, %156, %160 in 0 : vector<8x512xf32>, vector<8x512xf32>, vector<8x512xf32>, vector<8x512xf32>, vector<8x512xf32>, vector<8x512xf32>, vector<8x512xf32>, vector<8x512xf32>, vector<8x512xf32> -> vector<72x512xf32>
    %cst_33 = arith.constant dense<0.000000e+00> : vector<8x512xf32>
    %162 = tpu.matmul %13, %161, %cst_33 {dimension_numbers = #tpu.dot_dimension_numbers<[1], [0], [0], [1], [0, 0, 1, 1], [], []>} : vector<8x72xf32>, vector<72x512xf32>, vector<8x512xf32> -> vector<8x512xf32>
    %163 = vector.broadcast %14 : vector<8x1xf32> to vector<8x512xf32>
    %164 = arith.addf %162, %163 : vector<8x512xf32>
    %165 = vector.extract_strided_slice %15 {offsets = [0, 512], sizes = [3, 512], strides = [1, 1]} : vector<3x2560xf32> to vector<3x512xf32>
    %166 = vector.extract_strided_slice %165 {offsets = [0, 0], sizes = [1, 512], strides = [1, 1]} : vector<3x512xf32> to vector<1x512xf32>
    %167 = vector.extract_strided_slice %165 {offsets = [1, 0], sizes = [1, 512], strides = [1, 1]} : vector<3x512xf32> to vector<1x512xf32>
    %168 = vector.extract_strided_slice %165 {offsets = [2, 0], sizes = [1, 512], strides = [1, 1]} : vector<3x512xf32> to vector<1x512xf32>
    %cst_34 = arith.constant 1.000000e-01 : f32
    %169 = vector.broadcast %cst_34 : f32 to vector<1x512xf32>
    %170 = arith.cmpf ogt, %166, %169 : vector<1x512xf32>
    %cst_35 = arith.constant 1.000000e-01 : f32
    %171 = vector.broadcast %cst_35 : f32 to vector<1x512xf32>
    %172 = arith.cmpf ogt, %167, %171 : vector<1x512xf32>
    %173 = arith.andi %170, %172 : vector<1x512xi1>
    %174 = arith.extui %173 : vector<1x512xi1> to vector<1x512xi32>
    %175 = arith.sitofp %174 : vector<1x512xi32> to vector<1x512xf32>
    %cst_36 = arith.constant 1.000000e-01 : f32
    %176 = vector.broadcast %cst_36 : f32 to vector<1x512xf32>
    %177 = arith.cmpf ogt, %168, %176 : vector<1x512xf32>
    %178 = arith.andi %170, %177 : vector<1x512xi1>
    %179 = arith.extui %178 : vector<1x512xi1> to vector<1x512xi32>
    %180 = arith.sitofp %179 : vector<1x512xi32> to vector<1x512xf32>
    %cst_37 = arith.constant 9.99999997E-7 : f32
    %181 = vector.broadcast %cst_37 : f32 to vector<1x512xf32>
    %182 = arith.addf %166, %181 : vector<1x512xf32>
    %183 = math.log %182 : vector<1x512xf32>
    %cst_38 = arith.constant 9.99999997E-7 : f32
    %184 = vector.broadcast %cst_38 : f32 to vector<1x512xf32>
    %185 = arith.addf %167, %184 : vector<1x512xf32>
    %186 = math.log %185 : vector<1x512xf32>
    %187 = arith.subf %183, %186 : vector<1x512xf32>
    %cst_39 = arith.constant 9.99999997E-7 : f32
    %188 = vector.broadcast %cst_39 : f32 to vector<1x512xf32>
    %189 = arith.addf %168, %188 : vector<1x512xf32>
    %190 = math.log %189 : vector<1x512xf32>
    %191 = arith.subf %183, %190 : vector<1x512xf32>
    %192 = vector.extract_strided_slice %164 {offsets = [0, 0], sizes = [1, 512], strides = [1, 1]} : vector<8x512xf32> to vector<1x512xf32>
    %193 = arith.subf %192, %187 : vector<1x512xf32>
    %194 = math.absf %193 : vector<1x512xf32>
    %cst_40 = arith.constant 0.00999999977 : f32
    %195 = vector.broadcast %cst_40 : f32 to vector<1x512xf32>
    %196 = arith.cmpf olt, %194, %195 : vector<1x512xf32>
    %cst_41 = arith.constant 5.000000e-01 : f32
    %197 = vector.broadcast %cst_41 : f32 to vector<1x512xf32>
    %198 = arith.mulf %197, %194 : vector<1x512xf32>
    %199 = arith.mulf %198, %194 : vector<1x512xf32>
    %cst_42 = arith.constant 0.00999999977 : f32
    %200 = vector.broadcast %cst_42 : f32 to vector<1x512xf32>
    %201 = arith.divf %199, %200 : vector<1x512xf32>
    %cst_43 = arith.constant 5.000000e-03 : f32
    %202 = vector.broadcast %cst_43 : f32 to vector<1x512xf32>
    %203 = arith.subf %194, %202 : vector<1x512xf32>
    %204 = arith.select %196, %201, %203 : vector<1x512xi1>, vector<1x512xf32>
    %205 = arith.mulf %204, %175 : vector<1x512xf32>
    %206 = vector.extract_strided_slice %164 {offsets = [1, 0], sizes = [1, 512], strides = [1, 1]} : vector<8x512xf32> to vector<1x512xf32>
    %207 = arith.subf %206, %191 : vector<1x512xf32>
    %208 = math.absf %207 : vector<1x512xf32>
    %cst_44 = arith.constant 0.00999999977 : f32
    %209 = vector.broadcast %cst_44 : f32 to vector<1x512xf32>
    %210 = arith.cmpf olt, %208, %209 : vector<1x512xf32>
    %cst_45 = arith.constant 5.000000e-01 : f32
    %211 = vector.broadcast %cst_45 : f32 to vector<1x512xf32>
    %212 = arith.mulf %211, %208 : vector<1x512xf32>
    %213 = arith.mulf %212, %208 : vector<1x512xf32>
    %cst_46 = arith.constant 0.00999999977 : f32
    %214 = vector.broadcast %cst_46 : f32 to vector<1x512xf32>
    %215 = arith.divf %213, %214 : vector<1x512xf32>
    %cst_47 = arith.constant 5.000000e-03 : f32
    %216 = vector.broadcast %cst_47 : f32 to vector<1x512xf32>
    %217 = arith.subf %208, %216 : vector<1x512xf32>
    %218 = arith.select %210, %215, %217 : vector<1x512xi1>, vector<1x512xf32>
    %219 = arith.mulf %218, %180 : vector<1x512xf32>
    %220 = arith.addf %205, %219 : vector<1x512xf32>
    %221 = arith.addf %175, %180 : vector<1x512xf32>
    %222 = vector.shape_cast %220 : vector<1x512xf32> to vector<1x1x512xf32>
    %cst_48 = arith.constant dense<0.000000e+00> : vector<1xf32>
    %223 = vector.multi_reduction <add>, %222, %cst_48 [1, 2] : vector<1x1x512xf32> to vector<1xf32>
    %224 = vector.shape_cast %223 : vector<1xf32> to vector<1x1x1xf32>
    %225 = vector.extract %224[0, 0, 0] : f32 from vector<1x1x1xf32>
    %226 = vector.shape_cast %221 : vector<1x512xf32> to vector<1x1x512xf32>
    %cst_49 = arith.constant dense<0.000000e+00> : vector<1xf32>
    %227 = vector.multi_reduction <add>, %226, %cst_49 [1, 2] : vector<1x1x512xf32> to vector<1xf32>
    %228 = vector.shape_cast %227 : vector<1xf32> to vector<1x1x1xf32>
    %229 = vector.extract %228[0, 0, 0] : f32 from vector<1x1x1xf32>
    %230 = vector.extract_strided_slice %10 {offsets = [0, 1280], sizes = [8, 640], strides = [1, 1]} : vector<8x3200xf32> to vector<8x640xf32>
    %231 = arith.mulf %230, %11 : vector<8x640xf32>
    %232 = vector.extract_strided_slice %231 {offsets = [0, 47], sizes = [8, 512], strides = [1, 1]} : vector<8x640xf32> to vector<8x512xf32>
    %233 = vector.extract_strided_slice %12 {offsets = [0, 0], sizes = [1, 512], strides = [1, 1]} : vector<9x512xf32> to vector<1x512xf32>
    %234 = vector.broadcast %233 : vector<1x512xf32> to vector<8x512xf32>
    %235 = arith.mulf %232, %234 : vector<8x512xf32>
    %236 = vector.extract_strided_slice %231 {offsets = [0, 48], sizes = [8, 512], strides = [1, 1]} : vector<8x640xf32> to vector<8x512xf32>
    %237 = vector.extract_strided_slice %12 {offsets = [1, 0], sizes = [1, 512], strides = [1, 1]} : vector<9x512xf32> to vector<1x512xf32>
    %238 = vector.broadcast %237 : vector<1x512xf32> to vector<8x512xf32>
    %239 = arith.mulf %236, %238 : vector<8x512xf32>
    %240 = vector.extract_strided_slice %231 {offsets = [0, 49], sizes = [8, 512], strides = [1, 1]} : vector<8x640xf32> to vector<8x512xf32>
    %241 = vector.extract_strided_slice %12 {offsets = [2, 0], sizes = [1, 512], strides = [1, 1]} : vector<9x512xf32> to vector<1x512xf32>
    %242 = vector.broadcast %241 : vector<1x512xf32> to vector<8x512xf32>
    %243 = arith.mulf %240, %242 : vector<8x512xf32>
    %244 = vector.extract_strided_slice %231 {offsets = [0, 63], sizes = [8, 512], strides = [1, 1]} : vector<8x640xf32> to vector<8x512xf32>
    %245 = vector.extract_strided_slice %12 {offsets = [3, 0], sizes = [1, 512], strides = [1, 1]} : vector<9x512xf32> to vector<1x512xf32>
    %246 = vector.broadcast %245 : vector<1x512xf32> to vector<8x512xf32>
    %247 = arith.mulf %244, %246 : vector<8x512xf32>
    %248 = vector.extract_strided_slice %231 {offsets = [0, 64], sizes = [8, 512], strides = [1, 1]} : vector<8x640xf32> to vector<8x512xf32>
    %249 = vector.extract_strided_slice %12 {offsets = [4, 0], sizes = [1, 512], strides = [1, 1]} : vector<9x512xf32> to vector<1x512xf32>
    %250 = vector.broadcast %249 : vector<1x512xf32> to vector<8x512xf32>
    %251 = arith.mulf %248, %250 : vector<8x512xf32>
    %252 = vector.extract_strided_slice %231 {offsets = [0, 65], sizes = [8, 512], strides = [1, 1]} : vector<8x640xf32> to vector<8x512xf32>
    %253 = vector.extract_strided_slice %12 {offsets = [5, 0], sizes = [1, 512], strides = [1, 1]} : vector<9x512xf32> to vector<1x512xf32>
    %254 = vector.broadcast %253 : vector<1x512xf32> to vector<8x512xf32>
    %255 = arith.mulf %252, %254 : vector<8x512xf32>
    %256 = vector.extract_strided_slice %231 {offsets = [0, 79], sizes = [8, 512], strides = [1, 1]} : vector<8x640xf32> to vector<8x512xf32>
    %257 = vector.extract_strided_slice %12 {offsets = [6, 0], sizes = [1, 512], strides = [1, 1]} : vector<9x512xf32> to vector<1x512xf32>
    %258 = vector.broadcast %257 : vector<1x512xf32> to vector<8x512xf32>
    %259 = arith.mulf %256, %258 : vector<8x512xf32>
    %260 = vector.extract_strided_slice %231 {offsets = [0, 80], sizes = [8, 512], strides = [1, 1]} : vector<8x640xf32> to vector<8x512xf32>
    %261 = vector.extract_strided_slice %12 {offsets = [7, 0], sizes = [1, 512], strides = [1, 1]} : vector<9x512xf32> to vector<1x512xf32>
    %262 = vector.broadcast %261 : vector<1x512xf32> to vector<8x512xf32>
    %263 = arith.mulf %260, %262 : vector<8x512xf32>
    %264 = vector.extract_strided_slice %231 {offsets = [0, 81], sizes = [8, 512], strides = [1, 1]} : vector<8x640xf32> to vector<8x512xf32>
    %265 = vector.extract_strided_slice %12 {offsets = [8, 0], sizes = [1, 512], strides = [1, 1]} : vector<9x512xf32> to vector<1x512xf32>
    %266 = vector.broadcast %265 : vector<1x512xf32> to vector<8x512xf32>
    %267 = arith.mulf %264, %266 : vector<8x512xf32>
    %268 = tpu.concatenate %235, %239, %243, %247, %251, %255, %259, %263, %267 in 0 : vector<8x512xf32>, vector<8x512xf32>, vector<8x512xf32>, vector<8x512xf32>, vector<8x512xf32>, vector<8x512xf32>, vector<8x512xf32>, vector<8x512xf32>, vector<8x512xf32> -> vector<72x512xf32>
    %cst_50 = arith.constant dense<0.000000e+00> : vector<8x512xf32>
    %269 = tpu.matmul %13, %268, %cst_50 {dimension_numbers = #tpu.dot_dimension_numbers<[1], [0], [0], [1], [0, 0, 1, 1], [], []>} : vector<8x72xf32>, vector<72x512xf32>, vector<8x512xf32> -> vector<8x512xf32>
    %270 = vector.broadcast %14 : vector<8x1xf32> to vector<8x512xf32>
    %271 = arith.addf %269, %270 : vector<8x512xf32>
    %272 = vector.extract_strided_slice %15 {offsets = [0, 1024], sizes = [3, 512], strides = [1, 1]} : vector<3x2560xf32> to vector<3x512xf32>
    %273 = vector.extract_strided_slice %272 {offsets = [0, 0], sizes = [1, 512], strides = [1, 1]} : vector<3x512xf32> to vector<1x512xf32>
    %274 = vector.extract_strided_slice %272 {offsets = [1, 0], sizes = [1, 512], strides = [1, 1]} : vector<3x512xf32> to vector<1x512xf32>
    %275 = vector.extract_strided_slice %272 {offsets = [2, 0], sizes = [1, 512], strides = [1, 1]} : vector<3x512xf32> to vector<1x512xf32>
    %cst_51 = arith.constant 1.000000e-01 : f32
    %276 = vector.broadcast %cst_51 : f32 to vector<1x512xf32>
    %277 = arith.cmpf ogt, %273, %276 : vector<1x512xf32>
    %cst_52 = arith.constant 1.000000e-01 : f32
    %278 = vector.broadcast %cst_52 : f32 to vector<1x512xf32>
    %279 = arith.cmpf ogt, %274, %278 : vector<1x512xf32>
    %280 = arith.andi %277, %279 : vector<1x512xi1>
    %281 = arith.extui %280 : vector<1x512xi1> to vector<1x512xi32>
    %282 = arith.sitofp %281 : vector<1x512xi32> to vector<1x512xf32>
    %cst_53 = arith.constant 1.000000e-01 : f32
    %283 = vector.broadcast %cst_53 : f32 to vector<1x512xf32>
    %284 = arith.cmpf ogt, %275, %283 : vector<1x512xf32>
    %285 = arith.andi %277, %284 : vector<1x512xi1>
    %286 = arith.extui %285 : vector<1x512xi1> to vector<1x512xi32>
    %287 = arith.sitofp %286 : vector<1x512xi32> to vector<1x512xf32>
    %cst_54 = arith.constant 9.99999997E-7 : f32
    %288 = vector.broadcast %cst_54 : f32 to vector<1x512xf32>
    %289 = arith.addf %273, %288 : vector<1x512xf32>
    %290 = math.log %289 : vector<1x512xf32>
    %cst_55 = arith.constant 9.99999997E-7 : f32
    %291 = vector.broadcast %cst_55 : f32 to vector<1x512xf32>
    %292 = arith.addf %274, %291 : vector<1x512xf32>
    %293 = math.log %292 : vector<1x512xf32>
    %294 = arith.subf %290, %293 : vector<1x512xf32>
    %cst_56 = arith.constant 9.99999997E-7 : f32
    %295 = vector.broadcast %cst_56 : f32 to vector<1x512xf32>
    %296 = arith.addf %275, %295 : vector<1x512xf32>
    %297 = math.log %296 : vector<1x512xf32>
    %298 = arith.subf %290, %297 : vector<1x512xf32>
    %299 = vector.extract_strided_slice %271 {offsets = [0, 0], sizes = [1, 512], strides = [1, 1]} : vector<8x512xf32> to vector<1x512xf32>
    %300 = arith.subf %299, %294 : vector<1x512xf32>
    %301 = math.absf %300 : vector<1x512xf32>
    %cst_57 = arith.constant 0.00999999977 : f32
    %302 = vector.broadcast %cst_57 : f32 to vector<1x512xf32>
    %303 = arith.cmpf olt, %301, %302 : vector<1x512xf32>
    %cst_58 = arith.constant 5.000000e-01 : f32
    %304 = vector.broadcast %cst_58 : f32 to vector<1x512xf32>
    %305 = arith.mulf %304, %301 : vector<1x512xf32>
    %306 = arith.mulf %305, %301 : vector<1x512xf32>
    %cst_59 = arith.constant 0.00999999977 : f32
    %307 = vector.broadcast %cst_59 : f32 to vector<1x512xf32>
    %308 = arith.divf %306, %307 : vector<1x512xf32>
    %cst_60 = arith.constant 5.000000e-03 : f32
    %309 = vector.broadcast %cst_60 : f32 to vector<1x512xf32>
    %310 = arith.subf %301, %309 : vector<1x512xf32>
    %311 = arith.select %303, %308, %310 : vector<1x512xi1>, vector<1x512xf32>
    %312 = arith.mulf %311, %282 : vector<1x512xf32>
    %313 = vector.extract_strided_slice %271 {offsets = [1, 0], sizes = [1, 512], strides = [1, 1]} : vector<8x512xf32> to vector<1x512xf32>
    %314 = arith.subf %313, %298 : vector<1x512xf32>
    %315 = math.absf %314 : vector<1x512xf32>
    %cst_61 = arith.constant 0.00999999977 : f32
    %316 = vector.broadcast %cst_61 : f32 to vector<1x512xf32>
    %317 = arith.cmpf olt, %315, %316 : vector<1x512xf32>
    %cst_62 = arith.constant 5.000000e-01 : f32
    %318 = vector.broadcast %cst_62 : f32 to vector<1x512xf32>
    %319 = arith.mulf %318, %315 : vector<1x512xf32>
    %320 = arith.mulf %319, %315 : vector<1x512xf32>
    %cst_63 = arith.constant 0.00999999977 : f32
    %321 = vector.broadcast %cst_63 : f32 to vector<1x512xf32>
    %322 = arith.divf %320, %321 : vector<1x512xf32>
    %cst_64 = arith.constant 5.000000e-03 : f32
    %323 = vector.broadcast %cst_64 : f32 to vector<1x512xf32>
    %324 = arith.subf %315, %323 : vector<1x512xf32>
    %325 = arith.select %317, %322, %324 : vector<1x512xi1>, vector<1x512xf32>
    %326 = arith.mulf %325, %287 : vector<1x512xf32>
    %327 = arith.addf %312, %326 : vector<1x512xf32>
    %328 = arith.addf %282, %287 : vector<1x512xf32>
    %329 = vector.shape_cast %327 : vector<1x512xf32> to vector<1x1x512xf32>
    %cst_65 = arith.constant dense<0.000000e+00> : vector<1xf32>
    %330 = vector.multi_reduction <add>, %329, %cst_65 [1, 2] : vector<1x1x512xf32> to vector<1xf32>
    %331 = vector.shape_cast %330 : vector<1xf32> to vector<1x1x1xf32>
    %332 = vector.extract %331[0, 0, 0] : f32 from vector<1x1x1xf32>
    %333 = vector.shape_cast %328 : vector<1x512xf32> to vector<1x1x512xf32>
    %cst_66 = arith.constant dense<0.000000e+00> : vector<1xf32>
    %334 = vector.multi_reduction <add>, %333, %cst_66 [1, 2] : vector<1x1x512xf32> to vector<1xf32>
    %335 = vector.shape_cast %334 : vector<1xf32> to vector<1x1x1xf32>
    %336 = vector.extract %335[0, 0, 0] : f32 from vector<1x1x1xf32>
    %337 = vector.extract_strided_slice %10 {offsets = [0, 1920], sizes = [8, 640], strides = [1, 1]} : vector<8x3200xf32> to vector<8x640xf32>
    %338 = arith.mulf %337, %11 : vector<8x640xf32>
    %339 = vector.extract_strided_slice %338 {offsets = [0, 47], sizes = [8, 512], strides = [1, 1]} : vector<8x640xf32> to vector<8x512xf32>
    %340 = vector.extract_strided_slice %12 {offsets = [0, 0], sizes = [1, 512], strides = [1, 1]} : vector<9x512xf32> to vector<1x512xf32>
    %341 = vector.broadcast %340 : vector<1x512xf32> to vector<8x512xf32>
    %342 = arith.mulf %339, %341 : vector<8x512xf32>
    %343 = vector.extract_strided_slice %338 {offsets = [0, 48], sizes = [8, 512], strides = [1, 1]} : vector<8x640xf32> to vector<8x512xf32>
    %344 = vector.extract_strided_slice %12 {offsets = [1, 0], sizes = [1, 512], strides = [1, 1]} : vector<9x512xf32> to vector<1x512xf32>
    %345 = vector.broadcast %344 : vector<1x512xf32> to vector<8x512xf32>
    %346 = arith.mulf %343, %345 : vector<8x512xf32>
    %347 = vector.extract_strided_slice %338 {offsets = [0, 49], sizes = [8, 512], strides = [1, 1]} : vector<8x640xf32> to vector<8x512xf32>
    %348 = vector.extract_strided_slice %12 {offsets = [2, 0], sizes = [1, 512], strides = [1, 1]} : vector<9x512xf32> to vector<1x512xf32>
    %349 = vector.broadcast %348 : vector<1x512xf32> to vector<8x512xf32>
    %350 = arith.mulf %347, %349 : vector<8x512xf32>
    %351 = vector.extract_strided_slice %338 {offsets = [0, 63], sizes = [8, 512], strides = [1, 1]} : vector<8x640xf32> to vector<8x512xf32>
    %352 = vector.extract_strided_slice %12 {offsets = [3, 0], sizes = [1, 512], strides = [1, 1]} : vector<9x512xf32> to vector<1x512xf32>
    %353 = vector.broadcast %352 : vector<1x512xf32> to vector<8x512xf32>
    %354 = arith.mulf %351, %353 : vector<8x512xf32>
    %355 = vector.extract_strided_slice %338 {offsets = [0, 64], sizes = [8, 512], strides = [1, 1]} : vector<8x640xf32> to vector<8x512xf32>
    %356 = vector.extract_strided_slice %12 {offsets = [4, 0], sizes = [1, 512], strides = [1, 1]} : vector<9x512xf32> to vector<1x512xf32>
    %357 = vector.broadcast %356 : vector<1x512xf32> to vector<8x512xf32>
    %358 = arith.mulf %355, %357 : vector<8x512xf32>
    %359 = vector.extract_strided_slice %338 {offsets = [0, 65], sizes = [8, 512], strides = [1, 1]} : vector<8x640xf32> to vector<8x512xf32>
    %360 = vector.extract_strided_slice %12 {offsets = [5, 0], sizes = [1, 512], strides = [1, 1]} : vector<9x512xf32> to vector<1x512xf32>
    %361 = vector.broadcast %360 : vector<1x512xf32> to vector<8x512xf32>
    %362 = arith.mulf %359, %361 : vector<8x512xf32>
    %363 = vector.extract_strided_slice %338 {offsets = [0, 79], sizes = [8, 512], strides = [1, 1]} : vector<8x640xf32> to vector<8x512xf32>
    %364 = vector.extract_strided_slice %12 {offsets = [6, 0], sizes = [1, 512], strides = [1, 1]} : vector<9x512xf32> to vector<1x512xf32>
    %365 = vector.broadcast %364 : vector<1x512xf32> to vector<8x512xf32>
    %366 = arith.mulf %363, %365 : vector<8x512xf32>
    %367 = vector.extract_strided_slice %338 {offsets = [0, 80], sizes = [8, 512], strides = [1, 1]} : vector<8x640xf32> to vector<8x512xf32>
    %368 = vector.extract_strided_slice %12 {offsets = [7, 0], sizes = [1, 512], strides = [1, 1]} : vector<9x512xf32> to vector<1x512xf32>
    %369 = vector.broadcast %368 : vector<1x512xf32> to vector<8x512xf32>
    %370 = arith.mulf %367, %369 : vector<8x512xf32>
    %371 = vector.extract_strided_slice %338 {offsets = [0, 81], sizes = [8, 512], strides = [1, 1]} : vector<8x640xf32> to vector<8x512xf32>
    %372 = vector.extract_strided_slice %12 {offsets = [8, 0], sizes = [1, 512], strides = [1, 1]} : vector<9x512xf32> to vector<1x512xf32>
    %373 = vector.broadcast %372 : vector<1x512xf32> to vector<8x512xf32>
    %374 = arith.mulf %371, %373 : vector<8x512xf32>
    %375 = tpu.concatenate %342, %346, %350, %354, %358, %362, %366, %370, %374 in 0 : vector<8x512xf32>, vector<8x512xf32>, vector<8x512xf32>, vector<8x512xf32>, vector<8x512xf32>, vector<8x512xf32>, vector<8x512xf32>, vector<8x512xf32>, vector<8x512xf32> -> vector<72x512xf32>
    %cst_67 = arith.constant dense<0.000000e+00> : vector<8x512xf32>
    %376 = tpu.matmul %13, %375, %cst_67 {dimension_numbers = #tpu.dot_dimension_numbers<[1], [0], [0], [1], [0, 0, 1, 1], [], []>} : vector<8x72xf32>, vector<72x512xf32>, vector<8x512xf32> -> vector<8x512xf32>
    %377 = vector.broadcast %14 : vector<8x1xf32> to vector<8x512xf32>
    %378 = arith.addf %376, %377 : vector<8x512xf32>
    %379 = vector.extract_strided_slice %15 {offsets = [0, 1536], sizes = [3, 512], strides = [1, 1]} : vector<3x2560xf32> to vector<3x512xf32>
    %380 = vector.extract_strided_slice %379 {offsets = [0, 0], sizes = [1, 512], strides = [1, 1]} : vector<3x512xf32> to vector<1x512xf32>
    %381 = vector.extract_strided_slice %379 {offsets = [1, 0], sizes = [1, 512], strides = [1, 1]} : vector<3x512xf32> to vector<1x512xf32>
    %382 = vector.extract_strided_slice %379 {offsets = [2, 0], sizes = [1, 512], strides = [1, 1]} : vector<3x512xf32> to vector<1x512xf32>
    %cst_68 = arith.constant 1.000000e-01 : f32
    %383 = vector.broadcast %cst_68 : f32 to vector<1x512xf32>
    %384 = arith.cmpf ogt, %380, %383 : vector<1x512xf32>
    %cst_69 = arith.constant 1.000000e-01 : f32
    %385 = vector.broadcast %cst_69 : f32 to vector<1x512xf32>
    %386 = arith.cmpf ogt, %381, %385 : vector<1x512xf32>
    %387 = arith.andi %384, %386 : vector<1x512xi1>
    %388 = arith.extui %387 : vector<1x512xi1> to vector<1x512xi32>
    %389 = arith.sitofp %388 : vector<1x512xi32> to vector<1x512xf32>
    %cst_70 = arith.constant 1.000000e-01 : f32
    %390 = vector.broadcast %cst_70 : f32 to vector<1x512xf32>
    %391 = arith.cmpf ogt, %382, %390 : vector<1x512xf32>
    %392 = arith.andi %384, %391 : vector<1x512xi1>
    %393 = arith.extui %392 : vector<1x512xi1> to vector<1x512xi32>
    %394 = arith.sitofp %393 : vector<1x512xi32> to vector<1x512xf32>
    %cst_71 = arith.constant 9.99999997E-7 : f32
    %395 = vector.broadcast %cst_71 : f32 to vector<1x512xf32>
    %396 = arith.addf %380, %395 : vector<1x512xf32>
    %397 = math.log %396 : vector<1x512xf32>
    %cst_72 = arith.constant 9.99999997E-7 : f32
    %398 = vector.broadcast %cst_72 : f32 to vector<1x512xf32>
    %399 = arith.addf %381, %398 : vector<1x512xf32>
    %400 = math.log %399 : vector<1x512xf32>
    %401 = arith.subf %397, %400 : vector<1x512xf32>
    %cst_73 = arith.constant 9.99999997E-7 : f32
    %402 = vector.broadcast %cst_73 : f32 to vector<1x512xf32>
    %403 = arith.addf %382, %402 : vector<1x512xf32>
    %404 = math.log %403 : vector<1x512xf32>
    %405 = arith.subf %397, %404 : vector<1x512xf32>
    %406 = vector.extract_strided_slice %378 {offsets = [0, 0], sizes = [1, 512], strides = [1, 1]} : vector<8x512xf32> to vector<1x512xf32>
    %407 = arith.subf %406, %401 : vector<1x512xf32>
    %408 = math.absf %407 : vector<1x512xf32>
    %cst_74 = arith.constant 0.00999999977 : f32
    %409 = vector.broadcast %cst_74 : f32 to vector<1x512xf32>
    %410 = arith.cmpf olt, %408, %409 : vector<1x512xf32>
    %cst_75 = arith.constant 5.000000e-01 : f32
    %411 = vector.broadcast %cst_75 : f32 to vector<1x512xf32>
    %412 = arith.mulf %411, %408 : vector<1x512xf32>
    %413 = arith.mulf %412, %408 : vector<1x512xf32>
    %cst_76 = arith.constant 0.00999999977 : f32
    %414 = vector.broadcast %cst_76 : f32 to vector<1x512xf32>
    %415 = arith.divf %413, %414 : vector<1x512xf32>
    %cst_77 = arith.constant 5.000000e-03 : f32
    %416 = vector.broadcast %cst_77 : f32 to vector<1x512xf32>
    %417 = arith.subf %408, %416 : vector<1x512xf32>
    %418 = arith.select %410, %415, %417 : vector<1x512xi1>, vector<1x512xf32>
    %419 = arith.mulf %418, %389 : vector<1x512xf32>
    %420 = vector.extract_strided_slice %378 {offsets = [1, 0], sizes = [1, 512], strides = [1, 1]} : vector<8x512xf32> to vector<1x512xf32>
    %421 = arith.subf %420, %405 : vector<1x512xf32>
    %422 = math.absf %421 : vector<1x512xf32>
    %cst_78 = arith.constant 0.00999999977 : f32
    %423 = vector.broadcast %cst_78 : f32 to vector<1x512xf32>
    %424 = arith.cmpf olt, %422, %423 : vector<1x512xf32>
    %cst_79 = arith.constant 5.000000e-01 : f32
    %425 = vector.broadcast %cst_79 : f32 to vector<1x512xf32>
    %426 = arith.mulf %425, %422 : vector<1x512xf32>
    %427 = arith.mulf %426, %422 : vector<1x512xf32>
    %cst_80 = arith.constant 0.00999999977 : f32
    %428 = vector.broadcast %cst_80 : f32 to vector<1x512xf32>
    %429 = arith.divf %427, %428 : vector<1x512xf32>
    %cst_81 = arith.constant 5.000000e-03 : f32
    %430 = vector.broadcast %cst_81 : f32 to vector<1x512xf32>
    %431 = arith.subf %422, %430 : vector<1x512xf32>
    %432 = arith.select %424, %429, %431 : vector<1x512xi1>, vector<1x512xf32>
    %433 = arith.mulf %432, %394 : vector<1x512xf32>
    %434 = arith.addf %419, %433 : vector<1x512xf32>
    %435 = arith.addf %389, %394 : vector<1x512xf32>
    %436 = vector.shape_cast %434 : vector<1x512xf32> to vector<1x1x512xf32>
    %cst_82 = arith.constant dense<0.000000e+00> : vector<1xf32>
    %437 = vector.multi_reduction <add>, %436, %cst_82 [1, 2] : vector<1x1x512xf32> to vector<1xf32>
    %438 = vector.shape_cast %437 : vector<1xf32> to vector<1x1x1xf32>
    %439 = vector.extract %438[0, 0, 0] : f32 from vector<1x1x1xf32>
    %440 = vector.shape_cast %435 : vector<1x512xf32> to vector<1x1x512xf32>
    %cst_83 = arith.constant dense<0.000000e+00> : vector<1xf32>
    %441 = vector.multi_reduction <add>, %440, %cst_83 [1, 2] : vector<1x1x512xf32> to vector<1xf32>
    %442 = vector.shape_cast %441 : vector<1xf32> to vector<1x1x1xf32>
    %443 = vector.extract %442[0, 0, 0] : f32 from vector<1x1x1xf32>
    %444 = vector.extract_strided_slice %10 {offsets = [0, 2560], sizes = [8, 640], strides = [1, 1]} : vector<8x3200xf32> to vector<8x640xf32>
    %445 = arith.mulf %444, %11 : vector<8x640xf32>
    %446 = vector.extract_strided_slice %445 {offsets = [0, 47], sizes = [8, 512], strides = [1, 1]} : vector<8x640xf32> to vector<8x512xf32>
    %447 = vector.extract_strided_slice %12 {offsets = [0, 0], sizes = [1, 512], strides = [1, 1]} : vector<9x512xf32> to vector<1x512xf32>
    %448 = vector.broadcast %447 : vector<1x512xf32> to vector<8x512xf32>
    %449 = arith.mulf %446, %448 : vector<8x512xf32>
    %450 = vector.extract_strided_slice %445 {offsets = [0, 48], sizes = [8, 512], strides = [1, 1]} : vector<8x640xf32> to vector<8x512xf32>
    %451 = vector.extract_strided_slice %12 {offsets = [1, 0], sizes = [1, 512], strides = [1, 1]} : vector<9x512xf32> to vector<1x512xf32>
    %452 = vector.broadcast %451 : vector<1x512xf32> to vector<8x512xf32>
    %453 = arith.mulf %450, %452 : vector<8x512xf32>
    %454 = vector.extract_strided_slice %445 {offsets = [0, 49], sizes = [8, 512], strides = [1, 1]} : vector<8x640xf32> to vector<8x512xf32>
    %455 = vector.extract_strided_slice %12 {offsets = [2, 0], sizes = [1, 512], strides = [1, 1]} : vector<9x512xf32> to vector<1x512xf32>
    %456 = vector.broadcast %455 : vector<1x512xf32> to vector<8x512xf32>
    %457 = arith.mulf %454, %456 : vector<8x512xf32>
    %458 = vector.extract_strided_slice %445 {offsets = [0, 63], sizes = [8, 512], strides = [1, 1]} : vector<8x640xf32> to vector<8x512xf32>
    %459 = vector.extract_strided_slice %12 {offsets = [3, 0], sizes = [1, 512], strides = [1, 1]} : vector<9x512xf32> to vector<1x512xf32>
    %460 = vector.broadcast %459 : vector<1x512xf32> to vector<8x512xf32>
    %461 = arith.mulf %458, %460 : vector<8x512xf32>
    %462 = vector.extract_strided_slice %445 {offsets = [0, 64], sizes = [8, 512], strides = [1, 1]} : vector<8x640xf32> to vector<8x512xf32>
    %463 = vector.extract_strided_slice %12 {offsets = [4, 0], sizes = [1, 512], strides = [1, 1]} : vector<9x512xf32> to vector<1x512xf32>
    %464 = vector.broadcast %463 : vector<1x512xf32> to vector<8x512xf32>
    %465 = arith.mulf %462, %464 : vector<8x512xf32>
    %466 = vector.extract_strided_slice %445 {offsets = [0, 65], sizes = [8, 512], strides = [1, 1]} : vector<8x640xf32> to vector<8x512xf32>
    %467 = vector.extract_strided_slice %12 {offsets = [5, 0], sizes = [1, 512], strides = [1, 1]} : vector<9x512xf32> to vector<1x512xf32>
    %468 = vector.broadcast %467 : vector<1x512xf32> to vector<8x512xf32>
    %469 = arith.mulf %466, %468 : vector<8x512xf32>
    %470 = vector.extract_strided_slice %445 {offsets = [0, 79], sizes = [8, 512], strides = [1, 1]} : vector<8x640xf32> to vector<8x512xf32>
    %471 = vector.extract_strided_slice %12 {offsets = [6, 0], sizes = [1, 512], strides = [1, 1]} : vector<9x512xf32> to vector<1x512xf32>
    %472 = vector.broadcast %471 : vector<1x512xf32> to vector<8x512xf32>
    %473 = arith.mulf %470, %472 : vector<8x512xf32>
    %474 = vector.extract_strided_slice %445 {offsets = [0, 80], sizes = [8, 512], strides = [1, 1]} : vector<8x640xf32> to vector<8x512xf32>
    %475 = vector.extract_strided_slice %12 {offsets = [7, 0], sizes = [1, 512], strides = [1, 1]} : vector<9x512xf32> to vector<1x512xf32>
    %476 = vector.broadcast %475 : vector<1x512xf32> to vector<8x512xf32>
    %477 = arith.mulf %474, %476 : vector<8x512xf32>
    %478 = vector.extract_strided_slice %445 {offsets = [0, 81], sizes = [8, 512], strides = [1, 1]} : vector<8x640xf32> to vector<8x512xf32>
    %479 = vector.extract_strided_slice %12 {offsets = [8, 0], sizes = [1, 512], strides = [1, 1]} : vector<9x512xf32> to vector<1x512xf32>
    %480 = vector.broadcast %479 : vector<1x512xf32> to vector<8x512xf32>
    %481 = arith.mulf %478, %480 : vector<8x512xf32>
    %482 = tpu.concatenate %449, %453, %457, %461, %465, %469, %473, %477, %481 in 0 : vector<8x512xf32>, vector<8x512xf32>, vector<8x512xf32>, vector<8x512xf32>, vector<8x512xf32>, vector<8x512xf32>, vector<8x512xf32>, vector<8x512xf32>, vector<8x512xf32> -> vector<72x512xf32>
    %cst_84 = arith.constant dense<0.000000e+00> : vector<8x512xf32>
    %483 = tpu.matmul %13, %482, %cst_84 {dimension_numbers = #tpu.dot_dimension_numbers<[1], [0], [0], [1], [0, 0, 1, 1], [], []>} : vector<8x72xf32>, vector<72x512xf32>, vector<8x512xf32> -> vector<8x512xf32>
    %484 = vector.broadcast %14 : vector<8x1xf32> to vector<8x512xf32>
    %485 = arith.addf %483, %484 : vector<8x512xf32>
    %486 = vector.extract_strided_slice %15 {offsets = [0, 2048], sizes = [3, 512], strides = [1, 1]} : vector<3x2560xf32> to vector<3x512xf32>
    %487 = vector.extract_strided_slice %486 {offsets = [0, 0], sizes = [1, 512], strides = [1, 1]} : vector<3x512xf32> to vector<1x512xf32>
    %488 = vector.extract_strided_slice %486 {offsets = [1, 0], sizes = [1, 512], strides = [1, 1]} : vector<3x512xf32> to vector<1x512xf32>
    %489 = vector.extract_strided_slice %486 {offsets = [2, 0], sizes = [1, 512], strides = [1, 1]} : vector<3x512xf32> to vector<1x512xf32>
    %cst_85 = arith.constant 1.000000e-01 : f32
    %490 = vector.broadcast %cst_85 : f32 to vector<1x512xf32>
    %491 = arith.cmpf ogt, %487, %490 : vector<1x512xf32>
    %cst_86 = arith.constant 1.000000e-01 : f32
    %492 = vector.broadcast %cst_86 : f32 to vector<1x512xf32>
    %493 = arith.cmpf ogt, %488, %492 : vector<1x512xf32>
    %494 = arith.andi %491, %493 : vector<1x512xi1>
    %495 = arith.extui %494 : vector<1x512xi1> to vector<1x512xi32>
    %496 = arith.sitofp %495 : vector<1x512xi32> to vector<1x512xf32>
    %cst_87 = arith.constant 1.000000e-01 : f32
    %497 = vector.broadcast %cst_87 : f32 to vector<1x512xf32>
    %498 = arith.cmpf ogt, %489, %497 : vector<1x512xf32>
    %499 = arith.andi %491, %498 : vector<1x512xi1>
    %500 = arith.extui %499 : vector<1x512xi1> to vector<1x512xi32>
    %501 = arith.sitofp %500 : vector<1x512xi32> to vector<1x512xf32>
    %cst_88 = arith.constant 9.99999997E-7 : f32
    %502 = vector.broadcast %cst_88 : f32 to vector<1x512xf32>
    %503 = arith.addf %487, %502 : vector<1x512xf32>
    %504 = math.log %503 : vector<1x512xf32>
    %cst_89 = arith.constant 9.99999997E-7 : f32
    %505 = vector.broadcast %cst_89 : f32 to vector<1x512xf32>
    %506 = arith.addf %488, %505 : vector<1x512xf32>
    %507 = math.log %506 : vector<1x512xf32>
    %508 = arith.subf %504, %507 : vector<1x512xf32>
    %cst_90 = arith.constant 9.99999997E-7 : f32
    %509 = vector.broadcast %cst_90 : f32 to vector<1x512xf32>
    %510 = arith.addf %489, %509 : vector<1x512xf32>
    %511 = math.log %510 : vector<1x512xf32>
    %512 = arith.subf %504, %511 : vector<1x512xf32>
    %513 = vector.extract_strided_slice %485 {offsets = [0, 0], sizes = [1, 512], strides = [1, 1]} : vector<8x512xf32> to vector<1x512xf32>
    %514 = arith.subf %513, %508 : vector<1x512xf32>
    %515 = math.absf %514 : vector<1x512xf32>
    %cst_91 = arith.constant 0.00999999977 : f32
    %516 = vector.broadcast %cst_91 : f32 to vector<1x512xf32>
    %517 = arith.cmpf olt, %515, %516 : vector<1x512xf32>
    %cst_92 = arith.constant 5.000000e-01 : f32
    %518 = vector.broadcast %cst_92 : f32 to vector<1x512xf32>
    %519 = arith.mulf %518, %515 : vector<1x512xf32>
    %520 = arith.mulf %519, %515 : vector<1x512xf32>
    %cst_93 = arith.constant 0.00999999977 : f32
    %521 = vector.broadcast %cst_93 : f32 to vector<1x512xf32>
    %522 = arith.divf %520, %521 : vector<1x512xf32>
    %cst_94 = arith.constant 5.000000e-03 : f32
    %523 = vector.broadcast %cst_94 : f32 to vector<1x512xf32>
    %524 = arith.subf %515, %523 : vector<1x512xf32>
    %525 = arith.select %517, %522, %524 : vector<1x512xi1>, vector<1x512xf32>
    %526 = arith.mulf %525, %496 : vector<1x512xf32>
    %527 = vector.extract_strided_slice %485 {offsets = [1, 0], sizes = [1, 512], strides = [1, 1]} : vector<8x512xf32> to vector<1x512xf32>
    %528 = arith.subf %527, %512 : vector<1x512xf32>
    %529 = math.absf %528 : vector<1x512xf32>
    %cst_95 = arith.constant 0.00999999977 : f32
    %530 = vector.broadcast %cst_95 : f32 to vector<1x512xf32>
    %531 = arith.cmpf olt, %529, %530 : vector<1x512xf32>
    %cst_96 = arith.constant 5.000000e-01 : f32
    %532 = vector.broadcast %cst_96 : f32 to vector<1x512xf32>
    %533 = arith.mulf %532, %529 : vector<1x512xf32>
    %534 = arith.mulf %533, %529 : vector<1x512xf32>
    %cst_97 = arith.constant 0.00999999977 : f32
    %535 = vector.broadcast %cst_97 : f32 to vector<1x512xf32>
    %536 = arith.divf %534, %535 : vector<1x512xf32>
    %cst_98 = arith.constant 5.000000e-03 : f32
    %537 = vector.broadcast %cst_98 : f32 to vector<1x512xf32>
    %538 = arith.subf %529, %537 : vector<1x512xf32>
    %539 = arith.select %531, %536, %538 : vector<1x512xi1>, vector<1x512xf32>
    %540 = arith.mulf %539, %501 : vector<1x512xf32>
    %541 = arith.addf %526, %540 : vector<1x512xf32>
    %542 = arith.addf %496, %501 : vector<1x512xf32>
    %543 = vector.shape_cast %541 : vector<1x512xf32> to vector<1x1x512xf32>
    %cst_99 = arith.constant dense<0.000000e+00> : vector<1xf32>
    %544 = vector.multi_reduction <add>, %543, %cst_99 [1, 2] : vector<1x1x512xf32> to vector<1xf32>
    %545 = vector.shape_cast %544 : vector<1xf32> to vector<1x1x1xf32>
    %546 = vector.extract %545[0, 0, 0] : f32 from vector<1x1x1xf32>
    %547 = vector.shape_cast %542 : vector<1x512xf32> to vector<1x1x512xf32>
    %cst_100 = arith.constant dense<0.000000e+00> : vector<1xf32>
    %548 = vector.multi_reduction <add>, %547, %cst_100 [1, 2] : vector<1x1x512xf32> to vector<1xf32>
    %549 = vector.shape_cast %548 : vector<1xf32> to vector<1x1x1xf32>
    %550 = vector.extract %549[0, 0, 0] : f32 from vector<1x1x1xf32>
    %551 = tpu.iota {dimensions = array<i32: 0>} : vector<8x128xi32>
    %552 = tpu.iota {dimensions = array<i32: 1>} : vector<8x128xi32>
    %cst_101 = arith.constant 0.000000e+00 : f32
    %553 = vector.broadcast %cst_101 : f32 to vector<8x128xf32>
    %c0_i32 = arith.constant 0 : i32
    %554 = vector.broadcast %c0_i32 : i32 to vector<8x128xi32>
    %555 = arith.cmpi eq, %551, %554 : vector<8x128xi32>
    %c0_i32_102 = arith.constant 0 : i32
    %556 = vector.broadcast %c0_i32_102 : i32 to vector<8x128xi32>
    %557 = arith.cmpi eq, %552, %556 : vector<8x128xi32>
    %558 = arith.andi %555, %557 : vector<8x128xi1>
    %559 = vector.broadcast %118 : f32 to vector<8x128xf32>
    %560 = arith.select %558, %559, %553 : vector<8x128xi1>, vector<8x128xf32>
    %c0_i32_103 = arith.constant 0 : i32
    %561 = vector.broadcast %c0_i32_103 : i32 to vector<8x128xi32>
    %562 = arith.cmpi eq, %551, %561 : vector<8x128xi32>
    %c1_i32 = arith.constant 1 : i32
    %563 = vector.broadcast %c1_i32 : i32 to vector<8x128xi32>
    %564 = arith.cmpi eq, %552, %563 : vector<8x128xi32>
    %565 = arith.andi %562, %564 : vector<8x128xi1>
    %566 = vector.broadcast %122 : f32 to vector<8x128xf32>
    %567 = arith.select %565, %566, %560 : vector<8x128xi1>, vector<8x128xf32>
    %c1_i32_104 = arith.constant 1 : i32
    %568 = vector.broadcast %c1_i32_104 : i32 to vector<8x128xi32>
    %569 = arith.cmpi eq, %551, %568 : vector<8x128xi32>
    %c0_i32_105 = arith.constant 0 : i32
    %570 = vector.broadcast %c0_i32_105 : i32 to vector<8x128xi32>
    %571 = arith.cmpi eq, %552, %570 : vector<8x128xi32>
    %572 = arith.andi %569, %571 : vector<8x128xi1>
    %573 = vector.broadcast %225 : f32 to vector<8x128xf32>
    %574 = arith.select %572, %573, %567 : vector<8x128xi1>, vector<8x128xf32>
    %c1_i32_106 = arith.constant 1 : i32
    %575 = vector.broadcast %c1_i32_106 : i32 to vector<8x128xi32>
    %576 = arith.cmpi eq, %551, %575 : vector<8x128xi32>
    %c1_i32_107 = arith.constant 1 : i32
    %577 = vector.broadcast %c1_i32_107 : i32 to vector<8x128xi32>
    %578 = arith.cmpi eq, %552, %577 : vector<8x128xi32>
    %579 = arith.andi %576, %578 : vector<8x128xi1>
    %580 = vector.broadcast %229 : f32 to vector<8x128xf32>
    %581 = arith.select %579, %580, %574 : vector<8x128xi1>, vector<8x128xf32>
    %c2_i32 = arith.constant 2 : i32
    %582 = vector.broadcast %c2_i32 : i32 to vector<8x128xi32>
    %583 = arith.cmpi eq, %551, %582 : vector<8x128xi32>
    %c0_i32_108 = arith.constant 0 : i32
    %584 = vector.broadcast %c0_i32_108 : i32 to vector<8x128xi32>
    %585 = arith.cmpi eq, %552, %584 : vector<8x128xi32>
    %586 = arith.andi %583, %585 : vector<8x128xi1>
    %587 = vector.broadcast %332 : f32 to vector<8x128xf32>
    %588 = arith.select %586, %587, %581 : vector<8x128xi1>, vector<8x128xf32>
    %c2_i32_109 = arith.constant 2 : i32
    %589 = vector.broadcast %c2_i32_109 : i32 to vector<8x128xi32>
    %590 = arith.cmpi eq, %551, %589 : vector<8x128xi32>
    %c1_i32_110 = arith.constant 1 : i32
    %591 = vector.broadcast %c1_i32_110 : i32 to vector<8x128xi32>
    %592 = arith.cmpi eq, %552, %591 : vector<8x128xi32>
    %593 = arith.andi %590, %592 : vector<8x128xi1>
    %594 = vector.broadcast %336 : f32 to vector<8x128xf32>
    %595 = arith.select %593, %594, %588 : vector<8x128xi1>, vector<8x128xf32>
    %c3_i32 = arith.constant 3 : i32
    %596 = vector.broadcast %c3_i32 : i32 to vector<8x128xi32>
    %597 = arith.cmpi eq, %551, %596 : vector<8x128xi32>
    %c0_i32_111 = arith.constant 0 : i32
    %598 = vector.broadcast %c0_i32_111 : i32 to vector<8x128xi32>
    %599 = arith.cmpi eq, %552, %598 : vector<8x128xi32>
    %600 = arith.andi %597, %599 : vector<8x128xi1>
    %601 = vector.broadcast %439 : f32 to vector<8x128xf32>
    %602 = arith.select %600, %601, %595 : vector<8x128xi1>, vector<8x128xf32>
    %c3_i32_112 = arith.constant 3 : i32
    %603 = vector.broadcast %c3_i32_112 : i32 to vector<8x128xi32>
    %604 = arith.cmpi eq, %551, %603 : vector<8x128xi32>
    %c1_i32_113 = arith.constant 1 : i32
    %605 = vector.broadcast %c1_i32_113 : i32 to vector<8x128xi32>
    %606 = arith.cmpi eq, %552, %605 : vector<8x128xi32>
    %607 = arith.andi %604, %606 : vector<8x128xi1>
    %608 = vector.broadcast %443 : f32 to vector<8x128xf32>
    %609 = arith.select %607, %608, %602 : vector<8x128xi1>, vector<8x128xf32>
    %c4_i32 = arith.constant 4 : i32
    %610 = vector.broadcast %c4_i32 : i32 to vector<8x128xi32>
    %611 = arith.cmpi eq, %551, %610 : vector<8x128xi32>
    %c0_i32_114 = arith.constant 0 : i32
    %612 = vector.broadcast %c0_i32_114 : i32 to vector<8x128xi32>
    %613 = arith.cmpi eq, %552, %612 : vector<8x128xi32>
    %614 = arith.andi %611, %613 : vector<8x128xi1>
    %615 = vector.broadcast %546 : f32 to vector<8x128xf32>
    %616 = arith.select %614, %615, %609 : vector<8x128xi1>, vector<8x128xf32>
    %c4_i32_115 = arith.constant 4 : i32
    %617 = vector.broadcast %c4_i32_115 : i32 to vector<8x128xi32>
    %618 = arith.cmpi eq, %551, %617 : vector<8x128xi32>
    %c1_i32_116 = arith.constant 1 : i32
    %619 = vector.broadcast %c1_i32_116 : i32 to vector<8x128xi32>
    %620 = arith.cmpi eq, %552, %619 : vector<8x128xi32>
    %621 = arith.andi %618, %620 : vector<8x128xi1>
    %622 = vector.broadcast %550 : f32 to vector<8x128xf32>
    %623 = arith.select %621, %622, %616 : vector<8x128xi1>, vector<8x128xf32>
    %c0_117 = arith.constant 0 : index
    %c0_118 = arith.constant 0 : index
    %624 = vector.load %arg9[%c0_117, %c0_118] : memref<8x128xf32, #tpu.memory_space<vmem>>, vector<8x128xf32>
    tpu.vector_store %arg9[%c0_117, %c0_118], %623 {strides = array<i32>} : memref<8x128xf32, #tpu.memory_space<vmem>>, vector<8x128xf32>,
    return
  }
  func.func @transform_0(%arg0: i32) -> (i32, i32) {
    %c0_i32 = arith.constant 0 : i32
    %c0_i32_0 = arith.constant 0 : i32
    return %c0_i32, %arg0 : i32, i32
  }
  func.func @transform_1(%arg0: i32) -> (i32, i32) {
    %c0_i32 = arith.constant 0 : i32
    %c0_i32_0 = arith.constant 0 : i32
    return %c0_i32, %arg0 : i32, i32
  }
  func.func @transform_2(%arg0: i32) -> (i32, i32) {
    %c0_i32 = arith.constant 0 : i32
    %c0_i32_0 = arith.constant 0 : i32
    %c0_i32_1 = arith.constant 0 : i32
    return %c0_i32, %c0_i32_0 : i32, i32
  }
  func.func @transform_3(%arg0: i32) -> (i32, i32) {
    %c0_i32 = arith.constant 0 : i32
    %c0_i32_0 = arith.constant 0 : i32
    %c0_i32_1 = arith.constant 0 : i32
    return %c0_i32, %c0_i32_0 : i32, i32
  }
  func.func @transform_4(%arg0: i32) -> (i32, i32) {
    %c0_i32 = arith.constant 0 : i32
    %c0_i32_0 = arith.constant 0 : i32
    %c0_i32_1 = arith.constant 0 : i32
    return %c0_i32, %c0_i32_0 : i32, i32
  }
  func.func @transform_5(%arg0: i32) -> (i32, i32) {
    %c0_i32 = arith.constant 0 : i32
    %c0_i32_0 = arith.constant 0 : i32
    %c0_i32_1 = arith.constant 0 : i32
    return %c0_i32, %c0_i32_0 : i32, i32
  }
  func.func @transform_6(%arg0: i32) -> (i32, i32) {
    %c0_i32 = arith.constant 0 : i32
    %c0_i32_0 = arith.constant 0 : i32
    %c0_i32_1 = arith.constant 0 : i32
    return %c0_i32, %c0_i32_0 : i32, i32
  }
  func.func @transform_7(%arg0: i32) -> (i32, i32) {
    %c0_i32 = arith.constant 0 : i32
    %c0_i32_0 = arith.constant 0 : i32
    %c0_i32_1 = arith.constant 0 : i32
    return %c0_i32, %c0_i32_0 : i32, i32
  }
  func.func @transform_8(%arg0: i32) -> (i32, i32) {
    %c0_i32 = arith.constant 0 : i32
    %c0_i32_0 = arith.constant 0 : i32
    return %arg0, %c0_i32 : i32, i32
  }
}

</mosaic_0001>

<llo_original>
// kernel: _lambda_.1
$region0: #{_lambda_.1}
  #allocation0 [shape = 'u32[]', space=smem, size = 0x4, offset = 0x4, fixed_abs, tag = 'smem constant byte address 0x4 - core index']
  #allocation1 [shape = 'u32[144,128]{1,0:T(1,128)}', space=vmem, size = 0x12000, scoped, tag = 'internal scratch']
  %s0 = inlined_call_operand.vmem [shape: bf16[40,6400], index: 0, kind: input, shape index: {}]
  %s1 = inlined_call_operand.vmem [shape: f32[3,5120], index: 1, kind: input, shape index: {}]
  %s2 = inlined_call_operand.vmem [shape: f32[8,640], index: 2, kind: input, shape index: {}]
  %s3 = inlined_call_operand.vmem [shape: f32[9,512], index: 3, kind: input, shape index: {}]
  %s4 = inlined_call_operand.vmem [shape: bf16[8,40], index: 4, kind: input, shape index: {}]
  %s5 = inlined_call_operand.vmem [shape: f32[8,1], index: 5, kind: input, shape index: {}]
  %s6 = inlined_call_operand.vmem [shape: f32[8,72], index: 6, kind: input, shape index: {}]
  %s7 = inlined_call_operand.vmem [shape: f32[8,1], index: 7, kind: input, shape index: {}]
  %s8 = inlined_call_operand.vmem [shape: f32[16,128], index: 8, kind: output, shape index: {}]
  %s9 = sld [smem:[#allocation0]]
  $region91: #{_lambda_.1} parent=0
    _
  %s11 = ssub.s32 1, %s9
  %s12 = scalar_select 0, %s11, %s9
  $region1: #{_lambda_.1} parent=0
    #allocation2 [shape = 'u8[512000]{0}', space=vmem, size = 0x7d000, scoped, tag = 'input window, operand 0']
    loop: start=0, step=1, limit=4
    $region2: #{_lambda_.1} parent=1 // loop_pre_header
      _
    $region3: #{_lambda_.1} parent=1 // loop_header
      %s14 = sphi 0, %s18
      %p15 = scmp.ge.s32.totalorder %s14, 4
      %s24 = sphi 0, %s26
      %s27 = sphi 0, %s24
      %s28 = sphi 0, %s27
      %s44 = sphi 0, %s28
      %s50 = sphi 0, %s52
      %s53 = sphi 0, %s50
      %s54 = sphi 0, %s53
      %s70 = sphi 0, %s54
      %s74 = sphi 0, %s74
      %s76 = sphi 0, %s74
      %s77 = sphi 0, %s76
      %s91 = sphi 0, %s77
      %s95 = sphi 0, %s95
      %s97 = sphi 0, %s95
      %s98 = sphi 0, %s97
      %s112 = sphi 0, %s98
      %s116 = sphi 0, %s116
      %s118 = sphi 0, %s116
      %s119 = sphi 0, %s118
      %s133 = sphi 0, %s119
      %s137 = sphi 0, %s137
      %s139 = sphi 0, %s137
      %s140 = sphi 0, %s139
      %s154 = sphi 0, %s140
      %s158 = sphi 0, %s158
      %s160 = sphi 0, %s158
      %s161 = sphi 0, %s160
      %s175 = sphi 0, %s161
      %s179 = sphi 0, %s179
      %s181 = sphi 0, %s179
      %s182 = sphi 0, %s181
      %s196 = sphi 0, %s182
      %s202 = sphi 0, %s204
      %s205 = sphi 0, %s202
      %s206 = sphi 0, %s205
      %s222 = sphi 0, %s206
    $region4: #{_lambda_.1} parent=1 // loop_header_branch
      %17 = sbr.rel (%p15) target = $region8
    $region5: #{_lambda_.1} parent=1 // loop_body
      %s19 = ssub.s32 %s14, 1
      %s20 = ssub.s32 %s14, 2
      %s21 = sadd.s32 %s14, 1
      %s22 = ssub.s32 %s14, %s21
      %p23 = scmp.eq.s32.totalorder %s22, 0
      %s25 = sadd.s32 %s24, 1
      %s26 = scalar_select %p23, %s24, %s25
      %p29 = pneg %p23
      %p30 = scmp.eq.s32.totalorder %s14, 1
      %p31 = por %p29, %p30
      %p32 = scmp.ne.s32.totalorder %s24, %s27
      %p33 = scmp.eq.s32.totalorder %s14, 0
      %p34 = por %p32, %p33
      %p35 = scmp.ne.s32.totalorder %s24, %s27
      %p36 = scmp.eq.s32.totalorder %s19, 1
      %p37 = por %p35, %p36
      %p38 = scmp.ne.s32.totalorder %s27, %s28
      %p39 = scmp.eq.s32.totalorder %s19, 0
      %p40 = por %p38, %p39
      %p41 = scmp.ne.s32.totalorder %s27, %s28
      %p42 = scmp.eq.s32.totalorder %s20, 1
      %p43 = por %p41, %p42
      %p45 = scmp.ne.s32.totalorder %s28, %s44
      %p46 = scmp.eq.s32.totalorder %s20, 0
      %p47 = por %p45, %p46
      %s48 = ssub.s32 %s14, %s21
      %p49 = scmp.eq.s32.totalorder %s48, 0
      %s51 = sadd.s32 %s50, 1
      %s52 = scalar_select %p49, %s50, %s51
      %p55 = pneg %p49
      %p56 = scmp.eq.s32.totalorder %s14, 1
      %p57 = por %p55, %p56
      %p58 = scmp.ne.s32.totalorder %s50, %s53
      %p59 = scmp.eq.s32.totalorder %s14, 0
      %p60 = por %p58, %p59
      %p61 = scmp.ne.s32.totalorder %s50, %s53
      %p62 = scmp.eq.s32.totalorder %s19, 1
      %p63 = por %p61, %p62
      %p64 = scmp.ne.s32.totalorder %s53, %s54
      %p65 = scmp.eq.s32.totalorder %s19, 0
      %p66 = por %p64, %p65
      %p67 = scmp.ne.s32.totalorder %s53, %s54
      %p68 = scmp.eq.s32.totalorder %s20, 1
      %p69 = por %p67, %p68
      %p71 = scmp.ne.s32.totalorder %s54, %s70
      %p72 = scmp.eq.s32.totalorder %s20, 0
      %p73 = por %p71, %p72
      %s75 = sadd.s32 %s74, 1
      %p78 = scmp.eq.s32.totalorder %s14, 1
      %p79 = scmp.ne.s32.totalorder %s74, %s76
      %p80 = scmp.eq.s32.totalorder %s14, 0
      %p81 = por %p79, %p80
      %p82 = scmp.ne.s32.totalorder %s74, %s76
      %p83 = scmp.eq.s32.totalorder %s19, 1
      %p84 = por %p82, %p83
      %p85 = scmp.ne.s32.totalorder %s76, %s77
      %p86 = scmp.eq.s32.totalorder %s19, 0
      %p87 = por %p85, %p86
      %p88 = scmp.ne.s32.totalorder %s76, %s77
      %p89 = scmp.eq.s32.totalorder %s20, 1
      %p90 = por %p88, %p89
      %p92 = scmp.ne.s32.totalorder %s77, %s91
      %p93 = scmp.eq.s32.totalorder %s20, 0
      %p94 = por %p92, %p93
      %s96 = sadd.s32 %s95, 1
      %p99 = scmp.eq.s32.totalorder %s14, 1
      %p100 = scmp.ne.s32.totalorder %s95, %s97
      %p101 = scmp.eq.s32.totalorder %s14, 0
      %p102 = por %p100, %p101
      %p103 = scmp.ne.s32.totalorder %s95, %s97
      %p104 = scmp.eq.s32.totalorder %s19, 1
      %p105 = por %p103, %p104
      %p106 = scmp.ne.s32.totalorder %s97, %s98
      %p107 = scmp.eq.s32.totalorder %s19, 0
      %p108 = por %p106, %p107
      %p109 = scmp.ne.s32.totalorder %s97, %s98
      %p110 = scmp.eq.s32.totalorder %s20, 1
      %p111 = por %p109, %p110
      %p113 = scmp.ne.s32.totalorder %s98, %s112
      %p114 = scmp.eq.s32.totalorder %s20, 0
      %p115 = por %p113, %p114
      %s117 = sadd.s32 %s116, 1
      %p120 = scmp.eq.s32.totalorder %s14, 1
      %p121 = scmp.ne.s32.totalorder %s116, %s118
      %p122 = scmp.eq.s32.totalorder %s14, 0
      %p123 = por %p121, %p122
      %p124 = scmp.ne.s32.totalorder %s116, %s118
      %p125 = scmp.eq.s32.totalorder %s19, 1
      %p126 = por %p124, %p125
      %p127 = scmp.ne.s32.totalorder %s118, %s119
      %p128 = scmp.eq.s32.totalorder %s19, 0
      %p129 = por %p127, %p128
      %p130 = scmp.ne.s32.totalorder %s118, %s119
      %p131 = scmp.eq.s32.totalorder %s20, 1
      %p132 = por %p130, %p131
      %p134 = scmp.ne.s32.totalorder %s119, %s133
      %p135 = scmp.eq.s32.totalorder %s20, 0
      %p136 = por %p134, %p135
      %s138 = sadd.s32 %s137, 1
      %p141 = scmp.eq.s32.totalorder %s14, 1
      %p142 = scmp.ne.s32.totalorder %s137, %s139
      %p143 = scmp.eq.s32.totalorder %s14, 0
      %p144 = por %p142, %p143
      %p145 = scmp.ne.s32.totalorder %s137, %s139
      %p146 = scmp.eq.s32.totalorder %s19, 1
      %p147 = por %p145, %p146
      %p148 = scmp.ne.s32.totalorder %s139, %s140
      %p149 = scmp.eq.s32.totalorder %s19, 0
      %p150 = por %p148, %p149
      %p151 = scmp.ne.s32.totalorder %s139, %s140
      %p152 = scmp.eq.s32.totalorder %s20, 1
      %p153 = por %p151, %p152
      %p155 = scmp.ne.s32.totalorder %s140, %s154
      %p156 = scmp.eq.s32.totalorder %s20, 0
      %p157 = por %p155, %p156
      %s159 = sadd.s32 %s158, 1
      %p162 = scmp.eq.s32.totalorder %s14, 1
      %p163 = scmp.ne.s32.totalorder %s158, %s160
      %p164 = scmp.eq.s32.totalorder %s14, 0
      %p165 = por %p163, %p164
      %p166 = scmp.ne.s32.totalorder %s158, %s160
      %p167 = scmp.eq.s32.totalorder %s19, 1
      %p168 = por %p166, %p167
      %p169 = scmp.ne.s32.totalorder %s160, %s161
      %p170 = scmp.eq.s32.totalorder %s19, 0
      %p171 = por %p169, %p170
      %p172 = scmp.ne.s32.totalorder %s160, %s161
      %p173 = scmp.eq.s32.totalorder %s20, 1
      %p174 = por %p172, %p173
      %p176 = scmp.ne.s32.totalorder %s161, %s175
      %p177 = scmp.eq.s32.totalorder %s20, 0
      %p178 = por %p176, %p177
      %s180 = sadd.s32 %s179, 1
      %p183 = scmp.eq.s32.totalorder %s14, 1
      %p184 = scmp.ne.s32.totalorder %s179, %s181
      %p185 = scmp.eq.s32.totalorder %s14, 0
      %p186 = por %p184, %p185
      %p187 = scmp.ne.s32.totalorder %s179, %s181
      %p188 = scmp.eq.s32.totalorder %s19, 1
      %p189 = por %p187, %p188
      %p190 = scmp.ne.s32.totalorder %s181, %s182
      %p191 = scmp.eq.s32.totalorder %s19, 0
      %p192 = por %p190, %p191
      %p193 = scmp.ne.s32.totalorder %s181, %s182
      %p194 = scmp.eq.s32.totalorder %s20, 1
      %p195 = por %p193, %p194
      %p197 = scmp.ne.s32.totalorder %s182, %s196
      %p198 = scmp.eq.s32.totalorder %s20, 0
      %p199 = por %p197, %p198
      %s200 = ssub.s32 %s14, %s21
      %p201 = scmp.eq.s32.totalorder %s200, 0
      %s203 = sadd.s32 %s202, 1
      %s204 = scalar_select %p201, %s202, %s203
      %p207 = pneg %p201
      %p208 = scmp.eq.s32.totalorder %s14, 1
      %p209 = por %p207, %p208
      %p210 = scmp.ne.s32.totalorder %s202, %s205
      %p211 = scmp.eq.s32.totalorder %s14, 0
      %p212 = por %p210, %p211
      %p213 = scmp.ne.s32.totalorder %s202, %s205
      %p214 = scmp.eq.s32.totalorder %s19, 1
      %p215 = por %p213, %p214
      %p216 = scmp.ne.s32.totalorder %s205, %s206
      %p217 = scmp.eq.s32.totalorder %s19, 0
      %p218 = por %p216, %p217
      %p219 = scmp.ne.s32.totalorder %s205, %s206
      %p220 = scmp.eq.s32.totalorder %s20, 1
      %p221 = por %p219, %p220
      %p223 = scmp.ne.s32.totalorder %s206, %s222
      %p224 = scmp.eq.s32.totalorder %s20, 0
      %p225 = por %p223, %p224
      %p226 = scmp.le.s32.totalorder 1, %s14
      %p227 = scmp.lt.s32.totalorder %s14, 3
      %p228 = pnand %p226, %p227
      %p229 = pneg %p228
      // Predicated region
      $region9: #{_lambda_.1} parent=5 // pred_check
        _
      $region10: #{_lambda_.1} parent=5 // pred_check_branch
        %231 = sbr.rel (%p228) target = $region12
      $region11: #{_lambda_.1} parent=5 // pred_region
        %s232 = ssub.s32 %s14, 1
        // Predicated region
        $region13: #{_lambda_.1} parent=11 // pred_check
          %p233 = pneg %p87
        $region14: #{_lambda_.1} parent=11 // pred_check_branch
          %235 = sbr.rel (%p233) target = $region16
        $region15: #{_lambda_.1} parent=11 // pred_region
          _
        $region16: #{_lambda_.1} parent=11 // pred_fallthru
          _
        // Predicated region
        $region17: #{_lambda_.1} parent=11 // pred_check
          %p236 = pneg %p108
        $region18: #{_lambda_.1} parent=11 // pred_check_branch
          %238 = sbr.rel (%p236) target = $region20
        $region19: #{_lambda_.1} parent=11 // pred_region
          _
        $region20: #{_lambda_.1} parent=11 // pred_fallthru
          _
        // Predicated region
        $region21: #{_lambda_.1} parent=11 // pred_check
          %p239 = pneg %p129
        $region22: #{_lambda_.1} parent=11 // pred_check_branch
          %241 = sbr.rel (%p239) target = $region24
        $region23: #{_lambda_.1} parent=11 // pred_region
          _
        $region24: #{_lambda_.1} parent=11 // pred_fallthru
          _
        // Predicated region
        $region25: #{_lambda_.1} parent=11 // pred_check
          %p242 = pneg %p150
        $region26: #{_lambda_.1} parent=11 // pred_check_branch
          %244 = sbr.rel (%p242) target = $region28
        $region27: #{_lambda_.1} parent=11 // pred_region
          _
        $region28: #{_lambda_.1} parent=11 // pred_fallthru
          _
        // Predicated region
        $region29: #{_lambda_.1} parent=11 // pred_check
          %p245 = pneg %p171
        $region30: #{_lambda_.1} parent=11 // pred_check_branch
          %247 = sbr.rel (%p245) target = $region32
        $region31: #{_lambda_.1} parent=11 // pred_region
          _
        $region32: #{_lambda_.1} parent=11 // pred_fallthru
          _
        // Predicated region
        $region33: #{_lambda_.1} parent=11 // pred_check
          %p248 = pneg %p192
        $region34: #{_lambda_.1} parent=11 // pred_check_branch
          %250 = sbr.rel (%p248) target = $region36
        $region35: #{_lambda_.1} parent=11 // pred_region
          _
        $region36: #{_lambda_.1} parent=11 // pred_fallthru
          _
      $region12: #{_lambda_.1} parent=5 // pred_fallthru
        _
      %p251 = scmp.lt.s32.totalorder %s14, 2
      // Predicated region
      $region37: #{_lambda_.1} parent=5 // pred_check
        %p252 = pneg %p251
      $region38: #{_lambda_.1} parent=5 // pred_check_branch
        %254 = sbr.rel (%p252) target = $region40
      $region39: #{_lambda_.1} parent=5 // pred_region
        // Predicated region
        $region41: #{_lambda_.1} parent=39 // pred_check
          %p255 = pneg %p34
        $region42: #{_lambda_.1} parent=39 // pred_check_branch
          %257 = sbr.rel (%p255) target = $region44
        $region43: #{_lambda_.1} parent=39 // pred_region
          %s258 = sand.u32 %s24, 1
          %s259 = sand.u32 %s24, 1
          %s260 = smul.addr %s259, 500
          %s261 = scalar_lea.vmem [#allocation2], %s260
          %s262 = smul.u32 25, %s14
          %s263 = smul.addr %s262, 4
          %s264 = scalar_lea.vmem %s0, %s263
          // Predicated region
          $region45: #{_lambda_.1} parent=43 // pred_check
            _
          $region46: #{_lambda_.1} parent=43 // pred_check_branch
            %266 = sbr.rel (0) target = $region48
          $region47: #{_lambda_.1} parent=43 // pred_region
            // Predicated region
            $region49: #{_lambda_.1} parent=47 // pred_check
              _
            $region50: #{_lambda_.1} parent=47 // pred_check_branch
              %268 = sbr.rel (0) target = $region52
            $region51: #{_lambda_.1} parent=47 // pred_region
              %s269 = scalar_lea.vmem %s264, 96
              %s270 = scalar_lea.vmem %s261, 96 [#allocation2]
              loop: start=0, step=1, limit=1
              $region53: #{_lambda_.1} parent=51 // loop_pre_header
                _
              $region54: #{_lambda_.1} parent=51 // loop_header
                %s272 = sphi 0, %s276
                %p273 = scmp.ge.s32.totalorder %s272, 1
                %s277 = sphi %s264, %s264
                %s278 = sphi %s261, %s261
              $region55: #{_lambda_.1} parent=51 // loop_header_branch
                %275 = sbr.rel (%p273) target = $region59
              $region56: #{_lambda_.1} parent=51 // loop_body
                %v279 = vld [vmem:[%s277] sm:$0xff]
                %280 = vst [vmem:[%s278] sm:$0xff] %v279
                %v281 = vld [vmem:[%s277 + $0x8] sm:$0xff]
                %282 = vst [vmem:[%s278 + $0x8] sm:$0xff] %v281
                %v283 = vld [vmem:[%s277 + $0x10] sm:$0xff]
                %284 = vst [vmem:[%s278 + $0x10] sm:$0xff] %v283
                %v285 = vld [vmem:[%s277 + $0x18] sm:$0xff]
                %286 = vst [vmem:[%s278 + $0x18] sm:$0xff] %v285
                %v287 = vld [vmem:[%s277 + $0x20] sm:$0xff]
                %288 = vst [vmem:[%s278 + $0x20] sm:$0xff] %v287
                %v289 = vld [vmem:[%s277 + $0x28] sm:$0xff]
                %290 = vst [vmem:[%s278 + $0x28] sm:$0xff] %v289
                %v291 = vld [vmem:[%s277 + $0x30] sm:$0xff]
                %292 = vst [vmem:[%s278 + $0x30] sm:$0xff] %v291
                %v293 = vld [vmem:[%s277 + $0x38] sm:$0xff]
                %294 = vst [vmem:[%s278 + $0x38] sm:$0xff] %v293
                %v295 = vld [vmem:[%s277 + $0x40] sm:$0xff]
                %296 = vst [vmem:[%s278 + $0x40] sm:$0xff] %v295
                %v297 = vld [vmem:[%s277 + $0x48] sm:$0xff]
                %298 = vst [vmem:[%s278 + $0x48] sm:$0xff] %v297
                %v299 = vld [vmem:[%s277 + $0x50] sm:$0xff]
                %300 = vst [vmem:[%s278 + $0x50] sm:$0xff] %v299
                %v301 = vld [vmem:[%s277 + $0x58] sm:$0xff]
                %302 = vst [vmem:[%s278 + $0x58] sm:$0xff] %v301
                %v303 = vld [vmem:[%s277 + $0xc8] sm:$0xff]
                %304 = vst [vmem:[%s278 + $0x64] sm:$0xff] %v303
                %v305 = vld [vmem:[%s277 + $0xd0] sm:$0xff]
                %306 = vst [vmem:[%s278 + $0x6c] sm:$0xff] %v305
                %v307 = vld [vmem:[%s277 + $0xd8] sm:$0xff]
                %308 = vst [vmem:[%s278 + $0x74] sm:$0xff] %v307
                %v309 = vld [vmem:[%s277 + $0xe0] sm:$0xff]
                %310 = vst [vmem:[%s278 + $0x7c] sm:$0xff] %v309
                %v311 = vld [vmem:[%s277 + $0xe8] sm:$0xff]
                %312 = vst [vmem:[%s278 + $0x84] sm:$0xff] %v311
                %v313 = vld [vmem:[%s277 + $0xf0] sm:$0xff]
                %314 = vst [vmem:[%s278 + $0x8c] sm:$0xff] %v313
                %v315 = vld [vmem:[%s277 + $0xf8] sm:$0xff]
                %316 = vst [vmem:[%s278 + $0x94] sm:$0xff] %v315
                %v317 = vld [vmem:[%s277 + $0x100] sm:$0xff]
                %318 = vst [vmem:[%s278 + $0x9c] sm:$0xff] %v317
                %v319 = vld [vmem:[%s277 + $0x108] sm:$0xff]
                %320 = vst [vmem:[%s278 + $0xa4] sm:$0xff] %v319
                %v321 = vld [vmem:[%s277 + $0x110] sm:$0xff]
                %322 = vst [vmem:[%s278 + $0xac] sm:$0xff] %v321
                %v323 = vld [vmem:[%s277 + $0x118] sm:$0xff]
                %324 = vst [vmem:[%s278 + $0xb4] sm:$0xff] %v323
                %v325 = vld [vmem:[%s277 + $0x120] sm:$0xff]
                %326 = vst [vmem:[%s278 + $0xbc] sm:$0xff] %v325
                %v327 = vld [vmem:[%s277 + $0x190] sm:$0xff]
                %328 = vst [vmem:[%s278 + $0xc8] sm:$0xff] %v327
                %v329 = vld [vmem:[%s277 + $0x198] sm:$0xff]
                %330 = vst [vmem:[%s278 + $0xd0] sm:$0xff] %v329
                %v331 = vld [vmem:[%s277 + $0x1a0] sm:$0xff]
                %332 = vst [vmem:[%s278 + $0xd8] sm:$0xff] %v331
                %v333 = vld [vmem:[%s277 + $0x1a8] sm:$0xff]
                %334 = vst [vmem:[%s278 + $0xe0] sm:$0xff] %v333
                %v335 = vld [vmem:[%s277 + $0x1b0] sm:$0xff]
                %336 = vst [vmem:[%s278 + $0xe8] sm:$0xff] %v335
                %v337 = vld [vmem:[%s277 + $0x1b8] sm:$0xff]
                %338 = vst [vmem:[%s278 + $0xf0] sm:$0xff] %v337
                %v339 = vld [vmem:[%s277 + $0x1c0] sm:$0xff]
                %340 = vst [vmem:[%s278 + $0xf8] sm:$0xff] %v339
                %v341 = vld [vmem:[%s277 + $0x1c8] sm:$0xff]
                %342 = vst [vmem:[%s278 + $0x100] sm:$0xff] %v341
                %v343 = vld [vmem:[%s277 + $0x1d0] sm:$0xff]
                %344 = vst [vmem:[%s278 + $0x108] sm:$0xff] %v343
                %v345 = vld [vmem:[%s277 + $0x1d8] sm:$0xff]
                %346 = vst [vmem:[%s278 + $0x110] sm:$0xff] %v345
                %v347 = vld [vmem:[%s277 + $0x1e0] sm:$0xff]
                %348 = vst [vmem:[%s278 + $0x118] sm:$0xff] %v347
                %v349 = vld [vmem:[%s277 + $0x1e8] sm:$0xff]
                %350 = vst [vmem:[%s278 + $0x120] sm:$0xff] %v349
                %v351 = vld [vmem:[%s277 + $0x258] sm:$0xff]
                %352 = vst [vmem:[%s278 + $0x12c] sm:$0xff] %v351
                %v353 = vld [vmem:[%s277 + $0x260] sm:$0xff]
                %354 = vst [vmem:[%s278 + $0x134] sm:$0xff] %v353
                %v355 = vld [vmem:[%s277 + $0x268] sm:$0xff]
                %356 = vst [vmem:[%s278 + $0x13c] sm:$0xff] %v355
                %v357 = vld [vmem:[%s277 + $0x270] sm:$0xff]
                %358 = vst [vmem:[%s278 + $0x144] sm:$0xff] %v357
                %v359 = vld [vmem:[%s277 + $0x278] sm:$0xff]
                %360 = vst [vmem:[%s278 + $0x14c] sm:$0xff] %v359
                %v361 = vld [vmem:[%s277 + $0x280] sm:$0xff]
                %362 = vst [vmem:[%s278 + $0x154] sm:$0xff] %v361
                %v363 = vld [vmem:[%s277 + $0x288] sm:$0xff]
                %364 = vst [vmem:[%s278 + $0x15c] sm:$0xff] %v363
                %v365 = vld [vmem:[%s277 + $0x290] sm:$0xff]
                %366 = vst [vmem:[%s278 + $0x164] sm:$0xff] %v365
                %v367 = vld [vmem:[%s277 + $0x298] sm:$0xff]
                %368 = vst [vmem:[%s278 + $0x16c] sm:$0xff] %v367
                %v369 = vld [vmem:[%s277 + $0x2a0] sm:$0xff]
                %370 = vst [vmem:[%s278 + $0x174] sm:$0xff] %v369
                %v371 = vld [vmem:[%s277 + $0x2a8] sm:$0xff]
                %372 = vst [vmem:[%s278 + $0x17c] sm:$0xff] %v371
                %v373 = vld [vmem:[%s277 + $0x2b0] sm:$0xff]
                %374 = vst [vmem:[%s278 + $0x184] sm:$0xff] %v373
                %v375 = vld [vmem:[%s277 + $0x320] sm:$0xff]
                %376 = vst [vmem:[%s278 + $0x190] sm:$0xff] %v375
                %v377 = vld [vmem:[%s277 + $0x328] sm:$0xff]
                %378 = vst [vmem:[%s278 + $0x198] sm:$0xff] %v377
                %v379 = vld [vmem:[%s277 + $0x330] sm:$0xff]
                %380 = vst [vmem:[%s278 + $0x1a0] sm:$0xff] %v379
                %v381 = vld [vmem:[%s277 + $0x338] sm:$0xff]
                %382 = vst [vmem:[%s278 + $0x1a8] sm:$0xff] %v381
                %v383 = vld [vmem:[%s277 + $0x340] sm:$0xff]
                %384 = vst [vmem:[%s278 + $0x1b0] sm:$0xff] %v383
                %v385 = vld [vmem:[%s277 + $0x348] sm:$0xff]
                %386 = vst [vmem:[%s278 + $0x1b8] sm:$0xff] %v385
                %v387 = vld [vmem:[%s277 + $0x350] sm:$0xff]
                %388 = vst [vmem:[%s278 + $0x1c0] sm:$0xff] %v387
                %v389 = vld [vmem:[%s277 + $0x358] sm:$0xff]
                %390 = vst [vmem:[%s278 + $0x1c8] sm:$0xff] %v389
                %v391 = vld [vmem:[%s277 + $0x360] sm:$0xff]
                %392 = vst [vmem:[%s278 + $0x1d0] sm:$0xff] %v391
                %v393 = vld [vmem:[%s277 + $0x368] sm:$0xff]
                %394 = vst [vmem:[%s278 + $0x1d8] sm:$0xff] %v393
                %v395 = vld [vmem:[%s277 + $0x370] sm:$0xff]
                %396 = vst [vmem:[%s278 + $0x1e0] sm:$0xff] %v395
                %v397 = vld [vmem:[%s277 + $0x378] sm:$0xff]
                %398 = vst [vmem:[%s278 + $0x1e8] sm:$0xff] %v397
              $region57: #{_lambda_.1} parent=51 // loop_footer
                %s276 = sadd.s32 1, %s272
              $region58: #{_lambda_.1} parent=51 // loop_footer_branch
                %271 = sbr.rel target = $region54
              $region59: #{_lambda_.1} parent=51 // loop_exit
                _
              %s400 = ssub.s32 16, 1
              loop: start=0, step=1, limit=1
              $region60: #{_lambda_.1} parent=51 // loop_pre_header
                _
              $region61: #{_lambda_.1} parent=51 // loop_header
                %s402 = sphi 0, %s406
                %p403 = scmp.ge.s32.totalorder %s402, 1
                %s407 = sphi %s269, %s269
                %s408 = sphi %s270, %s270
              $region62: #{_lambda_.1} parent=51 // loop_header_branch
                %405 = sbr.rel (%p403) target = $region66
              $region63: #{_lambda_.1} parent=51 // loop_body
                %v409 = vld [vmem:[%s407] sm:%s400]
                %410 = vst [vmem:[%s408] sm:%s400] %v409
                %v411 = vld [vmem:[%s407 + $0xc8] sm:%s400]
                %412 = vst [vmem:[%s408 + $0x64] sm:%s400] %v411
                %v413 = vld [vmem:[%s407 + $0x190] sm:%s400]
                %414 = vst [vmem:[%s408 + $0xc8] sm:%s400] %v413
                %v415 = vld [vmem:[%s407 + $0x258] sm:%s400]
                %416 = vst [vmem:[%s408 + $0x12c] sm:%s400] %v415
                %v417 = vld [vmem:[%s407 + $0x320] sm:%s400]
                %418 = vst [vmem:[%s408 + $0x190] sm:%s400] %v417
              $region64: #{_lambda_.1} parent=51 // loop_footer
                %s406 = sadd.s32 1, %s402
              $region65: #{_lambda_.1} parent=51 // loop_footer_branch
                %401 = sbr.rel target = $region61
              $region66: #{_lambda_.1} parent=51 // loop_exit
                _
            $region52: #{_lambda_.1} parent=47 // pred_fallthru
              _
          $region48: #{_lambda_.1} parent=43 // pred_fallthru
            _
          %419 = vnop
        $region44: #{_lambda_.1} parent=39 // pred_fallthru
          _
        // Predicated region
        $region67: #{_lambda_.1} parent=39 // pred_check
          %p420 = pneg %p60
        $region68: #{_lambda_.1} parent=39 // pred_check_branch
          %422 = sbr.rel (%p420) target = $region70
        $region69: #{_lambda_.1} parent=39 // pred_region
          %s423 = smul.u32 20, %s14
          %p424 = scmp.lt.s32.totalorder %s423, 39
          %s425 = scalar_select %p424, %s423, 39
          %s426 = smul.addr %s425, 4
          %s427 = scalar_lea.vmem %s1, %s426
          %s428 = smul.u32 20, %s14
        $region70: #{_lambda_.1} parent=39 // pred_fallthru
          _
      $region40: #{_lambda_.1} parent=5 // pred_fallthru
        _
      %p429 = scmp.le.s32.totalorder 1, %s14
      %p430 = scmp.lt.s32.totalorder %s14, 3
      %p431 = pnand %p429, %p430
      %p432 = pneg %p431
      // Predicated region
      $region71: #{_lambda_.1} parent=5 // pred_check
        _
      $region72: #{_lambda_.1} parent=5 // pred_check_branch
        %434 = sbr.rel (%p431) target = $region74
      $region73: #{_lambda_.1} parent=5 // pred_region
        %s435 = ssub.s32 %s14, 1
        %s436 = sand.u32 %s27, 1
        %s437 = sand.u32 %s27, 1
        %s438 = smul.addr %s437, 500
        %s439 = scalar_lea.vmem [#allocation2], %s438
        // Predicated region
        $region75: #{_lambda_.1} parent=73 // pred_check
          %p440 = pneg %p40
        $region76: #{_lambda_.1} parent=73 // pred_check_branch
          %442 = sbr.rel (%p440) target = $region78
        $region77: #{_lambda_.1} parent=73 // pred_region
          _
        $region78: #{_lambda_.1} parent=73 // pred_fallthru
          _
        %s443 = sand.u32 %s27, 1
        %s444 = sand.u32 %s27, 1
        %s445 = smul.addr %s444, 500
        %s446 = scalar_lea.vmem [#allocation2], %s445
        %p447 = pneg %p40
        %p448 = pneg %p37
        %s449 = smul.u32 20, %s19
        %p450 = scmp.lt.s32.totalorder %s449, 39
        %s451 = scalar_select %p450, %s449, 39
        %s452 = smul.addr %s451, 4
        %s453 = scalar_lea.vmem %s1, %s452
        %p454 = pneg %p66
        %p455 = pneg %p63
        %p456 = pneg %p87
        %p457 = pneg %p84
        %p458 = pneg %p108
        %p459 = pneg %p105
        %p460 = pneg %p129
        %p461 = pneg %p126
        %p462 = pneg %p150
        %p463 = pneg %p147
        %p464 = pneg %p171
        %p465 = pneg %p168
        %p466 = pneg %p192
        %p467 = pneg %p189
        %p468 = pneg %p218
        %p469 = pneg %p215
        %p470 = scmp.lt.s32.totalorder %s19, 1
        %s471 = scalar_select %p470, %s19, 1
        %s472 = smul.addr %s471, 8
        %s473 = scalar_lea.vmem %s8, %s472
        %s474 = smul.u32 25, %s19
        %s475 = smul.u32 20, %s19
        %p476 = scmp.lt.s32.totalorder %s475, 39
        %s477 = scalar_select %p476, %s475, 39
        %s478 = smul.addr %s477, 4
        %s479 = scalar_lea.vmem %s1, %s478
        %s480 = smul.u32 20, %s19
        %p481 = scmp.lt.s32.totalorder %s19, 1
        %s482 = scalar_select %p481, %s19, 1
        %s483 = smul.addr %s482, 8
        %s484 = scalar_lea.vmem %s8, %s483
        %v486 = vld [vmem:[%s4] sm:$0xf]
        %v487 = vld [vmem:[%s439] sm:$0xff]
        %v488 = vld [vmem:[%s439 + $0x8] sm:$0xff]
        %v489 = vld [vmem:[%s439 + $0x10] sm:$0xff]
        %v490 = vld [vmem:[%s439 + $0x18] sm:$0xff]
        %v491 = vld [vmem:[%s439 + $0x20] sm:$0xff]
        %v492 = vld [vmem:[%s439 + $0x28] sm:$0xff]
        %v493 = vld [vmem:[%s439 + $0x30] sm:$0xff]
        %v494 = vld [vmem:[%s439 + $0x38] sm:$0xff]
        %v495 = vld [vmem:[%s439 + $0x40] sm:$0xff]
        %v496 = vld [vmem:[%s439 + $0x48] sm:$0xff]
        %v497 = vld [vmem:[%s439 + $0x50] sm:$0xff]
        %v498 = vld [vmem:[%s439 + $0x58] sm:$0xff]
        %v499 = vld [vmem:[%s439 + $0x60] sm:$0xf]
        %v500 = vld [vmem:[%s439 + $0x64] sm:$0xff]
        %v501 = vld [vmem:[%s439 + $0x6c] sm:$0xff]
        %v502 = vld [vmem:[%s439 + $0x74] sm:$0xff]
        %v503 = vld [vmem:[%s439 + $0x7c] sm:$0xff]
        %v504 = vld [vmem:[%s439 + $0x84] sm:$0xff]
        %v505 = vld [vmem:[%s439 + $0x8c] sm:$0xff]
        %v506 = vld [vmem:[%s439 + $0x94] sm:$0xff]
        %v507 = vld [vmem:[%s439 + $0x9c] sm:$0xff]
        %v508 = vld [vmem:[%s439 + $0xa4] sm:$0xff]
        %v509 = vld [vmem:[%s439 + $0xac] sm:$0xff]
        %v510 = vld [vmem:[%s439 + $0xb4] sm:$0xff]
        %v511 = vld [vmem:[%s439 + $0xbc] sm:$0xff]
        %v512 = vld [vmem:[%s439 + $0xc4] sm:$0xf]
        %v513 = vld [vmem:[%s439 + $0xc8] sm:$0xff]
        %v514 = vld [vmem:[%s439 + $0xd0] sm:$0xff]
        %v515 = vld [vmem:[%s439 + $0xd8] sm:$0xff]
        %v516 = vld [vmem:[%s439 + $0xe0] sm:$0xff]
        %v517 = vld [vmem:[%s439 + $0xe8] sm:$0xff]
        %v518 = vld [vmem:[%s439 + $0xf0] sm:$0xff]
        %v519 = vld [vmem:[%s439 + $0xf8] sm:$0xff]
        %v520 = vld [vmem:[%s439 + $0x100] sm:$0xff]
        %v521 = vld [vmem:[%s439 + $0x108] sm:$0xff]
        %v522 = vld [vmem:[%s439 + $0x110] sm:$0xff]
        %v523 = vld [vmem:[%s439 + $0x118] sm:$0xff]
        %v524 = vld [vmem:[%s439 + $0x120] sm:$0xff]
        %v525 = vld [vmem:[%s439 + $0x128] sm:$0xf]
        %v526 = vld [vmem:[%s439 + $0x12c] sm:$0xff]
        %v527 = vld [vmem:[%s439 + $0x134] sm:$0xff]
        %v528 = vld [vmem:[%s439 + $0x13c] sm:$0xff]
        %v529 = vld [vmem:[%s439 + $0x144] sm:$0xff]
        %v530 = vld [vmem:[%s439 + $0x14c] sm:$0xff]
        %v531 = vld [vmem:[%s439 + $0x154] sm:$0xff]
        %v532 = vld [vmem:[%s439 + $0x15c] sm:$0xff]
        %v533 = vld [vmem:[%s439 + $0x164] sm:$0xff]
        %v534 = vld [vmem:[%s439 + $0x16c] sm:$0xff]
        %v535 = vld [vmem:[%s439 + $0x174] sm:$0xff]
        %v536 = vld [vmem:[%s439 + $0x17c] sm:$0xff]
        %v537 = vld [vmem:[%s439 + $0x184] sm:$0xff]
        %v538 = vld [vmem:[%s439 + $0x18c] sm:$0xf]
        %v539 = vld [vmem:[%s439 + $0x190] sm:$0xff]
        %v540 = vld [vmem:[%s439 + $0x198] sm:$0xff]
        %v541 = vld [vmem:[%s439 + $0x1a0] sm:$0xff]
        %v542 = vld [vmem:[%s439 + $0x1a8] sm:$0xff]
        %v543 = vld [vmem:[%s439 + $0x1b0] sm:$0xff]
        %v544 = vld [vmem:[%s439 + $0x1b8] sm:$0xff]
        %v545 = vld [vmem:[%s439 + $0x1c0] sm:$0xff]
        %v546 = vld [vmem:[%s439 + $0x1c8] sm:$0xff]
        %v547 = vld [vmem:[%s439 + $0x1d0] sm:$0xff]
        %v548 = vld [vmem:[%s439 + $0x1d8] sm:$0xff]
        %v549 = vld [vmem:[%s439 + $0x1e0] sm:$0xff]
        %v550 = vld [vmem:[%s439 + $0x1e8] sm:$0xff]
        %v551 = vld [vmem:[%s439 + $0x1f0] sm:$0xf]
        %v552 = vld [vmem:[%s5] sm:$0xff]
        %554 = vset.pattern.permute.xlu0 0
        %555 = vperm.xlu0 %554, %v552
        %v556 = vpop.permute.xlu0 %555
        %v623 = vunpack.c.l.b16 %v487
        %v624 = vunpack.c.h.b16 %v487
        %v625 = vunpack.c.l.b16 %v488
        %v626 = vunpack.c.h.b16 %v488
        %v627 = vunpack.c.l.b16 %v489
        %v628 = vunpack.c.h.b16 %v489
        %v629 = vunpack.c.l.b16 %v490
        %v630 = vunpack.c.h.b16 %v490
        %v631 = vunpack.c.l.b16 %v491
        %v632 = vunpack.c.h.b16 %v491
        %v633 = vunpack.c.l.b16 %v492
        %v634 = vunpack.c.h.b16 %v492
        %v635 = vunpack.c.l.b16 %v493
        %v636 = vunpack.c.h.b16 %v493
        %v637 = vunpack.c.l.b16 %v494
        %v638 = vunpack.c.h.b16 %v494
        %v639 = vunpack.c.l.b16 %v495
        %v640 = vunpack.c.h.b16 %v495
        %v641 = vunpack.c.l.b16 %v496
        %v642 = vunpack.c.h.b16 %v496
        %v643 = vunpack.c.l.b16 %v497
        %v644 = vunpack.c.h.b16 %v497
        %v645 = vunpack.c.l.b16 %v498
        %v646 = vunpack.c.h.b16 %v498
        %v647 = vunpack.c.l.b16 %v499
        %v648 = vunpack.c.l.b16 %v500
        %v649 = vunpack.c.h.b16 %v500
        %v650 = vunpack.c.l.b16 %v501
        %v651 = vunpack.c.h.b16 %v501
        %v652 = vunpack.c.l.b16 %v502
        %v653 = vunpack.c.h.b16 %v502
        %v654 = vunpack.c.l.b16 %v503
        %v655 = vunpack.c.h.b16 %v503
        %v656 = vunpack.c.l.b16 %v504
        %v657 = vunpack.c.h.b16 %v504
        %v658 = vunpack.c.l.b16 %v505
        %v659 = vunpack.c.h.b16 %v505
        %v660 = vunpack.c.l.b16 %v506
        %v661 = vunpack.c.h.b16 %v506
        %v662 = vunpack.c.l.b16 %v507
        %v663 = vunpack.c.h.b16 %v507
        %v664 = vunpack.c.l.b16 %v508
        %v665 = vunpack.c.h.b16 %v508
        %v666 = vunpack.c.l.b16 %v509
        %v667 = vunpack.c.h.b16 %v509
        %v668 = vunpack.c.l.b16 %v510
        %v669 = vunpack.c.h.b16 %v510
        %v670 = vunpack.c.l.b16 %v511
        %v671 = vunpack.c.h.b16 %v511
        %v672 = vunpack.c.l.b16 %v512
        %v673 = vunpack.c.l.b16 %v513
        %v674 = vunpack.c.h.b16 %v513
        %v675 = vunpack.c.l.b16 %v514
        %v676 = vunpack.c.h.b16 %v514
        %v677 = vunpack.c.l.b16 %v515
        %v678 = vunpack.c.h.b16 %v515
        %v679 = vunpack.c.l.b16 %v516
        %v680 = vunpack.c.h.b16 %v516
        %v681 = vunpack.c.l.b16 %v517
        %v682 = vunpack.c.h.b16 %v517
        %v683 = vunpack.c.l.b16 %v518
        %v684 = vunpack.c.h.b16 %v518
        %v685 = vunpack.c.l.b16 %v519
        %v686 = vunpack.c.h.b16 %v519
        %v687 = vunpack.c.l.b16 %v520
        %v688 = vunpack.c.h.b16 %v520
        %v689 = vunpack.c.l.b16 %v521
        %v690 = vunpack.c.h.b16 %v521
        %v691 = vunpack.c.l.b16 %v522
        %v692 = vunpack.c.h.b16 %v522
        %v693 = vunpack.c.l.b16 %v523
        %v694 = vunpack.c.h.b16 %v523
        %v695 = vunpack.c.l.b16 %v524
        %v696 = vunpack.c.h.b16 %v524
        %v697 = vunpack.c.l.b16 %v525
        %v698 = vunpack.c.l.b16 %v526
        %v699 = vunpack.c.h.b16 %v526
        %v700 = vunpack.c.l.b16 %v527
        %v701 = vunpack.c.h.b16 %v527
        %v702 = vunpack.c.l.b16 %v528
        %v703 = vunpack.c.h.b16 %v528
        %v704 = vunpack.c.l.b16 %v529
        %v705 = vunpack.c.h.b16 %v529
        %v706 = vunpack.c.l.b16 %v530
        %v707 = vunpack.c.h.b16 %v530
        %v708 = vunpack.c.l.b16 %v531
        %v709 = vunpack.c.h.b16 %v531
        %v710 = vunpack.c.l.b16 %v532
        %v711 = vunpack.c.h.b16 %v532
        %v712 = vunpack.c.l.b16 %v533
        %v713 = vunpack.c.h.b16 %v533
        %v714 = vunpack.c.l.b16 %v534
        %v715 = vunpack.c.h.b16 %v534
        %v716 = vunpack.c.l.b16 %v535
        %v717 = vunpack.c.h.b16 %v535
        %v718 = vunpack.c.l.b16 %v536
        %v719 = vunpack.c.h.b16 %v536
        %v720 = vunpack.c.l.b16 %v537
        %v721 = vunpack.c.h.b16 %v537
        %v722 = vunpack.c.l.b16 %v538
        %v723 = vunpack.c.l.b16 %v539
        %v724 = vunpack.c.h.b16 %v539
        %v725 = vunpack.c.l.b16 %v540
        %v726 = vunpack.c.h.b16 %v540
        %v727 = vunpack.c.l.b16 %v541
        %v728 = vunpack.c.h.b16 %v541
        %v729 = vunpack.c.l.b16 %v542
        %v730 = vunpack.c.h.b16 %v542
        %v731 = vunpack.c.l.b16 %v543
        %v732 = vunpack.c.h.b16 %v543
        %v733 = vunpack.c.l.b16 %v544
        %v734 = vunpack.c.h.b16 %v544
        %v735 = vunpack.c.l.b16 %v545
        %v736 = vunpack.c.h.b16 %v545
        %v737 = vunpack.c.l.b16 %v546
        %v738 = vunpack.c.h.b16 %v546
        %v739 = vunpack.c.l.b16 %v547
        %v740 = vunpack.c.h.b16 %v547
        %v741 = vunpack.c.l.b16 %v548
        %v742 = vunpack.c.h.b16 %v548
        %v743 = vunpack.c.l.b16 %v549
        %v744 = vunpack.c.h.b16 %v549
        %v745 = vunpack.c.l.b16 %v550
        %v746 = vunpack.c.h.b16 %v550
        %v747 = vunpack.c.l.b16 %v551
        %v748 = vpack.c.b16 %v648, %v623
        %v749 = vpack.c.b16 %v649, %v624
        %v750 = vpack.c.b16 %v650, %v625
        %v751 = vpack.c.b16 %v651, %v626
        %v752 = vpack.c.b16 %v652, %v627
        %v753 = vpack.c.b16 %v653, %v628
        %v754 = vpack.c.b16 %v654, %v629
        %v755 = vpack.c.b16 %v655, %v630
        %v756 = vpack.c.b16 %v656, %v631
        %v757 = vpack.c.b16 %v657, %v632
        %v758 = vpack.c.b16 %v658, %v633
        %v759 = vpack.c.b16 %v659, %v634
        %v760 = vpack.c.b16 %v660, %v635
        %v761 = vpack.c.b16 %v661, %v636
        %v762 = vpack.c.b16 %v662, %v637
        %v763 = vpack.c.b16 %v663, %v638
        %v764 = vpack.c.b16 %v664, %v639
        %v765 = vpack.c.b16 %v665, %v640
        %v766 = vpack.c.b16 %v666, %v641
        %v767 = vpack.c.b16 %v667, %v642
        %v768 = vpack.c.b16 %v668, %v643
        %v769 = vpack.c.b16 %v669, %v644
        %v770 = vpack.c.b16 %v670, %v645
        %v771 = vpack.c.b16 %v671, %v646
        %v772 = vpack.c.b16 %v672, %v647
        %v773 = vpack.c.b16 %v698, %v673
        %v774 = vpack.c.b16 %v699, %v674
        %v775 = vpack.c.b16 %v700, %v675
        %v776 = vpack.c.b16 %v701, %v676
        %v777 = vpack.c.b16 %v702, %v677
        %v778 = vpack.c.b16 %v703, %v678
        %v779 = vpack.c.b16 %v704, %v679
        %v780 = vpack.c.b16 %v705, %v680
        %v781 = vpack.c.b16 %v706, %v681
        %v782 = vpack.c.b16 %v707, %v682
        %v783 = vpack.c.b16 %v708, %v683
        %v784 = vpack.c.b16 %v709, %v684
        %v785 = vpack.c.b16 %v710, %v685
        %v786 = vpack.c.b16 %v711, %v686
        %v787 = vpack.c.b16 %v712, %v687
        %v788 = vpack.c.b16 %v713, %v688
        %v789 = vpack.c.b16 %v714, %v689
        %v790 = vpack.c.b16 %v715, %v690
        %v791 = vpack.c.b16 %v716, %v691
        %v792 = vpack.c.b16 %v717, %v692
        %v793 = vpack.c.b16 %v718, %v693
        %v794 = vpack.c.b16 %v719, %v694
        %v795 = vpack.c.b16 %v720, %v695
        %v796 = vpack.c.b16 %v721, %v696
        %v797 = vpack.c.b16 %v722, %v697
        %v798 = vpack.c.b16 %v723, %v723
        %v799 = vpack.c.b16 %v724, %v724
        %v800 = vpack.c.b16 %v725, %v725
        %v801 = vpack.c.b16 %v726, %v726
        %v802 = vpack.c.b16 %v727, %v727
        %v803 = vpack.c.b16 %v728, %v728
        %v804 = vpack.c.b16 %v729, %v729
        %v805 = vpack.c.b16 %v730, %v730
        %v806 = vpack.c.b16 %v731, %v731
        %v807 = vpack.c.b16 %v732, %v732
        %v808 = vpack.c.b16 %v733, %v733
        %v809 = vpack.c.b16 %v734, %v734
        %v810 = vpack.c.b16 %v735, %v735
        %v811 = vpack.c.b16 %v736, %v736
        %v812 = vpack.c.b16 %v737, %v737
        %v813 = vpack.c.b16 %v738, %v738
        %v814 = vpack.c.b16 %v739, %v739
        %v815 = vpack.c.b16 %v740, %v740
        %v816 = vpack.c.b16 %v741, %v741
        %v817 = vpack.c.b16 %v742, %v742
        %v818 = vpack.c.b16 %v743, %v743
        %v819 = vpack.c.b16 %v744, %v744
        %v820 = vpack.c.b16 %v745, %v745
        %v821 = vpack.c.b16 %v746, %v746
        %v822 = vpack.c.b16 %v747, %v747
        %vm873 = vcmask 326656
        %v875 = vsel %vm873, %v486, 0
        %vm877 = vcmask 1043456
        %v879 = vsel %vm877, %v798, 0
        %v882 = vsel %vm877, %v799, 0
        %v885 = vsel %vm877, %v800, 0
        %v888 = vsel %vm877, %v801, 0
        %v891 = vsel %vm877, %v802, 0
        %v894 = vsel %vm877, %v803, 0
        %v897 = vsel %vm877, %v804, 0
        %v900 = vsel %vm877, %v805, 0
        %v903 = vsel %vm877, %v806, 0
        %v906 = vsel %vm877, %v807, 0
        %v909 = vsel %vm877, %v808, 0
        %v912 = vsel %vm877, %v809, 0
        %v915 = vsel %vm877, %v810, 0
        %v918 = vsel %vm877, %v811, 0
        %v921 = vsel %vm877, %v812, 0
        %v924 = vsel %vm877, %v813, 0
        %v927 = vsel %vm877, %v814, 0
        %v930 = vsel %vm877, %v815, 0
        %v933 = vsel %vm877, %v816, 0
        %v936 = vsel %vm877, %v817, 0
        %v939 = vsel %vm877, %v818, 0
        %v942 = vsel %vm877, %v819, 0
        %v945 = vsel %vm877, %v820, 0
        %v948 = vsel %vm877, %v821, 0
        %v951 = vsel %vm877, %v822, 0
        %953 = vmatprep.subr.bf16.mxu0 0
        %954 = vmatpush1.bf16.msra.mxu0 0
        %955 = vmatprep.subr.bf16.mxu0 0
        %956 = vmatpush1.bf16.msra.mxu0 0
        %957 = vmatprep.subr.bf16.mxu0 0
        %958 = vmatpush1.bf16.msra.mxu0 0
        %959 = vmatprep.subr.bf16.mxu0 0
        %960 = vmatpush1.bf16.msra.mxu0 0
        %961 = vmatprep.subr.bf16.mxu0 0
        %962 = vmatpush1.bf16.msra.mxu0 0
        %963 = vmatprep.subr.bf16.mxu0 %v882
        %964 = vmatpush1.bf16.msra.mxu0 %v879
        %965 = vmatprep.subr.bf16.mxu0 %v774
        %966 = vmatpush1.bf16.msra.mxu0 %v773
        %967 = vmatprep.subr.bf16.mxu0 %v749
        %968 = vmatpush1.bf16.msra.mxu0 %v748
        %969 = vmatprep.subr.bf16.mxu0 0
        %970 = vmatpush2.bf16.msra.mxu0 0
        %971 = vmatprep.subr.bf16.mxu0 0
        %972 = vmatpush2.bf16.msra.mxu0 0
        %973 = vmatprep.subr.bf16.mxu0 0
        %974 = vmatpush2.bf16.msra.mxu0 0
        %975 = vmatprep.subr.bf16.mxu0 0
        %976 = vmatpush2.bf16.msra.mxu0 0
        %977 = vmatprep.subr.bf16.mxu0 0
        %978 = vmatpush2.bf16.msra.mxu0 0
        %979 = vmatprep.subr.bf16.mxu0 0
        %980 = vmatpush2.bf16.msra.mxu0 0
        %981 = vmatprep.subr.bf16.mxu0 0
        %982 = vmatpush2.bf16.msra.mxu0 0
        %983 = vmatprep.subr.bf16.mxu0 0
        %984 = vmatpush2.bf16.msra.mxu0 0
        %985 = vmatprep.mubr.bf16.mxu0 0
        %986 = vmatmul.mubr.bf16.gmra.mxu0 %v875
        %v987 = vpop.f32.mrf.mxu0
        %v988 = vadd.f32 %v556, %v987
        %v989 = vpop.f32.mrf.mxu0
        %v990 = vadd.f32 %v556, %v989
        %v991 = vpop.f32.mrf.mxu0
        %v992 = vpop.f32.mrf.mxu0
        %993 = vdwg.mxu0
        %994 = vmatprep.subr.bf16.mxu0 0
        %995 = vmatpush1.bf16.msra.mxu0 0
        %996 = vmatprep.subr.bf16.mxu0 0
        %997 = vmatpush1.bf16.msra.mxu0 0
        %998 = vmatprep.subr.bf16.mxu0 0
        %999 = vmatpush1.bf16.msra.mxu0 0
        %1000 = vmatprep.subr.bf16.mxu0 0
        %1001 = vmatpush1.bf16.msra.mxu0 0
        %1002 = vmatprep.subr.bf16.mxu0 0
        %1003 = vmatpush1.bf16.msra.mxu0 0
        %1004 = vmatprep.subr.bf16.mxu0 %v888
        %1005 = vmatpush1.bf16.msra.mxu0 %v885
        %1006 = vmatprep.subr.bf16.mxu0 %v776
        %1007 = vmatpush1.bf16.msra.mxu0 %v775
        %1008 = vmatprep.subr.bf16.mxu0 %v751
        %1009 = vmatpush1.bf16.msra.mxu0 %v750
        %1010 = vmatprep.subr.bf16.mxu0 0
        %1011 = vmatpush2.bf16.msra.mxu0 0
        %1012 = vmatprep.subr.bf16.mxu0 0
        %1013 = vmatpush2.bf16.msra.mxu0 0
        %1014 = vmatprep.subr.bf16.mxu0 0
        %1015 = vmatpush2.bf16.msra.mxu0 0
        %1016 = vmatprep.subr.bf16.mxu0 0
        %1017 = vmatpush2.bf16.msra.mxu0 0
        %1018 = vmatprep.subr.bf16.mxu0 0
        %1019 = vmatpush2.bf16.msra.mxu0 0
        %1020 = vmatprep.subr.bf16.mxu0 0
        %1021 = vmatpush2.bf16.msra.mxu0 0
        %1022 = vmatprep.subr.bf16.mxu0 0
        %1023 = vmatpush2.bf16.msra.mxu0 0
        %1024 = vmatprep.subr.bf16.mxu0 0
        %1025 = vmatpush2.bf16.msra.mxu0 0
        %1026 = vmatprep.mubr.bf16.mxu0 0
        %1027 = vmatmul.mubr.bf16.gmra.mxu0 %v875
        %v1028 = vpop.f32.mrf.mxu0
        %v1029 = vadd.f32 %v556, %v1028
        %v1030 = vpop.f32.mrf.mxu0
        %v1031 = vadd.f32 %v556, %v1030
        %v1032 = vpop.f32.mrf.mxu0
        %v1033 = vpop.f32.mrf.mxu0
        %1034 = vdwg.mxu0
        %1035 = vmatprep.subr.bf16.mxu0 0
        %1036 = vmatpush1.bf16.msra.mxu0 0
        %1037 = vmatprep.subr.bf16.mxu0 0
        %1038 = vmatpush1.bf16.msra.mxu0 0
        %1039 = vmatprep.subr.bf16.mxu0 0
        %1040 = vmatpush1.bf16.msra.mxu0 0
        %1041 = vmatprep.subr.bf16.mxu0 0
        %1042 = vmatpush1.bf16.msra.mxu0 0
        %1043 = vmatprep.subr.bf16.mxu0 0
        %1044 = vmatpush1.bf16.msra.mxu0 0
        %1045 = vmatprep.subr.bf16.mxu0 %v894
        %1046 = vmatpush1.bf16.msra.mxu0 %v891
        %1047 = vmatprep.subr.bf16.mxu0 %v778
        %1048 = vmatpush1.bf16.msra.mxu0 %v777
        %1049 = vmatprep.subr.bf16.mxu0 %v753
        %1050 = vmatpush1.bf16.msra.mxu0 %v752
        %1051 = vmatprep.subr.bf16.mxu0 0
        %1052 = vmatpush2.bf16.msra.mxu0 0
        %1053 = vmatprep.subr.bf16.mxu0 0
        %1054 = vmatpush2.bf16.msra.mxu0 0
        %1055 = vmatprep.subr.bf16.mxu0 0
        %1056 = vmatpush2.bf16.msra.mxu0 0
        %1057 = vmatprep.subr.bf16.mxu0 0
        %1058 = vmatpush2.bf16.msra.mxu0 0
        %1059 = vmatprep.subr.bf16.mxu0 0
        %1060 = vmatpush2.bf16.msra.mxu0 0
        %1061 = vmatprep.subr.bf16.mxu0 0
        %1062 = vmatpush2.bf16.msra.mxu0 0
        %1063 = vmatprep.subr.bf16.mxu0 0
        %1064 = vmatpush2.bf16.msra.mxu0 0
        %1065 = vmatprep.subr.bf16.mxu0 0
        %1066 = vmatpush2.bf16.msra.mxu0 0
        %1067 = vmatprep.mubr.bf16.mxu0 0
        %1068 = vmatmul.mubr.bf16.gmra.mxu0 %v875
        %v1069 = vpop.f32.mrf.mxu0
        %v1070 = vadd.f32 %v556, %v1069
        %v1071 = vpop.f32.mrf.mxu0
        %v1072 = vadd.f32 %v556, %v1071
        %v1073 = vpop.f32.mrf.mxu0
        %v1074 = vpop.f32.mrf.mxu0
        %1075 = vdwg.mxu0
        %1076 = vmatprep.subr.bf16.mxu0 0
        %1077 = vmatpush1.bf16.msra.mxu0 0
        %1078 = vmatprep.subr.bf16.mxu0 0
        %1079 = vmatpush1.bf16.msra.mxu0 0
        %1080 = vmatprep.subr.bf16.mxu0 0
        %1081 = vmatpush1.bf16.msra.mxu0 0
        %1082 = vmatprep.subr.bf16.mxu0 0
        %1083 = vmatpush1.bf16.msra.mxu0 0
        %1084 = vmatprep.subr.bf16.mxu0 0
        %1085 = vmatpush1.bf16.msra.mxu0 0
        %1086 = vmatprep.subr.bf16.mxu0 %v900
        %1087 = vmatpush1.bf16.msra.mxu0 %v897
        %1088 = vmatprep.subr.bf16.mxu0 %v780
        %1089 = vmatpush1.bf16.msra.mxu0 %v779
        %1090 = vmatprep.subr.bf16.mxu0 %v755
        %1091 = vmatpush1.bf16.msra.mxu0 %v754
        %1092 = vmatprep.subr.bf16.mxu0 0
        %1093 = vmatpush2.bf16.msra.mxu0 0
        %1094 = vmatprep.subr.bf16.mxu0 0
        %1095 = vmatpush2.bf16.msra.mxu0 0
        %1096 = vmatprep.subr.bf16.mxu0 0
        %1097 = vmatpush2.bf16.msra.mxu0 0
        %1098 = vmatprep.subr.bf16.mxu0 0
        %1099 = vmatpush2.bf16.msra.mxu0 0
        %1100 = vmatprep.subr.bf16.mxu0 0
        %1101 = vmatpush2.bf16.msra.mxu0 0
        %1102 = vmatprep.subr.bf16.mxu0 0
        %1103 = vmatpush2.bf16.msra.mxu0 0
        %1104 = vmatprep.subr.bf16.mxu0 0
        %1105 = vmatpush2.bf16.msra.mxu0 0
        %1106 = vmatprep.subr.bf16.mxu0 0
        %1107 = vmatpush2.bf16.msra.mxu0 0
        %1108 = vmatprep.mubr.bf16.mxu0 0
        %1109 = vmatmul.mubr.bf16.gmra.mxu0 %v875
        %v1110 = vpop.f32.mrf.mxu0
        %v1111 = vadd.f32 %v556, %v1110
        %v1112 = vpop.f32.mrf.mxu0
        %v1113 = vadd.f32 %v556, %v1112
        %v1114 = vpop.f32.mrf.mxu0
        %v1115 = vpop.f32.mrf.mxu0
        %1116 = vdwg.mxu0
        %1117 = vmatprep.subr.bf16.mxu0 0
        %1118 = vmatpush1.bf16.msra.mxu0 0
        %1119 = vmatprep.subr.bf16.mxu0 0
        %1120 = vmatpush1.bf16.msra.mxu0 0
        %1121 = vmatprep.subr.bf16.mxu0 0
        %1122 = vmatpush1.bf16.msra.mxu0 0
        %1123 = vmatprep.subr.bf16.mxu0 0
        %1124 = vmatpush1.bf16.msra.mxu0 0
        %1125 = vmatprep.subr.bf16.mxu0 0
        %1126 = vmatpush1.bf16.msra.mxu0 0
        %1127 = vmatprep.subr.bf16.mxu0 %v906
        %1128 = vmatpush1.bf16.msra.mxu0 %v903
        %1129 = vmatprep.subr.bf16.mxu0 %v782
        %1130 = vmatpush1.bf16.msra.mxu0 %v781
        %1131 = vmatprep.subr.bf16.mxu0 %v757
        %1132 = vmatpush1.bf16.msra.mxu0 %v756
        %1133 = vmatprep.subr.bf16.mxu0 0
        %1134 = vmatpush2.bf16.msra.mxu0 0
        %1135 = vmatprep.subr.bf16.mxu0 0
        %1136 = vmatpush2.bf16.msra.mxu0 0
        %1137 = vmatprep.subr.bf16.mxu0 0
        %1138 = vmatpush2.bf16.msra.mxu0 0
        %1139 = vmatprep.subr.bf16.mxu0 0
        %1140 = vmatpush2.bf16.msra.mxu0 0
        %1141 = vmatprep.subr.bf16.mxu0 0
        %1142 = vmatpush2.bf16.msra.mxu0 0
        %1143 = vmatprep.subr.bf16.mxu0 0
        %1144 = vmatpush2.bf16.msra.mxu0 0
        %1145 = vmatprep.subr.bf16.mxu0 0
        %1146 = vmatpush2.bf16.msra.mxu0 0
        %1147 = vmatprep.subr.bf16.mxu0 0
        %1148 = vmatpush2.bf16.msra.mxu0 0
        %1149 = vmatprep.mubr.bf16.mxu0 0
        %1150 = vmatmul.mubr.bf16.gmra.mxu0 %v875
        %v1151 = vpop.f32.mrf.mxu0
        %v1152 = vadd.f32 %v556, %v1151
        %v1153 = vpop.f32.mrf.mxu0
        %v1154 = vadd.f32 %v556, %v1153
        %v1155 = vpop.f32.mrf.mxu0
        %v1156 = vpop.f32.mrf.mxu0
        %1157 = vdwg.mxu0
        %1158 = vmatprep.subr.bf16.mxu0 0
        %1159 = vmatpush1.bf16.msra.mxu0 0
        %1160 = vmatprep.subr.bf16.mxu0 0
        %1161 = vmatpush1.bf16.msra.mxu0 0
        %1162 = vmatprep.subr.bf16.mxu0 0
        %1163 = vmatpush1.bf16.msra.mxu0 0
        %1164 = vmatprep.subr.bf16.mxu0 0
        %1165 = vmatpush1.bf16.msra.mxu0 0
        %1166 = vmatprep.subr.bf16.mxu0 0
        %1167 = vmatpush1.bf16.msra.mxu0 0
        %1168 = vmatprep.subr.bf16.mxu0 %v912
        %1169 = vmatpush1.bf16.msra.mxu0 %v909
        %1170 = vmatprep.subr.bf16.mxu0 %v784
        %1171 = vmatpush1.bf16.msra.mxu0 %v783
        %1172 = vmatprep.subr.bf16.mxu0 %v759
        %1173 = vmatpush1.bf16.msra.mxu0 %v758
        %1174 = vmatprep.subr.bf16.mxu0 0
        %1175 = vmatpush2.bf16.msra.mxu0 0
        %1176 = vmatprep.subr.bf16.mxu0 0
        %1177 = vmatpush2.bf16.msra.mxu0 0
        %1178 = vmatprep.subr.bf16.mxu0 0
        %1179 = vmatpush2.bf16.msra.mxu0 0
        %1180 = vmatprep.subr.bf16.mxu0 0
        %1181 = vmatpush2.bf16.msra.mxu0 0
        %1182 = vmatprep.subr.bf16.mxu0 0
        %1183 = vmatpush2.bf16.msra.mxu0 0
        %1184 = vmatprep.subr.bf16.mxu0 0
        %1185 = vmatpush2.bf16.msra.mxu0 0
        %1186 = vmatprep.subr.bf16.mxu0 0
        %1187 = vmatpush2.bf16.msra.mxu0 0
        %1188 = vmatprep.subr.bf16.mxu0 0
        %1189 = vmatpush2.bf16.msra.mxu0 0
        %1190 = vmatprep.mubr.bf16.mxu0 0
        %1191 = vmatmul.mubr.bf16.gmra.mxu0 %v875
        %v1192 = vpop.f32.mrf.mxu0
        %v1193 = vadd.f32 %v556, %v1192
        %v1194 = vpop.f32.mrf.mxu0
        %v1195 = vadd.f32 %v556, %v1194
        %v1196 = vpop.f32.mrf.mxu0
        %v1197 = vpop.f32.mrf.mxu0
        %1198 = vdwg.mxu0
        %1199 = vmatprep.subr.bf16.mxu0 0
        %1200 = vmatpush1.bf16.msra.mxu0 0
        %1201 = vmatprep.subr.bf16.mxu0 0
        %1202 = vmatpush1.bf16.msra.mxu0 0
        %1203 = vmatprep.subr.bf16.mxu0 0
        %1204 = vmatpush1.bf16.msra.mxu0 0
        %1205 = vmatprep.subr.bf16.mxu0 0
        %1206 = vmatpush1.bf16.msra.mxu0 0
        %1207 = vmatprep.subr.bf16.mxu0 0
        %1208 = vmatpush1.bf16.msra.mxu0 0
        %1209 = vmatprep.subr.bf16.mxu0 %v918
        %1210 = vmatpush1.bf16.msra.mxu0 %v915
        %1211 = vmatprep.subr.bf16.mxu0 %v786
        %1212 = vmatpush1.bf16.msra.mxu0 %v785
        %1213 = vmatprep.subr.bf16.mxu0 %v761
        %1214 = vmatpush1.bf16.msra.mxu0 %v760
        %1215 = vmatprep.subr.bf16.mxu0 0
        %1216 = vmatpush2.bf16.msra.mxu0 0
        %1217 = vmatprep.subr.bf16.mxu0 0
        %1218 = vmatpush2.bf16.msra.mxu0 0
        %1219 = vmatprep.subr.bf16.mxu0 0
        %1220 = vmatpush2.bf16.msra.mxu0 0
        %1221 = vmatprep.subr.bf16.mxu0 0
        %1222 = vmatpush2.bf16.msra.mxu0 0
        %1223 = vmatprep.subr.bf16.mxu0 0
        %1224 = vmatpush2.bf16.msra.mxu0 0
        %1225 = vmatprep.subr.bf16.mxu0 0
        %1226 = vmatpush2.bf16.msra.mxu0 0
        %1227 = vmatprep.subr.bf16.mxu0 0
        %1228 = vmatpush2.bf16.msra.mxu0 0
        %1229 = vmatprep.subr.bf16.mxu0 0
        %1230 = vmatpush2.bf16.msra.mxu0 0
        %1231 = vmatprep.mubr.bf16.mxu0 0
        %1232 = vmatmul.mubr.bf16.gmra.mxu0 %v875
        %v1233 = vpop.f32.mrf.mxu0
        %v1234 = vadd.f32 %v556, %v1233
        %v1235 = vpop.f32.mrf.mxu0
        %v1236 = vadd.f32 %v556, %v1235
        %v1237 = vpop.f32.mrf.mxu0
        %v1238 = vpop.f32.mrf.mxu0
        %1239 = vdwg.mxu0
        %1240 = vmatprep.subr.bf16.mxu0 0
        %1241 = vmatpush1.bf16.msra.mxu0 0
        %1242 = vmatprep.subr.bf16.mxu0 0
        %1243 = vmatpush1.bf16.msra.mxu0 0
        %1244 = vmatprep.subr.bf16.mxu0 0
        %1245 = vmatpush1.bf16.msra.mxu0 0
        %1246 = vmatprep.subr.bf16.mxu0 0
        %1247 = vmatpush1.bf16.msra.mxu0 0
        %1248 = vmatprep.subr.bf16.mxu0 0
        %1249 = vmatpush1.bf16.msra.mxu0 0
        %1250 = vmatprep.subr.bf16.mxu0 %v924
        %1251 = vmatpush1.bf16.msra.mxu0 %v921
        %1252 = vmatprep.subr.bf16.mxu0 %v788
        %1253 = vmatpush1.bf16.msra.mxu0 %v787
        %1254 = vmatprep.subr.bf16.mxu0 %v763
        %1255 = vmatpush1.bf16.msra.mxu0 %v762
        %1256 = vmatprep.subr.bf16.mxu0 0
        %1257 = vmatpush2.bf16.msra.mxu0 0
        %1258 = vmatprep.subr.bf16.mxu0 0
        %1259 = vmatpush2.bf16.msra.mxu0 0
        %1260 = vmatprep.subr.bf16.mxu0 0
        %1261 = vmatpush2.bf16.msra.mxu0 0
        %1262 = vmatprep.subr.bf16.mxu0 0
        %1263 = vmatpush2.bf16.msra.mxu0 0
        %1264 = vmatprep.subr.bf16.mxu0 0
        %1265 = vmatpush2.bf16.msra.mxu0 0
        %1266 = vmatprep.subr.bf16.mxu0 0
        %1267 = vmatpush2.bf16.msra.mxu0 0
        %1268 = vmatprep.subr.bf16.mxu0 0
        %1269 = vmatpush2.bf16.msra.mxu0 0
        %1270 = vmatprep.subr.bf16.mxu0 0
        %1271 = vmatpush2.bf16.msra.mxu0 0
        %1272 = vmatprep.mubr.bf16.mxu0 0
        %1273 = vmatmul.mubr.bf16.gmra.mxu0 %v875
        %v1274 = vpop.f32.mrf.mxu0
        %v1275 = vadd.f32 %v556, %v1274
        %v1276 = vpop.f32.mrf.mxu0
        %v1277 = vadd.f32 %v556, %v1276
        %v1278 = vpop.f32.mrf.mxu0
        %v1279 = vpop.f32.mrf.mxu0
        %1280 = vdwg.mxu0
        %1281 = vmatprep.subr.bf16.mxu0 0
        %1282 = vmatpush1.bf16.msra.mxu0 0
        %1283 = vmatprep.subr.bf16.mxu0 0
        %1284 = vmatpush1.bf16.msra.mxu0 0
        %1285 = vmatprep.subr.bf16.mxu0 0
        %1286 = vmatpush1.bf16.msra.mxu0 0
        %1287 = vmatprep.subr.bf16.mxu0 0
        %1288 = vmatpush1.bf16.msra.mxu0 0
        %1289 = vmatprep.subr.bf16.mxu0 0
        %1290 = vmatpush1.bf16.msra.mxu0 0
        %1291 = vmatprep.subr.bf16.mxu0 %v930
        %1292 = vmatpush1.bf16.msra.mxu0 %v927
        %1293 = vmatprep.subr.bf16.mxu0 %v790
        %1294 = vmatpush1.bf16.msra.mxu0 %v789
        %1295 = vmatprep.subr.bf16.mxu0 %v765
        %1296 = vmatpush1.bf16.msra.mxu0 %v764
        %1297 = vmatprep.subr.bf16.mxu0 0
        %1298 = vmatpush2.bf16.msra.mxu0 0
        %1299 = vmatprep.subr.bf16.mxu0 0
        %1300 = vmatpush2.bf16.msra.mxu0 0
        %1301 = vmatprep.subr.bf16.mxu0 0
        %1302 = vmatpush2.bf16.msra.mxu0 0
        %1303 = vmatprep.subr.bf16.mxu0 0
        %1304 = vmatpush2.bf16.msra.mxu0 0
        %1305 = vmatprep.subr.bf16.mxu0 0
        %1306 = vmatpush2.bf16.msra.mxu0 0
        %1307 = vmatprep.subr.bf16.mxu0 0
        %1308 = vmatpush2.bf16.msra.mxu0 0
        %1309 = vmatprep.subr.bf16.mxu0 0
        %1310 = vmatpush2.bf16.msra.mxu0 0
        %1311 = vmatprep.subr.bf16.mxu0 0
        %1312 = vmatpush2.bf16.msra.mxu0 0
        %1313 = vmatprep.mubr.bf16.mxu0 0
        %1314 = vmatmul.mubr.bf16.gmra.mxu0 %v875
        %v1315 = vpop.f32.mrf.mxu0
        %v1316 = vadd.f32 %v556, %v1315
        %v1317 = vpop.f32.mrf.mxu0
        %v1318 = vadd.f32 %v556, %v1317
        %v1319 = vpop.f32.mrf.mxu0
        %v1320 = vpop.f32.mrf.mxu0
        %1321 = vdwg.mxu0
        %1322 = vmatprep.subr.bf16.mxu0 0
        %1323 = vmatpush1.bf16.msra.mxu0 0
        %1324 = vmatprep.subr.bf16.mxu0 0
        %1325 = vmatpush1.bf16.msra.mxu0 0
        %1326 = vmatprep.subr.bf16.mxu0 0
        %1327 = vmatpush1.bf16.msra.mxu0 0
        %1328 = vmatprep.subr.bf16.mxu0 0
        %1329 = vmatpush1.bf16.msra.mxu0 0
        %1330 = vmatprep.subr.bf16.mxu0 0
        %1331 = vmatpush1.bf16.msra.mxu0 0
        %1332 = vmatprep.subr.bf16.mxu0 %v936
        %1333 = vmatpush1.bf16.msra.mxu0 %v933
        %1334 = vmatprep.subr.bf16.mxu0 %v792
        %1335 = vmatpush1.bf16.msra.mxu0 %v791
        %1336 = vmatprep.subr.bf16.mxu0 %v767
        %1337 = vmatpush1.bf16.msra.mxu0 %v766
        %1338 = vmatprep.subr.bf16.mxu0 0
        %1339 = vmatpush2.bf16.msra.mxu0 0
        %1340 = vmatprep.subr.bf16.mxu0 0
        %1341 = vmatpush2.bf16.msra.mxu0 0
        %1342 = vmatprep.subr.bf16.mxu0 0
        %1343 = vmatpush2.bf16.msra.mxu0 0
        %1344 = vmatprep.subr.bf16.mxu0 0
        %1345 = vmatpush2.bf16.msra.mxu0 0
        %1346 = vmatprep.subr.bf16.mxu0 0
        %1347 = vmatpush2.bf16.msra.mxu0 0
        %1348 = vmatprep.subr.bf16.mxu0 0
        %1349 = vmatpush2.bf16.msra.mxu0 0
        %1350 = vmatprep.subr.bf16.mxu0 0
        %1351 = vmatpush2.bf16.msra.mxu0 0
        %1352 = vmatprep.subr.bf16.mxu0 0
        %1353 = vmatpush2.bf16.msra.mxu0 0
        %1354 = vmatprep.mubr.bf16.mxu0 0
        %1355 = vmatmul.mubr.bf16.gmra.mxu0 %v875
        %v1356 = vpop.f32.mrf.mxu0
        %v1357 = vadd.f32 %v556, %v1356
        %v1358 = vpop.f32.mrf.mxu0
        %v1359 = vadd.f32 %v556, %v1358
        %v1360 = vpop.f32.mrf.mxu0
        %v1361 = vpop.f32.mrf.mxu0
        %1362 = vdwg.mxu0
        %1363 = vmatprep.subr.bf16.mxu0 0
        %1364 = vmatpush1.bf16.msra.mxu0 0
        %1365 = vmatprep.subr.bf16.mxu0 0
        %1366 = vmatpush1.bf16.msra.mxu0 0
        %1367 = vmatprep.subr.bf16.mxu0 0
        %1368 = vmatpush1.bf16.msra.mxu0 0
        %1369 = vmatprep.subr.bf16.mxu0 0
        %1370 = vmatpush1.bf16.msra.mxu0 0
        %1371 = vmatprep.subr.bf16.mxu0 0
        %1372 = vmatpush1.bf16.msra.mxu0 0
        %1373 = vmatprep.subr.bf16.mxu0 %v942
        %1374 = vmatpush1.bf16.msra.mxu0 %v939
        %1375 = vmatprep.subr.bf16.mxu0 %v794
        %1376 = vmatpush1.bf16.msra.mxu0 %v793
        %1377 = vmatprep.subr.bf16.mxu0 %v769
        %1378 = vmatpush1.bf16.msra.mxu0 %v768
        %1379 = vmatprep.subr.bf16.mxu0 0
        %1380 = vmatpush2.bf16.msra.mxu0 0
        %1381 = vmatprep.subr.bf16.mxu0 0
        %1382 = vmatpush2.bf16.msra.mxu0 0
        %1383 = vmatprep.subr.bf16.mxu0 0
        %1384 = vmatpush2.bf16.msra.mxu0 0
        %1385 = vmatprep.subr.bf16.mxu0 0
        %1386 = vmatpush2.bf16.msra.mxu0 0
        %1387 = vmatprep.subr.bf16.mxu0 0
        %1388 = vmatpush2.bf16.msra.mxu0 0
        %1389 = vmatprep.subr.bf16.mxu0 0
        %1390 = vmatpush2.bf16.msra.mxu0 0
        %1391 = vmatprep.subr.bf16.mxu0 0
        %1392 = vmatpush2.bf16.msra.mxu0 0
        %1393 = vmatprep.subr.bf16.mxu0 0
        %1394 = vmatpush2.bf16.msra.mxu0 0
        %1395 = vmatprep.mubr.bf16.mxu0 0
        %1396 = vmatmul.mubr.bf16.gmra.mxu0 %v875
        %v1397 = vpop.f32.mrf.mxu0
        %v1398 = vadd.f32 %v556, %v1397
        %v1399 = vpop.f32.mrf.mxu0
        %v1400 = vadd.f32 %v556, %v1399
        %v1401 = vpop.f32.mrf.mxu0
        %v1402 = vpop.f32.mrf.mxu0
        %1403 = vdwg.mxu0
        %1404 = vmatprep.subr.bf16.mxu0 0
        %1405 = vmatpush1.bf16.msra.mxu0 0
        %1406 = vmatprep.subr.bf16.mxu0 0
        %1407 = vmatpush1.bf16.msra.mxu0 0
        %1408 = vmatprep.subr.bf16.mxu0 0
        %1409 = vmatpush1.bf16.msra.mxu0 0
        %1410 = vmatprep.subr.bf16.mxu0 0
        %1411 = vmatpush1.bf16.msra.mxu0 0
        %1412 = vmatprep.subr.bf16.mxu0 0
        %1413 = vmatpush1.bf16.msra.mxu0 0
        %1414 = vmatprep.subr.bf16.mxu0 %v948
        %1415 = vmatpush1.bf16.msra.mxu0 %v945
        %1416 = vmatprep.subr.bf16.mxu0 %v796
        %1417 = vmatpush1.bf16.msra.mxu0 %v795
        %1418 = vmatprep.subr.bf16.mxu0 %v771
        %1419 = vmatpush1.bf16.msra.mxu0 %v770
        %1420 = vmatprep.subr.bf16.mxu0 0
        %1421 = vmatpush2.bf16.msra.mxu0 0
        %1422 = vmatprep.subr.bf16.mxu0 0
        %1423 = vmatpush2.bf16.msra.mxu0 0
        %1424 = vmatprep.subr.bf16.mxu0 0
        %1425 = vmatpush2.bf16.msra.mxu0 0
        %1426 = vmatprep.subr.bf16.mxu0 0
        %1427 = vmatpush2.bf16.msra.mxu0 0
        %1428 = vmatprep.subr.bf16.mxu0 0
        %1429 = vmatpush2.bf16.msra.mxu0 0
        %1430 = vmatprep.subr.bf16.mxu0 0
        %1431 = vmatpush2.bf16.msra.mxu0 0
        %1432 = vmatprep.subr.bf16.mxu0 0
        %1433 = vmatpush2.bf16.msra.mxu0 0
        %1434 = vmatprep.subr.bf16.mxu0 0
        %1435 = vmatpush2.bf16.msra.mxu0 0
        %1436 = vmatprep.mubr.bf16.mxu0 0
        %1437 = vmatmul.mubr.bf16.gmra.mxu0 %v875
        %v1438 = vpop.f32.mrf.mxu0
        %v1439 = vadd.f32 %v556, %v1438
        %v1440 = vpop.f32.mrf.mxu0
        %v1441 = vadd.f32 %v556, %v1440
        %v1442 = vpop.f32.mrf.mxu0
        %v1443 = vpop.f32.mrf.mxu0
        %1444 = vdwg.mxu0
        %1445 = vmatprep.subr.bf16.mxu0 0
        %1446 = vmatpush1.bf16.msra.mxu0 0
        %1447 = vmatprep.subr.bf16.mxu0 0
        %1448 = vmatpush1.bf16.msra.mxu0 0
        %1449 = vmatprep.subr.bf16.mxu0 0
        %1450 = vmatpush1.bf16.msra.mxu0 0
        %1451 = vmatprep.subr.bf16.mxu0 0
        %1452 = vmatpush1.bf16.msra.mxu0 0
        %1453 = vmatprep.subr.bf16.mxu0 0
        %1454 = vmatpush1.bf16.msra.mxu0 0
        %1455 = vmatprep.subr.bf16.mxu0 0
        %1456 = vmatpush1.bf16.msra.mxu0 %v951
        %1457 = vmatprep.subr.bf16.mxu0 0
        %1458 = vmatpush1.bf16.msra.mxu0 %v797
        %1459 = vmatprep.subr.bf16.mxu0 0
        %1460 = vmatpush1.bf16.msra.mxu0 %v772
        %1461 = vmatprep.subr.bf16.mxu0 0
        %1462 = vmatpush2.bf16.msra.mxu0 0
        %1463 = vmatprep.subr.bf16.mxu0 0
        %1464 = vmatpush2.bf16.msra.mxu0 0
        %1465 = vmatprep.subr.bf16.mxu0 0
        %1466 = vmatpush2.bf16.msra.mxu0 0
        %1467 = vmatprep.subr.bf16.mxu0 0
        %1468 = vmatpush2.bf16.msra.mxu0 0
        %1469 = vmatprep.subr.bf16.mxu0 0
        %1470 = vmatpush2.bf16.msra.mxu0 0
        %1471 = vmatprep.subr.bf16.mxu0 0
        %1472 = vmatpush2.bf16.msra.mxu0 0
        %1473 = vmatprep.subr.bf16.mxu0 0
        %1474 = vmatpush2.bf16.msra.mxu0 0
        %1475 = vmatprep.subr.bf16.mxu0 0
        %1476 = vmatpush2.bf16.msra.mxu0 0
        %1477 = vmatprep.mubr.bf16.mxu0 0
        %1478 = vmatmul.mubr.bf16.gmra.mxu0 %v875
        %v1479 = vpop.f32.mrf.mxu0
        %v1480 = vadd.f32 %v556, %v1479
        %v1481 = vpop.f32.mrf.mxu0
        %v1482 = vpop.f32.mrf.mxu0
        %v1483 = vpop.f32.mrf.mxu0
        %1484 = vdwg.mxu0
        %v1485 = vxor.u32 %v988, 2147483648
        %v1486 = vxor.u32 %v990, 2147483648
        %v1487 = vxor.u32 %v1029, 2147483648
        %v1488 = vxor.u32 %v1031, 2147483648
        %v1489 = vxor.u32 %v1070, 2147483648
        %v1490 = vxor.u32 %v1072, 2147483648
        %v1491 = vxor.u32 %v1111, 2147483648
        %v1492 = vxor.u32 %v1113, 2147483648
        %v1493 = vxor.u32 %v1152, 2147483648
        %v1494 = vxor.u32 %v1154, 2147483648
        %v1495 = vxor.u32 %v1193, 2147483648
        %v1496 = vxor.u32 %v1195, 2147483648
        %v1497 = vxor.u32 %v1234, 2147483648
        %v1498 = vxor.u32 %v1236, 2147483648
        %v1499 = vxor.u32 %v1275, 2147483648
        %v1500 = vxor.u32 %v1277, 2147483648
        %v1501 = vxor.u32 %v1316, 2147483648
        %v1502 = vxor.u32 %v1318, 2147483648
        %v1503 = vxor.u32 %v1357, 2147483648
        %v1504 = vxor.u32 %v1359, 2147483648
        %v1505 = vxor.u32 %v1398, 2147483648
        %v1506 = vxor.u32 %v1400, 2147483648
        %v1507 = vxor.u32 %v1439, 2147483648
        %v1508 = vxor.u32 %v1441, 2147483648
        %v1509 = vxor.u32 %v1480, 2147483648
        %v1510 = vmul.f32 %v1485, 1.442695
        %v1511 = vpow.pop %v1510
        %v1512 = vmul.f32 %v1486, 1.442695
        %v1513 = vpow.pop %v1512
        %v1514 = vmul.f32 %v1487, 1.442695
        %v1515 = vpow.pop %v1514
        %v1516 = vmul.f32 %v1488, 1.442695
        %v1517 = vpow.pop %v1516
        %v1518 = vmul.f32 %v1489, 1.442695
        %v1519 = vpow.pop %v1518
        %v1520 = vmul.f32 %v1490, 1.442695
        %v1521 = vpow.pop %v1520
        %v1522 = vmul.f32 %v1491, 1.442695
        %v1523 = vpow.pop %v1522
        %v1524 = vmul.f32 %v1492, 1.442695
        %v1525 = vpow.pop %v1524
        %v1526 = vmul.f32 %v1493, 1.442695
        %v1527 = vpow.pop %v1526
        %v1528 = vmul.f32 %v1494, 1.442695
        %v1529 = vpow.pop %v1528
        %v1530 = vmul.f32 %v1495, 1.442695
        %v1531 = vpow.pop %v1530
        %v1532 = vmul.f32 %v1496, 1.442695
        %v1533 = vpow.pop %v1532
        %v1534 = vmul.f32 %v1497, 1.442695
        %v1535 = vpow.pop %v1534
        %v1536 = vmul.f32 %v1498, 1.442695
        %v1537 = vpow.pop %v1536
        %v1538 = vmul.f32 %v1499, 1.442695
        %v1539 = vpow.pop %v1538
        %v1540 = vmul.f32 %v1500, 1.442695
        %v1541 = vpow.pop %v1540
        %v1542 = vmul.f32 %v1501, 1.442695
        %v1543 = vpow.pop %v1542
        %v1544 = vmul.f32 %v1502, 1.442695
        %v1545 = vpow.pop %v1544
        %v1546 = vmul.f32 %v1503, 1.442695
        %v1547 = vpow.pop %v1546
        %v1548 = vmul.f32 %v1504, 1.442695
        %v1549 = vpow.pop %v1548
        %v1550 = vmul.f32 %v1505, 1.442695
        %v1551 = vpow.pop %v1550
        %v1552 = vmul.f32 %v1506, 1.442695
        %v1553 = vpow.pop %v1552
        %v1554 = vmul.f32 %v1507, 1.442695
        %v1555 = vpow.pop %v1554
        %v1556 = vmul.f32 %v1508, 1.442695
        %v1557 = vpow.pop %v1556
        %v1558 = vmul.f32 %v1509, 1.442695
        %v1559 = vpow.pop %v1558
        %v1560 = vadd.f32 %v1511, 1.0
        %v1561 = vadd.f32 %v1513, 1.0
        %v1562 = vadd.f32 %v1515, 1.0
        %v1563 = vadd.f32 %v1517, 1.0
        %v1564 = vadd.f32 %v1519, 1.0
        %v1565 = vadd.f32 %v1521, 1.0
        %v1566 = vadd.f32 %v1523, 1.0
        %v1567 = vadd.f32 %v1525, 1.0
        %v1568 = vadd.f32 %v1527, 1.0
        %v1569 = vadd.f32 %v1529, 1.0
        %v1570 = vadd.f32 %v1531, 1.0
        %v1571 = vadd.f32 %v1533, 1.0
        %v1572 = vadd.f32 %v1535, 1.0
        %v1573 = vadd.f32 %v1537, 1.0
        %v1574 = vadd.f32 %v1539, 1.0
        %v1575 = vadd.f32 %v1541, 1.0
        %v1576 = vadd.f32 %v1543, 1.0
        %v1577 = vadd.f32 %v1545, 1.0
        %v1578 = vadd.f32 %v1547, 1.0
        %v1579 = vadd.f32 %v1549, 1.0
        %v1580 = vadd.f32 %v1551, 1.0
        %v1581 = vadd.f32 %v1553, 1.0
        %v1582 = vadd.f32 %v1555, 1.0
        %v1583 = vadd.f32 %v1557, 1.0
        %v1584 = vadd.f32 %v1559, 1.0
        %v1585 = vrcp.pop %v1560
        %v1586 = vmul.f32 1.0, %v1585
        %v1587 = vrcp.pop %v1561
        %v1588 = vmul.f32 1.0, %v1587
        %v1589 = vrcp.pop %v1562
        %v1590 = vmul.f32 1.0, %v1589
        %v1591 = vrcp.pop %v1563
        %v1592 = vmul.f32 1.0, %v1591
        %v1593 = vrcp.pop %v1564
        %v1594 = vmul.f32 1.0, %v1593
        %v1595 = vrcp.pop %v1565
        %v1596 = vmul.f32 1.0, %v1595
        %v1597 = vrcp.pop %v1566
        %v1598 = vmul.f32 1.0, %v1597
        %v1599 = vrcp.pop %v1567
        %v1600 = vmul.f32 1.0, %v1599
        %v1601 = vrcp.pop %v1568
        %v1602 = vmul.f32 1.0, %v1601
        %v1603 = vrcp.pop %v1569
        %v1604 = vmul.f32 1.0, %v1603
        %v1605 = vrcp.pop %v1570
        %v1606 = vmul.f32 1.0, %v1605
        %v1607 = vrcp.pop %v1571
        %v1608 = vmul.f32 1.0, %v1607
        %v1609 = vrcp.pop %v1572
        %v1610 = vmul.f32 1.0, %v1609
        %v1611 = vrcp.pop %v1573
        %v1612 = vmul.f32 1.0, %v1611
        %v1613 = vrcp.pop %v1574
        %v1614 = vmul.f32 1.0, %v1613
        %v1615 = vrcp.pop %v1575
        %v1616 = vmul.f32 1.0, %v1615
        %v1617 = vrcp.pop %v1576
        %v1618 = vmul.f32 1.0, %v1617
        %v1619 = vrcp.pop %v1577
        %v1620 = vmul.f32 1.0, %v1619
        %v1621 = vrcp.pop %v1578
        %v1622 = vmul.f32 1.0, %v1621
        %v1623 = vrcp.pop %v1579
        %v1624 = vmul.f32 1.0, %v1623
        %v1625 = vrcp.pop %v1580
        %v1626 = vmul.f32 1.0, %v1625
        %v1627 = vrcp.pop %v1581
        %v1628 = vmul.f32 1.0, %v1627
        %v1629 = vrcp.pop %v1582
        %v1630 = vmul.f32 1.0, %v1629
        %v1631 = vrcp.pop %v1583
        %v1632 = vmul.f32 1.0, %v1631
        %v1633 = vrcp.pop %v1584
        %v1634 = vmul.f32 1.0, %v1633
        %v1635 = vld [vmem:[%s2] sm:$0xff]
        %v1636 = vld [vmem:[%s2 + $0x8] sm:$0xff]
        %v1637 = vld [vmem:[%s2 + $0x10] sm:$0xff]
        %v1638 = vld [vmem:[%s2 + $0x18] sm:$0xff]
        %v1639 = vld [vmem:[%s2 + $0x20] sm:$0xff]
        %v1640 = vld [vmem:[%s3] sm:$0xff]
        %v1641 = vld [vmem:[%s3 + $0x8] sm:$0xff]
        %v1642 = vld [vmem:[%s3 + $0x10] sm:$0xff]
        %v1643 = vld [vmem:[%s3 + $0x18] sm:$0xff]
        %v1644 = vld [vmem:[%s3 + $0x20] sm:$0x1]
        %v1645 = vld [vmem:[%s3 + $0x28] sm:$0x1]
        %v1646 = vld [vmem:[%s3 + $0x30] sm:$0x1]
        %v1647 = vld [vmem:[%s3 + $0x38] sm:$0x1]
        %v1648 = vld [vmem:[%s6] sm:$0xff]
        %v1649 = vld [vmem:[%s7] sm:$0xff]
        %v1650 = vld [vmem:[%s479] sm:$0x77]
        %v1651 = vld [vmem:[%s479 + $0x8] sm:$0x77]
        %v1652 = vld [vmem:[%s479 + $0x10] sm:$0x77]
        %v1653 = vld [vmem:[%s479 + $0x18] sm:$0x77]
        %v1654 = vld [vmem:[%s479 + $0x20] sm:$0x77]
        %v1655 = vld [vmem:[%s479 + $0x28] sm:$0x77]
        %v1656 = vld [vmem:[%s479 + $0x30] sm:$0x77]
        %v1657 = vld [vmem:[%s479 + $0x38] sm:$0x77]
        %v1658 = vld [vmem:[%s479 + $0x40] sm:$0x77]
        %v1659 = vld [vmem:[%s479 + $0x48] sm:$0x77]
        %v1660 = vmul.f32 %v1586, %v1635
        %v1661 = vmul.f32 %v1588, %v1636
        %v1662 = vmul.f32 %v1590, %v1637
        %v1663 = vmul.f32 %v1592, %v1638
        %v1664 = vmul.f32 %v1594, %v1639
        %v1665 = vlaneseq
        %v1666 = vshrl.u32 %v1665, 7
        %v1667 = vsub.s32 0, %v1666
        %v1668 = vrot.slane %v1640, %v1667
        %v1669 = vlaneseq
        %v1670 = vshrl.u32 %v1669, 7
        %v1671 = vsub.s32 0, %v1670
        %v1672 = vrot.slane %v1641, %v1671
        %v1673 = vlaneseq
        %v1674 = vshrl.u32 %v1673, 7
        %v1675 = vsub.s32 0, %v1674
        %v1676 = vrot.slane %v1642, %v1675
        %v1677 = vlaneseq
        %v1678 = vshrl.u32 %v1677, 7
        %v1679 = vsub.s32 0, %v1678
        %v1680 = vrot.slane %v1643, %v1679
        %1685 = vrot.lane.b32.xlu0 %v1668, 47
        %v1686 = vpop.permute.xlu0 %1685
        %1687 = vrot.lane.b32.xlu0 %v1672, 47
        %v1688 = vpop.permute.xlu0 %1687
        %1689 = vrot.lane.b32.xlu0 %v1676, 47
        %v1690 = vpop.permute.xlu0 %1689
        %1691 = vrot.lane.b32.xlu0 %v1680, 47
        %v1692 = vpop.permute.xlu0 %1691
        %vm1693 = vcmask 384000
        %v1694 = vsel %vm1693, %v1686, %v1688
        %v1695 = vsel %vm1693, %v1688, %v1690
        %v1696 = vsel %vm1693, %v1690, %v1692
        %v1702 = vmul.f32 %v1660, %v1686
        %v1703 = vmul.f32 %v1661, %v1694
        %v1704 = vmul.f32 %v1662, %v1695
        %v1705 = vmul.f32 %v1663, %v1696
        %v1706 = vmul.f32 %v1664, %v1692
        %v1707 = vlaneseq
        %v1708 = vshrl.u32 %v1707, 7
        %v1709 = vsub.s32 1, %v1708
        %v1710 = vrot.slane %v1640, %v1709
        %v1711 = vlaneseq
        %v1712 = vshrl.u32 %v1711, 7
        %v1713 = vsub.s32 1, %v1712
        %v1714 = vrot.slane %v1641, %v1713
        %v1715 = vlaneseq
        %v1716 = vshrl.u32 %v1715, 7
        %v1717 = vsub.s32 1, %v1716
        %v1718 = vrot.slane %v1642, %v1717
        %v1719 = vlaneseq
        %v1720 = vshrl.u32 %v1719, 7
        %v1721 = vsub.s32 1, %v1720
        %v1722 = vrot.slane %v1643, %v1721
        %1727 = vrot.lane.b32.xlu0 %v1710, 48
        %v1728 = vpop.permute.xlu0 %1727
        %1729 = vrot.lane.b32.xlu0 %v1714, 48
        %v1730 = vpop.permute.xlu0 %1729
        %1731 = vrot.lane.b32.xlu0 %v1718, 48
        %v1732 = vpop.permute.xlu0 %1731
        %1733 = vrot.lane.b32.xlu0 %v1722, 48
        %v1734 = vpop.permute.xlu0 %1733
        %vm1735 = vcmask 392192
        %v1736 = vsel %vm1735, %v1728, %v1730
        %v1737 = vsel %vm1735, %v1730, %v1732
        %v1738 = vsel %vm1735, %v1732, %v1734
        %v1744 = vmul.f32 %v1660, %v1728
        %v1745 = vmul.f32 %v1661, %v1736
        %v1746 = vmul.f32 %v1662, %v1737
        %v1747 = vmul.f32 %v1663, %v1738
        %v1748 = vmul.f32 %v1664, %v1734
        %v1749 = vlaneseq
        %v1750 = vshrl.u32 %v1749, 7
        %v1751 = vsub.s32 2, %v1750
        %v1752 = vrot.slane %v1640, %v1751
        %v1753 = vlaneseq
        %v1754 = vshrl.u32 %v1753, 7
        %v1755 = vsub.s32 2, %v1754
        %v1756 = vrot.slane %v1641, %v1755
        %v1757 = vlaneseq
        %v1758 = vshrl.u32 %v1757, 7
        %v1759 = vsub.s32 2, %v1758
        %v1760 = vrot.slane %v1642, %v1759
        %v1761 = vlaneseq
        %v1762 = vshrl.u32 %v1761, 7
        %v1763 = vsub.s32 2, %v1762
        %v1764 = vrot.slane %v1643, %v1763
        %1769 = vrot.lane.b32.xlu0 %v1752, 49
        %v1770 = vpop.permute.xlu0 %1769
        %1771 = vrot.lane.b32.xlu0 %v1756, 49
        %v1772 = vpop.permute.xlu0 %1771
        %1773 = vrot.lane.b32.xlu0 %v1760, 49
        %v1774 = vpop.permute.xlu0 %1773
        %1775 = vrot.lane.b32.xlu0 %v1764, 49
        %v1776 = vpop.permute.xlu0 %1775
        %vm1777 = vcmask 400384
        %v1778 = vsel %vm1777, %v1770, %v1772
        %v1779 = vsel %vm1777, %v1772, %v1774
        %v1780 = vsel %vm1777, %v1774, %v1776
        %v1786 = vmul.f32 %v1660, %v1770
        %v1787 = vmul.f32 %v1661, %v1778
        %v1788 = vmul.f32 %v1662, %v1779
        %v1789 = vmul.f32 %v1663, %v1780
        %v1790 = vmul.f32 %v1664, %v1776
        %v1791 = vlaneseq
        %v1792 = vshrl.u32 %v1791, 7
        %v1793 = vsub.s32 3, %v1792
        %v1794 = vrot.slane %v1640, %v1793
        %v1795 = vlaneseq
        %v1796 = vshrl.u32 %v1795, 7
        %v1797 = vsub.s32 3, %v1796
        %v1798 = vrot.slane %v1641, %v1797
        %v1799 = vlaneseq
        %v1800 = vshrl.u32 %v1799, 7
        %v1801 = vsub.s32 3, %v1800
        %v1802 = vrot.slane %v1642, %v1801
        %v1803 = vlaneseq
        %v1804 = vshrl.u32 %v1803, 7
        %v1805 = vsub.s32 3, %v1804
        %v1806 = vrot.slane %v1643, %v1805
        %1811 = vrot.lane.b32.xlu0 %v1794, 63
        %v1812 = vpop.permute.xlu0 %1811
        %1813 = vrot.lane.b32.xlu0 %v1798, 63
        %v1814 = vpop.permute.xlu0 %1813
        %1815 = vrot.lane.b32.xlu0 %v1802, 63
        %v1816 = vpop.permute.xlu0 %1815
        %1817 = vrot.lane.b32.xlu0 %v1806, 63
        %v1818 = vpop.permute.xlu0 %1817
        %vm1819 = vcmask 515072
        %v1820 = vsel %vm1819, %v1812, %v1814
        %v1821 = vsel %vm1819, %v1814, %v1816
        %v1822 = vsel %vm1819, %v1816, %v1818
        %v1828 = vmul.f32 %v1660, %v1812
        %v1829 = vmul.f32 %v1661, %v1820
        %v1830 = vmul.f32 %v1662, %v1821
        %v1831 = vmul.f32 %v1663, %v1822
        %v1832 = vmul.f32 %v1664, %v1818
        %v1833 = vlaneseq
        %v1834 = vshrl.u32 %v1833, 7
        %v1835 = vsub.s32 4, %v1834
        %v1836 = vrot.slane %v1640, %v1835
        %v1837 = vlaneseq
        %v1838 = vshrl.u32 %v1837, 7
        %v1839 = vsub.s32 4, %v1838
        %v1840 = vrot.slane %v1641, %v1839
        %v1841 = vlaneseq
        %v1842 = vshrl.u32 %v1841, 7
        %v1843 = vsub.s32 4, %v1842
        %v1844 = vrot.slane %v1642, %v1843
        %v1845 = vlaneseq
        %v1846 = vshrl.u32 %v1845, 7
        %v1847 = vsub.s32 4, %v1846
        %v1848 = vrot.slane %v1643, %v1847
        %1853 = vrot.lane.b32.xlu0 %v1836, 64
        %v1854 = vpop.permute.xlu0 %1853
        %1855 = vrot.lane.b32.xlu0 %v1840, 64
        %v1856 = vpop.permute.xlu0 %1855
        %1857 = vrot.lane.b32.xlu0 %v1844, 64
        %v1858 = vpop.permute.xlu0 %1857
        %1859 = vrot.lane.b32.xlu0 %v1848, 64
        %v1860 = vpop.permute.xlu0 %1859
        %vm1861 = vcmask 523264
        %v1862 = vsel %vm1861, %v1854, %v1856
        %v1863 = vsel %vm1861, %v1856, %v1858
        %v1864 = vsel %vm1861, %v1858, %v1860
        %v1870 = vmul.f32 %v1660, %v1854
        %v1871 = vmul.f32 %v1661, %v1862
        %v1872 = vmul.f32 %v1662, %v1863
        %v1873 = vmul.f32 %v1663, %v1864
        %v1874 = vmul.f32 %v1664, %v1860
        %v1875 = vlaneseq
        %v1876 = vshrl.u32 %v1875, 7
        %v1877 = vsub.s32 5, %v1876
        %v1878 = vrot.slane %v1640, %v1877
        %v1879 = vlaneseq
        %v1880 = vshrl.u32 %v1879, 7
        %v1881 = vsub.s32 5, %v1880
        %v1882 = vrot.slane %v1641, %v1881
        %v1883 = vlaneseq
        %v1884 = vshrl.u32 %v1883, 7
        %v1885 = vsub.s32 5, %v1884
        %v1886 = vrot.slane %v1642, %v1885
        %v1887 = vlaneseq
        %v1888 = vshrl.u32 %v1887, 7
        %v1889 = vsub.s32 5, %v1888
        %v1890 = vrot.slane %v1643, %v1889
        %1895 = vrot.lane.b32.xlu0 %v1878, 65
        %v1896 = vpop.permute.xlu0 %1895
        %1897 = vrot.lane.b32.xlu0 %v1882, 65
        %v1898 = vpop.permute.xlu0 %1897
        %1899 = vrot.lane.b32.xlu0 %v1886, 65
        %v1900 = vpop.permute.xlu0 %1899
        %1901 = vrot.lane.b32.xlu0 %v1890, 65
        %v1902 = vpop.permute.xlu0 %1901
        %vm1903 = vcmask 531456
        %v1904 = vsel %vm1903, %v1896, %v1898
        %v1905 = vsel %vm1903, %v1898, %v1900
        %v1906 = vsel %vm1903, %v1900, %v1902
        %v1912 = vmul.f32 %v1660, %v1896
        %v1913 = vmul.f32 %v1661, %v1904
        %v1914 = vmul.f32 %v1662, %v1905
        %v1915 = vmul.f32 %v1663, %v1906
        %v1916 = vmul.f32 %v1664, %v1902
        %v1917 = vlaneseq
        %v1918 = vshrl.u32 %v1917, 7
        %v1919 = vsub.s32 6, %v1918
        %v1920 = vrot.slane %v1640, %v1919
        %v1921 = vlaneseq
        %v1922 = vshrl.u32 %v1921, 7
        %v1923 = vsub.s32 6, %v1922
        %v1924 = vrot.slane %v1641, %v1923
        %v1925 = vlaneseq
        %v1926 = vshrl.u32 %v1925, 7
        %v1927 = vsub.s32 6, %v1926
        %v1928 = vrot.slane %v1642, %v1927
        %v1929 = vlaneseq
        %v1930 = vshrl.u32 %v1929, 7
        %v1931 = vsub.s32 6, %v1930
        %v1932 = vrot.slane %v1643, %v1931
        %1937 = vrot.lane.b32.xlu0 %v1920, 79
        %v1938 = vpop.permute.xlu0 %1937
        %1939 = vrot.lane.b32.xlu0 %v1924, 79
        %v1940 = vpop.permute.xlu0 %1939
        %1941 = vrot.lane.b32.xlu0 %v1928, 79
        %v1942 = vpop.permute.xlu0 %1941
        %1943 = vrot.lane.b32.xlu0 %v1932, 79
        %v1944 = vpop.permute.xlu0 %1943
        %vm1945 = vcmask 646144
        %v1946 = vsel %vm1945, %v1938, %v1940
        %v1947 = vsel %vm1945, %v1940, %v1942
        %v1948 = vsel %vm1945, %v1942, %v1944
        %v1954 = vmul.f32 %v1660, %v1938
        %v1955 = vmul.f32 %v1661, %v1946
        %v1956 = vmul.f32 %v1662, %v1947
        %v1957 = vmul.f32 %v1663, %v1948
        %v1958 = vmul.f32 %v1664, %v1944
        %v1959 = vlaneseq
        %v1960 = vshrl.u32 %v1959, 7
        %v1961 = vsub.s32 7, %v1960
        %v1962 = vrot.slane %v1640, %v1961
        %v1963 = vlaneseq
        %v1964 = vshrl.u32 %v1963, 7
        %v1965 = vsub.s32 7, %v1964
        %v1966 = vrot.slane %v1641, %v1965
        %v1967 = vlaneseq
        %v1968 = vshrl.u32 %v1967, 7
        %v1969 = vsub.s32 7, %v1968
        %v1970 = vrot.slane %v1642, %v1969
        %v1971 = vlaneseq
        %v1972 = vshrl.u32 %v1971, 7
        %v1973 = vsub.s32 7, %v1972
        %v1974 = vrot.slane %v1643, %v1973
        %1979 = vrot.lane.b32.xlu0 %v1962, 80
        %v1980 = vpop.permute.xlu0 %1979
        %1981 = vrot.lane.b32.xlu0 %v1966, 80
        %v1982 = vpop.permute.xlu0 %1981
        %1983 = vrot.lane.b32.xlu0 %v1970, 80
        %v1984 = vpop.permute.xlu0 %1983
        %1985 = vrot.lane.b32.xlu0 %v1974, 80
        %v1986 = vpop.permute.xlu0 %1985
        %vm1987 = vcmask 654336
        %v1988 = vsel %vm1987, %v1980, %v1982
        %v1989 = vsel %vm1987, %v1982, %v1984
        %v1990 = vsel %vm1987, %v1984, %v1986
        %v1996 = vmul.f32 %v1660, %v1980
        %v1997 = vmul.f32 %v1661, %v1988
        %v1998 = vmul.f32 %v1662, %v1989
        %v1999 = vmul.f32 %v1663, %v1990
        %v2000 = vmul.f32 %v1664, %v1986
        %v2001 = vlaneseq
        %v2002 = vshrl.u32 %v2001, 7
        %v2003 = vsub.s32 0, %v2002
        %v2004 = vrot.slane %v1644, %v2003
        %v2005 = vlaneseq
        %v2006 = vshrl.u32 %v2005, 7
        %v2007 = vsub.s32 0, %v2006
        %v2008 = vrot.slane %v1645, %v2007
        %v2009 = vlaneseq
        %v2010 = vshrl.u32 %v2009, 7
        %v2011 = vsub.s32 0, %v2010
        %v2012 = vrot.slane %v1646, %v2011
        %v2013 = vlaneseq
        %v2014 = vshrl.u32 %v2013, 7
        %v2015 = vsub.s32 0, %v2014
        %v2016 = vrot.slane %v1647, %v2015
        %2021 = vrot.lane.b32.xlu0 %v2004, 81
        %v2022 = vpop.permute.xlu0 %2021
        %2023 = vrot.lane.b32.xlu0 %v2008, 81
        %v2024 = vpop.permute.xlu0 %2023
        %2025 = vrot.lane.b32.xlu0 %v2012, 81
        %v2026 = vpop.permute.xlu0 %2025
        %2027 = vrot.lane.b32.xlu0 %v2016, 81
        %v2028 = vpop.permute.xlu0 %2027
        %vm2029 = vcmask 662528
        %v2030 = vsel %vm2029, %v2022, %v2024
        %v2031 = vsel %vm2029, %v2024, %v2026
        %v2032 = vsel %vm2029, %v2026, %v2028
        %v2038 = vmul.f32 %v1660, %v2022
        %v2039 = vmul.f32 %v1661, %v2030
        %v2040 = vmul.f32 %v1662, %v2031
        %v2041 = vmul.f32 %v1663, %v2032
        %v2042 = vmul.f32 %v1664, %v2028
        %2048 = vrot.lane.b32.xlu0 %v1744, 127
        %v2049 = vpop.permute.xlu0 %2048
        %2050 = vrot.lane.b32.xlu0 %v1745, 127
        %v2051 = vpop.permute.xlu0 %2050
        %2052 = vrot.lane.b32.xlu0 %v1746, 127
        %v2053 = vpop.permute.xlu0 %2052
        %2054 = vrot.lane.b32.xlu0 %v1747, 127
        %v2055 = vpop.permute.xlu0 %2054
        %2056 = vrot.lane.b32.xlu0 %v1748, 127
        %v2057 = vpop.permute.xlu0 %2056
        %vm2058 = vcmask 1039360
        %v2059 = vsel %vm2058, %v2049, %v2051
        %v2060 = vsel %vm2058, %v2051, %v2053
        %v2061 = vsel %vm2058, %v2053, %v2055
        %v2062 = vsel %vm2058, %v2055, %v2057
        %2068 = vrot.lane.b32.xlu0 %v1786, 126
        %v2069 = vpop.permute.xlu0 %2068
        %2070 = vrot.lane.b32.xlu0 %v1787, 126
        %v2071 = vpop.permute.xlu0 %2070
        %2072 = vrot.lane.b32.xlu0 %v1788, 126
        %v2073 = vpop.permute.xlu0 %2072
        %2074 = vrot.lane.b32.xlu0 %v1789, 126
        %v2075 = vpop.permute.xlu0 %2074
        %2076 = vrot.lane.b32.xlu0 %v1790, 126
        %v2077 = vpop.permute.xlu0 %2076
        %vm2078 = vcmask 1031168
        %v2079 = vsel %vm2078, %v2069, %v2071
        %v2080 = vsel %vm2078, %v2071, %v2073
        %v2081 = vsel %vm2078, %v2073, %v2075
        %v2082 = vsel %vm2078, %v2075, %v2077
        %2088 = vrot.lane.b32.xlu0 %v1828, 112
        %v2089 = vpop.permute.xlu0 %2088
        %2090 = vrot.lane.b32.xlu0 %v1829, 112
        %v2091 = vpop.permute.xlu0 %2090
        %2092 = vrot.lane.b32.xlu0 %v1830, 112
        %v2093 = vpop.permute.xlu0 %2092
        %2094 = vrot.lane.b32.xlu0 %v1831, 112
        %v2095 = vpop.permute.xlu0 %2094
        %2096 = vrot.lane.b32.xlu0 %v1832, 112
        %v2097 = vpop.permute.xlu0 %2096
        %vm2098 = vcmask 916480
        %v2099 = vsel %vm2098, %v2089, %v2091
        %v2100 = vsel %vm2098, %v2091, %v2093
        %v2101 = vsel %vm2098, %v2093, %v2095
        %v2102 = vsel %vm2098, %v2095, %v2097
        %2108 = vrot.lane.b32.xlu0 %v1870, 111
        %v2109 = vpop.permute.xlu0 %2108
        %2110 = vrot.lane.b32.xlu0 %v1871, 111
        %v2111 = vpop.permute.xlu0 %2110
        %2112 = vrot.lane.b32.xlu0 %v1872, 111
        %v2113 = vpop.permute.xlu0 %2112
        %2114 = vrot.lane.b32.xlu0 %v1873, 111
        %v2115 = vpop.permute.xlu0 %2114
        %2116 = vrot.lane.b32.xlu0 %v1874, 111
        %v2117 = vpop.permute.xlu0 %2116
        %vm2118 = vcmask 908288
        %v2119 = vsel %vm2118, %v2109, %v2111
        %v2120 = vsel %vm2118, %v2111, %v2113
        %v2121 = vsel %vm2118, %v2113, %v2115
        %v2122 = vsel %vm2118, %v2115, %v2117
        %2128 = vrot.lane.b32.xlu0 %v1912, 110
        %v2129 = vpop.permute.xlu0 %2128
        %2130 = vrot.lane.b32.xlu0 %v1913, 110
        %v2131 = vpop.permute.xlu0 %2130
        %2132 = vrot.lane.b32.xlu0 %v1914, 110
        %v2133 = vpop.permute.xlu0 %2132
        %2134 = vrot.lane.b32.xlu0 %v1915, 110
        %v2135 = vpop.permute.xlu0 %2134
        %2136 = vrot.lane.b32.xlu0 %v1916, 110
        %v2137 = vpop.permute.xlu0 %2136
        %vm2138 = vcmask 900096
        %v2139 = vsel %vm2138, %v2129, %v2131
        %v2140 = vsel %vm2138, %v2131, %v2133
        %v2141 = vsel %vm2138, %v2133, %v2135
        %v2142 = vsel %vm2138, %v2135, %v2137
        %2148 = vrot.lane.b32.xlu0 %v1954, 96
        %v2149 = vpop.permute.xlu0 %2148
        %2150 = vrot.lane.b32.xlu0 %v1955, 96
        %v2151 = vpop.permute.xlu0 %2150
        %2152 = vrot.lane.b32.xlu0 %v1956, 96
        %v2153 = vpop.permute.xlu0 %2152
        %2154 = vrot.lane.b32.xlu0 %v1957, 96
        %v2155 = vpop.permute.xlu0 %2154
        %2156 = vrot.lane.b32.xlu0 %v1958, 96
        %v2157 = vpop.permute.xlu0 %2156
        %vm2158 = vcmask 785408
        %v2159 = vsel %vm2158, %v2149, %v2151
        %v2160 = vsel %vm2158, %v2151, %v2153
        %v2161 = vsel %vm2158, %v2153, %v2155
        %v2162 = vsel %vm2158, %v2155, %v2157
        %2168 = vrot.lane.b32.xlu0 %v1996, 95
        %v2169 = vpop.permute.xlu0 %2168
        %2170 = vrot.lane.b32.xlu0 %v1997, 95
        %v2171 = vpop.permute.xlu0 %2170
        %2172 = vrot.lane.b32.xlu0 %v1998, 95
        %v2173 = vpop.permute.xlu0 %2172
        %2174 = vrot.lane.b32.xlu0 %v1999, 95
        %v2175 = vpop.permute.xlu0 %2174
        %2176 = vrot.lane.b32.xlu0 %v2000, 95
        %v2177 = vpop.permute.xlu0 %2176
        %vm2178 = vcmask 777216
        %v2179 = vsel %vm2178, %v2169, %v2171
        %v2180 = vsel %vm2178, %v2171, %v2173
        %v2181 = vsel %vm2178, %v2173, %v2175
        %v2182 = vsel %vm2178, %v2175, %v2177
        %2188 = vrot.lane.b32.xlu0 %v2038, 94
        %v2189 = vpop.permute.xlu0 %2188
        %2190 = vrot.lane.b32.xlu0 %v2039, 94
        %v2191 = vpop.permute.xlu0 %2190
        %2192 = vrot.lane.b32.xlu0 %v2040, 94
        %v2193 = vpop.permute.xlu0 %2192
        %2194 = vrot.lane.b32.xlu0 %v2041, 94
        %v2195 = vpop.permute.xlu0 %2194
        %2196 = vrot.lane.b32.xlu0 %v2042, 94
        %v2197 = vpop.permute.xlu0 %2196
        %vm2198 = vcmask 769024
        %v2199 = vsel %vm2198, %v2189, %v2191
        %v2200 = vsel %vm2198, %v2191, %v2193
        %v2201 = vsel %vm2198, %v2193, %v2195
        %v2202 = vsel %vm2198, %v2195, %v2197
        %2204 = vset.pattern.permute.xlu0 0
        %2205 = vperm.xlu0 %2204, %v1649
        %v2206 = vpop.permute.xlu0 %2205
        %2213 = vrot.lane.b32.xlu0 %v1702, 81
        %v2214 = vpop.permute.xlu0 %2213
        %2215 = vrot.lane.b32.xlu0 %v1703, 81
        %v2216 = vpop.permute.xlu0 %2215
        %2217 = vrot.lane.b32.xlu0 %v1704, 81
        %v2218 = vpop.permute.xlu0 %2217
        %2219 = vrot.lane.b32.xlu0 %v1705, 81
        %v2220 = vpop.permute.xlu0 %2219
        %2221 = vrot.lane.b32.xlu0 %v1706, 81
        %v2222 = vpop.permute.xlu0 %2221
        %2223 = vrot.lane.b32.xlu0 %v2059, 81
        %v2224 = vpop.permute.xlu0 %2223
        %2225 = vrot.lane.b32.xlu0 %v2060, 81
        %v2226 = vpop.permute.xlu0 %2225
        %2227 = vrot.lane.b32.xlu0 %v2061, 81
        %v2228 = vpop.permute.xlu0 %2227
        %2229 = vrot.lane.b32.xlu0 %v2062, 81
        %v2230 = vpop.permute.xlu0 %2229
        %2231 = vrot.lane.b32.xlu0 %v2057, 81
        %v2232 = vpop.permute.xlu0 %2231
        %2233 = vrot.lane.b32.xlu0 %v2079, 81
        %v2234 = vpop.permute.xlu0 %2233
        %2235 = vrot.lane.b32.xlu0 %v2080, 81
        %v2236 = vpop.permute.xlu0 %2235
        %2237 = vrot.lane.b32.xlu0 %v2081, 81
        %v2238 = vpop.permute.xlu0 %2237
        %2239 = vrot.lane.b32.xlu0 %v2082, 81
        %v2240 = vpop.permute.xlu0 %2239
        %2241 = vrot.lane.b32.xlu0 %v2077, 81
        %v2242 = vpop.permute.xlu0 %2241
        %2243 = vrot.lane.b32.xlu0 %v2099, 81
        %v2244 = vpop.permute.xlu0 %2243
        %2245 = vrot.lane.b32.xlu0 %v2100, 81
        %v2246 = vpop.permute.xlu0 %2245
        %2247 = vrot.lane.b32.xlu0 %v2101, 81
        %v2248 = vpop.permute.xlu0 %2247
        %2249 = vrot.lane.b32.xlu0 %v2102, 81
        %v2250 = vpop.permute.xlu0 %2249
        %2251 = vrot.lane.b32.xlu0 %v2097, 81
        %v2252 = vpop.permute.xlu0 %2251
        %2253 = vrot.lane.b32.xlu0 %v2119, 81
        %v2254 = vpop.permute.xlu0 %2253
        %2255 = vrot.lane.b32.xlu0 %v2120, 81
        %v2256 = vpop.permute.xlu0 %2255
        %2257 = vrot.lane.b32.xlu0 %v2121, 81
        %v2258 = vpop.permute.xlu0 %2257
        %2259 = vrot.lane.b32.xlu0 %v2122, 81
        %v2260 = vpop.permute.xlu0 %2259
        %2261 = vrot.lane.b32.xlu0 %v2117, 81
        %v2262 = vpop.permute.xlu0 %2261
        %2263 = vrot.lane.b32.xlu0 %v2139, 81
        %v2264 = vpop.permute.xlu0 %2263
        %2265 = vrot.lane.b32.xlu0 %v2140, 81
        %v2266 = vpop.permute.xlu0 %2265
        %2267 = vrot.lane.b32.xlu0 %v2141, 81
        %v2268 = vpop.permute.xlu0 %2267
        %2269 = vrot.lane.b32.xlu0 %v2142, 81
        %v2270 = vpop.permute.xlu0 %2269
        %2271 = vrot.lane.b32.xlu0 %v2137, 81
        %v2272 = vpop.permute.xlu0 %2271
        %2273 = vrot.lane.b32.xlu0 %v2159, 81
        %v2274 = vpop.permute.xlu0 %2273
        %2275 = vrot.lane.b32.xlu0 %v2160, 81
        %v2276 = vpop.permute.xlu0 %2275
        %2277 = vrot.lane.b32.xlu0 %v2161, 81
        %v2278 = vpop.permute.xlu0 %2277
        %2279 = vrot.lane.b32.xlu0 %v2162, 81
        %v2280 = vpop.permute.xlu0 %2279
        %2281 = vrot.lane.b32.xlu0 %v2157, 81
        %v2282 = vpop.permute.xlu0 %2281
        %2283 = vrot.lane.b32.xlu0 %v2179, 81
        %v2284 = vpop.permute.xlu0 %2283
        %2285 = vrot.lane.b32.xlu0 %v2180, 81
        %v2286 = vpop.permute.xlu0 %2285
        %2287 = vrot.lane.b32.xlu0 %v2181, 81
        %v2288 = vpop.permute.xlu0 %2287
        %2289 = vrot.lane.b32.xlu0 %v2182, 81
        %v2290 = vpop.permute.xlu0 %2289
        %2291 = vrot.lane.b32.xlu0 %v2177, 81
        %v2292 = vpop.permute.xlu0 %2291
        %2293 = vrot.lane.b32.xlu0 %v2199, 81
        %v2294 = vpop.permute.xlu0 %2293
        %2295 = vrot.lane.b32.xlu0 %v2200, 81
        %v2296 = vpop.permute.xlu0 %2295
        %2297 = vrot.lane.b32.xlu0 %v2201, 81
        %v2298 = vpop.permute.xlu0 %2297
        %2299 = vrot.lane.b32.xlu0 %v2202, 81
        %v2300 = vpop.permute.xlu0 %2299
        %2301 = vrot.lane.b32.xlu0 %v2197, 81
        %v2302 = vpop.permute.xlu0 %2301
        %v2303 = vsel %vm2029, %v2214, %v2216
        %v2304 = vsel %vm2029, %v2216, %v2218
        %v2305 = vsel %vm2029, %v2218, %v2220
        %v2306 = vsel %vm2029, %v2220, %v2222
        %v2307 = vsel %vm2029, %v2224, %v2226
        %v2308 = vsel %vm2029, %v2226, %v2228
        %v2309 = vsel %vm2029, %v2228, %v2230
        %v2310 = vsel %vm2029, %v2230, %v2232
        %v2311 = vsel %vm2029, %v2234, %v2236
        %v2312 = vsel %vm2029, %v2236, %v2238
        %v2313 = vsel %vm2029, %v2238, %v2240
        %v2314 = vsel %vm2029, %v2240, %v2242
        %v2315 = vsel %vm2029, %v2244, %v2246
        %v2316 = vsel %vm2029, %v2246, %v2248
        %v2317 = vsel %vm2029, %v2248, %v2250
        %v2318 = vsel %vm2029, %v2250, %v2252
        %v2319 = vsel %vm2029, %v2254, %v2256
        %v2320 = vsel %vm2029, %v2256, %v2258
        %v2321 = vsel %vm2029, %v2258, %v2260
        %v2322 = vsel %vm2029, %v2260, %v2262
        %v2323 = vsel %vm2029, %v2264, %v2266
        %v2324 = vsel %vm2029, %v2266, %v2268
        %v2325 = vsel %vm2029, %v2268, %v2270
        %v2326 = vsel %vm2029, %v2270, %v2272
        %v2327 = vsel %vm2029, %v2274, %v2276
        %v2328 = vsel %vm2029, %v2276, %v2278
        %v2329 = vsel %vm2029, %v2278, %v2280
        %v2330 = vsel %vm2029, %v2280, %v2282
        %v2331 = vsel %vm2029, %v2284, %v2286
        %v2332 = vsel %vm2029, %v2286, %v2288
        %v2333 = vsel %vm2029, %v2288, %v2290
        %v2334 = vsel %vm2029, %v2290, %v2292
        %v2335 = vsel %vm2029, %v2294, %v2296
        %v2336 = vsel %vm2029, %v2296, %v2298
        %v2337 = vsel %vm2029, %v2298, %v2300
        %v2338 = vsel %vm2029, %v2300, %v2302
        %vm2375 = vcmask 588800
        %v2377 = vsel %vm2375, %v1648, 0
        %2379 = vmatprep.subr.mxu0 0.0
        %2380 = vmatpush1.msra.mxu0 0.0
        %2381 = vmatprep.subr.mxu0 0.0
        %2382 = vmatpush1.msra.mxu0 0.0
        %2383 = vmatprep.subr.mxu0 0.0
        %2384 = vmatpush1.msra.mxu0 0.0
        %2385 = vmatprep.subr.mxu0 0.0
        %2386 = vmatpush1.msra.mxu0 0.0
        %2387 = vmatprep.subr.mxu0 0.0
        %2388 = vmatpush1.msra.mxu0 0.0
        %2389 = vmatprep.subr.mxu0 0.0
        %2390 = vmatpush1.msra.mxu0 0.0
        %2391 = vmatprep.subr.mxu0 0.0
        %2392 = vmatpush1.msra.mxu0 0.0
        %2393 = vmatprep.subr.mxu0 %v2336
        %2394 = vmatpush1.msra.mxu0 %v2335
        %2395 = vmatprep.subr.mxu0 %v2332
        %2396 = vmatpush1.msra.mxu0 %v2331
        %2397 = vmatprep.subr.mxu0 %v2328
        %2398 = vmatpush1.msra.mxu0 %v2327
        %2399 = vmatprep.subr.mxu0 %v2324
        %2400 = vmatpush1.msra.mxu0 %v2323
        %2401 = vmatprep.subr.mxu0 %v2320
        %2402 = vmatpush1.msra.mxu0 %v2319
        %2403 = vmatprep.subr.mxu0 %v2316
        %2404 = vmatpush1.msra.mxu0 %v2315
        %2405 = vmatprep.subr.mxu0 %v2312
        %2406 = vmatpush1.msra.mxu0 %v2311
        %2407 = vmatprep.subr.mxu0 %v2308
        %2408 = vmatpush1.msra.mxu0 %v2307
        %2409 = vmatprep.subr.mxu0 %v2304
        %2410 = vmatpush1.msra.mxu0 %v2303
        %2411 = vmatprep.subr.mxu0 0.0
        %2412 = vmatpush2.msra.mxu0 0.0
        %2413 = vmatprep.subr.mxu0 0.0
        %2414 = vmatpush2.msra.mxu0 0.0
        %2415 = vmatprep.subr.mxu0 0.0
        %2416 = vmatpush2.msra.mxu0 0.0
        %2417 = vmatprep.subr.mxu0 0.0
        %2418 = vmatpush2.msra.mxu0 0.0
        %2419 = vmatprep.subr.mxu0 0.0
        %2420 = vmatpush2.msra.mxu0 0.0
        %2421 = vmatprep.subr.mxu0 0.0
        %2422 = vmatpush2.msra.mxu0 0.0
        %2423 = vmatprep.subr.mxu0 0.0
        %2424 = vmatpush2.msra.mxu0 0.0
        %2425 = vmatprep.subr.mxu0 0.0
        %2426 = vmatpush2.msra.mxu0 0.0
        %2427 = vmatprep.subr.mxu0 0.0
        %2428 = vmatpush2.msra.mxu0 0.0
        %2429 = vmatprep.subr.mxu0 0.0
        %2430 = vmatpush2.msra.mxu0 0.0
        %2431 = vmatprep.subr.mxu0 0.0
        %2432 = vmatpush2.msra.mxu0 0.0
        %2433 = vmatprep.subr.mxu0 0.0
        %2434 = vmatpush2.msra.mxu0 0.0
        %2435 = vmatprep.subr.mxu0 0.0
        %2436 = vmatpush2.msra.mxu0 0.0
        %2437 = vmatprep.subr.mxu0 0.0
        %2438 = vmatpush2.msra.mxu0 0.0
        %2439 = vmatprep.subr.mxu0 0.0
        %2440 = vmatpush2.msra.mxu0 0.0
        %2441 = vmatprep.subr.mxu0 0.0
        %2442 = vmatpush2.msra.mxu0 0.0
        %2443 = vmatprep.mubr.f32.mxu0 0.0
        %2444 = vmatmul.mubr.f32.gmra.mxu0 %v2377
        %v2445 = vpop.f32.mrf.mxu0
        %v2446 = vadd.f32 %v2206, %v2445
        %v2447 = vpop.f32.mrf.mxu0
        %v2448 = vadd.f32 %v2206, %v2447
        %2449 = vdwg.mxu0
        %2450 = vmatprep.subr.mxu0 0.0
        %2451 = vmatpush1.msra.mxu0 0.0
        %2452 = vmatprep.subr.mxu0 0.0
        %2453 = vmatpush1.msra.mxu0 0.0
        %2454 = vmatprep.subr.mxu0 0.0
        %2455 = vmatpush1.msra.mxu0 0.0
        %2456 = vmatprep.subr.mxu0 0.0
        %2457 = vmatpush1.msra.mxu0 0.0
        %2458 = vmatprep.subr.mxu0 0.0
        %2459 = vmatpush1.msra.mxu0 0.0
        %2460 = vmatprep.subr.mxu0 0.0
        %2461 = vmatpush1.msra.mxu0 0.0
        %2462 = vmatprep.subr.mxu0 0.0
        %2463 = vmatpush1.msra.mxu0 0.0
        %2464 = vmatprep.subr.mxu0 %v2338
        %2465 = vmatpush1.msra.mxu0 %v2337
        %2466 = vmatprep.subr.mxu0 %v2334
        %2467 = vmatpush1.msra.mxu0 %v2333
        %2468 = vmatprep.subr.mxu0 %v2330
        %2469 = vmatpush1.msra.mxu0 %v2329
        %2470 = vmatprep.subr.mxu0 %v2326
        %2471 = vmatpush1.msra.mxu0 %v2325
        %2472 = vmatprep.subr.mxu0 %v2322
        %2473 = vmatpush1.msra.mxu0 %v2321
        %2474 = vmatprep.subr.mxu0 %v2318
        %2475 = vmatpush1.msra.mxu0 %v2317
        %2476 = vmatprep.subr.mxu0 %v2314
        %2477 = vmatpush1.msra.mxu0 %v2313
        %2478 = vmatprep.subr.mxu0 %v2310
        %2479 = vmatpush1.msra.mxu0 %v2309
        %2480 = vmatprep.subr.mxu0 %v2306
        %2481 = vmatpush1.msra.mxu0 %v2305
        %2482 = vmatprep.subr.mxu0 0.0
        %2483 = vmatpush2.msra.mxu0 0.0
        %2484 = vmatprep.subr.mxu0 0.0
        %2485 = vmatpush2.msra.mxu0 0.0
        %2486 = vmatprep.subr.mxu0 0.0
        %2487 = vmatpush2.msra.mxu0 0.0
        %2488 = vmatprep.subr.mxu0 0.0
        %2489 = vmatpush2.msra.mxu0 0.0
        %2490 = vmatprep.subr.mxu0 0.0
        %2491 = vmatpush2.msra.mxu0 0.0
        %2492 = vmatprep.subr.mxu0 0.0
        %2493 = vmatpush2.msra.mxu0 0.0
        %2494 = vmatprep.subr.mxu0 0.0
        %2495 = vmatpush2.msra.mxu0 0.0
        %2496 = vmatprep.subr.mxu0 0.0
        %2497 = vmatpush2.msra.mxu0 0.0
        %2498 = vmatprep.subr.mxu0 0.0
        %2499 = vmatpush2.msra.mxu0 0.0
        %2500 = vmatprep.subr.mxu0 0.0
        %2501 = vmatpush2.msra.mxu0 0.0
        %2502 = vmatprep.subr.mxu0 0.0
        %2503 = vmatpush2.msra.mxu0 0.0
        %2504 = vmatprep.subr.mxu0 0.0
        %2505 = vmatpush2.msra.mxu0 0.0
        %2506 = vmatprep.subr.mxu0 0.0
        %2507 = vmatpush2.msra.mxu0 0.0
        %2508 = vmatprep.subr.mxu0 0.0
        %2509 = vmatpush2.msra.mxu0 0.0
        %2510 = vmatprep.subr.mxu0 0.0
        %2511 = vmatpush2.msra.mxu0 0.0
        %2512 = vmatprep.subr.mxu0 0.0
        %2513 = vmatpush2.msra.mxu0 0.0
        %2514 = vmatprep.mubr.f32.mxu0 0.0
        %2515 = vmatmul.mubr.f32.gmra.mxu0 %v2377
        %v2516 = vpop.f32.mrf.mxu0
        %v2517 = vadd.f32 %v2206, %v2516
        %v2518 = vpop.f32.mrf.mxu0
        %v2519 = vadd.f32 %v2206, %v2518
        %2520 = vdwg.mxu0
        %vm2521 = vcmp.gt.f32.partialorder %v1650, 0.1
        %vm2522 = vcmp.gt.f32.partialorder %v1651, 0.1
        %v2523 = vsel %vm2521, 1, 0
        %v2524 = vsel %vm2522, 1, 0
        %v2525 = vrot.slane %v2523, 5
        %v2526 = vrot.slane %v2525, 4
        %v2527 = vrot.slane %v2524, 5
        %v2528 = vrot.slane %v2527, 4
        %vm2529 = vcmp.ne.s32.totalorder %v2526, 0
        %vm2530 = vcmp.ne.s32.totalorder %v2528, 0
        %vm2531 = vmand %vm2521, %vm2529
        %vm2532 = vmand %vm2522, %vm2530
        %v2533 = vsel %vm2531, 1, 0
        %v2534 = vsel %vm2532, 1, 0
        %v2535 = vcvt.s32.f32 %v2533
        %v2536 = vcvt.s32.f32 %v2534
        %v2537 = vrot.slane %v2523, 6
        %v2538 = vrot.slane %v2537, 4
        %v2539 = vrot.slane %v2524, 6
        %v2540 = vrot.slane %v2539, 4
        %vm2541 = vcmp.ne.s32.totalorder %v2538, 0
        %vm2542 = vcmp.ne.s32.totalorder %v2540, 0
        %vm2543 = vmand %vm2521, %vm2541
        %vm2544 = vmand %vm2522, %vm2542
        %v2545 = vsel %vm2543, 1, 0
        %v2546 = vsel %vm2544, 1, 0
        %v2547 = vcvt.s32.f32 %v2545
        %v2548 = vcvt.s32.f32 %v2546
        %v2549 = vadd.f32 %v1650, 1e-06
        %v2550 = vadd.f32 %v1651, 1e-06
        %v2551 = vlog2.pop %v2549
        %v2552 = vmul.f32 %v2551, 0.6931472
        %v2553 = vlog2.pop %v2550
        %v2554 = vmul.f32 %v2553, 0.6931472
        %v2557 = vrot.slane %v2552, 5
        %v2558 = vrot.slane %v2557, 4
        %v2559 = vrot.slane %v2554, 5
        %v2560 = vrot.slane %v2559, 4
        %v2563 = vsub.f32 %v2552, %v2558
        %v2564 = vsub.f32 %v2554, %v2560
        %v2565 = vrot.slane %v2552, 6
        %v2566 = vrot.slane %v2565, 4
        %v2567 = vrot.slane %v2554, 6
        %v2568 = vrot.slane %v2567, 4
        %v2571 = vsub.f32 %v2552, %v2566
        %v2572 = vsub.f32 %v2554, %v2568
        %v2575 = vlaneseq
        %v2576 = vshrl.u32 %v2575, 7
        %v2577 = vsub.s32 0, %v2576
        %v2578 = vrot.slane %v2563, %v2577
        %v2579 = vlaneseq
        %v2580 = vshrl.u32 %v2579, 7
        %v2581 = vsub.s32 4, %v2580
        %v2582 = vrot.slane %v2563, %v2581
        %v2583 = vlaneseq
        %v2584 = vshrl.u32 %v2583, 7
        %v2585 = vsub.s32 0, %v2584
        %v2586 = vrot.slane %v2564, %v2585
        %v2587 = vlaneseq
        %v2588 = vshrl.u32 %v2587, 7
        %v2589 = vsub.s32 4, %v2588
        %v2590 = vrot.slane %v2564, %v2589
        %v2595 = vsub.f32 %v2446, %v2578
        %v2596 = vsub.f32 %v2448, %v2582
        %v2597 = vsub.f32 %v2517, %v2586
        %v2598 = vsub.f32 %v2519, %v2590
        %v2599 = vand.u32 2147483647, %v2595
        %v2600 = vand.u32 2147483647, %v2596
        %v2601 = vand.u32 2147483647, %v2597
        %v2602 = vand.u32 2147483647, %v2598
        %vm2603 = vcmp.lt.f32.partialorder %v2599, 0.01
        %vm2604 = vcmp.lt.f32.partialorder %v2600, 0.01
        %vm2605 = vcmp.lt.f32.partialorder %v2601, 0.01
        %vm2606 = vcmp.lt.f32.partialorder %v2602, 0.01
        %v2607 = vmul.f32 %v2599, 0.5
        %v2608 = vmul.f32 %v2600, 0.5
        %v2609 = vmul.f32 %v2601, 0.5
        %v2610 = vmul.f32 %v2602, 0.5
        %v2611 = vmul.f32 %v2607, %v2599
        %v2612 = vmul.f32 %v2608, %v2600
        %v2613 = vmul.f32 %v2609, %v2601
        %v2614 = vmul.f32 %v2610, %v2602
        %v2615 = vrcp.pop 0.01
        %v2616 = vmul.f32 %v2611, %v2615
        %v2617 = vmul.f32 %v2612, %v2615
        %v2618 = vmul.f32 %v2613, %v2615
        %v2619 = vmul.f32 %v2614, %v2615
        %v2620 = vsub.f32 %v2599, 0.005
        %v2621 = vsub.f32 %v2600, 0.005
        %v2622 = vsub.f32 %v2601, 0.005
        %v2623 = vsub.f32 %v2602, 0.005
        %v2624 = vsel %vm2603, %v2616, %v2620
        %v2625 = vsel %vm2604, %v2617, %v2621
        %v2626 = vsel %vm2605, %v2618, %v2622
        %v2627 = vsel %vm2606, %v2619, %v2623
        %v2630 = vlaneseq
        %v2631 = vshrl.u32 %v2630, 7
        %v2632 = vsub.s32 0, %v2631
        %v2633 = vrot.slane %v2535, %v2632
        %v2634 = vlaneseq
        %v2635 = vshrl.u32 %v2634, 7
        %v2636 = vsub.s32 4, %v2635
        %v2637 = vrot.slane %v2535, %v2636
        %v2638 = vlaneseq
        %v2639 = vshrl.u32 %v2638, 7
        %v2640 = vsub.s32 0, %v2639
        %v2641 = vrot.slane %v2536, %v2640
        %v2642 = vlaneseq
        %v2643 = vshrl.u32 %v2642, 7
        %v2644 = vsub.s32 4, %v2643
        %v2645 = vrot.slane %v2536, %v2644
        %v2650 = vmul.f32 %v2624, %v2633
        %v2651 = vmul.f32 %v2625, %v2637
        %v2652 = vmul.f32 %v2626, %v2641
        %v2653 = vmul.f32 %v2627, %v2645
        %v2656 = vlaneseq
        %v2657 = vshrl.u32 %v2656, 7
        %v2658 = vsub.s32 0, %v2657
        %v2659 = vrot.slane %v2571, %v2658
        %v2660 = vlaneseq
        %v2661 = vshrl.u32 %v2660, 7
        %v2662 = vsub.s32 4, %v2661
        %v2663 = vrot.slane %v2571, %v2662
        %v2664 = vlaneseq
        %v2665 = vshrl.u32 %v2664, 7
        %v2666 = vsub.s32 0, %v2665
        %v2667 = vrot.slane %v2572, %v2666
        %v2668 = vlaneseq
        %v2669 = vshrl.u32 %v2668, 7
        %v2670 = vsub.s32 4, %v2669
        %v2671 = vrot.slane %v2572, %v2670
        %v2676 = vsub.f32 %v2446, %v2659
        %v2677 = vsub.f32 %v2448, %v2663
        %v2678 = vsub.f32 %v2517, %v2667
        %v2679 = vsub.f32 %v2519, %v2671
        %v2680 = vand.u32 2147483647, %v2676
        %v2681 = vand.u32 2147483647, %v2677
        %v2682 = vand.u32 2147483647, %v2678
        %v2683 = vand.u32 2147483647, %v2679
        %vm2684 = vcmp.lt.f32.partialorder %v2680, 0.01
        %vm2685 = vcmp.lt.f32.partialorder %v2681, 0.01
        %vm2686 = vcmp.lt.f32.partialorder %v2682, 0.01
        %vm2687 = vcmp.lt.f32.partialorder %v2683, 0.01
        %v2688 = vmul.f32 %v2680, 0.5
        %v2689 = vmul.f32 %v2681, 0.5
        %v2690 = vmul.f32 %v2682, 0.5
        %v2691 = vmul.f32 %v2683, 0.5
        %v2692 = vmul.f32 %v2688, %v2680
        %v2693 = vmul.f32 %v2689, %v2681
        %v2694 = vmul.f32 %v2690, %v2682
        %v2695 = vmul.f32 %v2691, %v2683
        %v2696 = vmul.f32 %v2692, %v2615
        %v2697 = vmul.f32 %v2693, %v2615
        %v2698 = vmul.f32 %v2694, %v2615
        %v2699 = vmul.f32 %v2695, %v2615
        %v2700 = vsub.f32 %v2680, 0.005
        %v2701 = vsub.f32 %v2681, 0.005
        %v2702 = vsub.f32 %v2682, 0.005
        %v2703 = vsub.f32 %v2683, 0.005
        %v2704 = vsel %vm2684, %v2696, %v2700
        %v2705 = vsel %vm2685, %v2697, %v2701
        %v2706 = vsel %vm2686, %v2698, %v2702
        %v2707 = vsel %vm2687, %v2699, %v2703
        %v2710 = vlaneseq
        %v2711 = vshrl.u32 %v2710, 7
        %v2712 = vsub.s32 0, %v2711
        %v2713 = vrot.slane %v2547, %v2712
        %v2714 = vlaneseq
        %v2715 = vshrl.u32 %v2714, 7
        %v2716 = vsub.s32 4, %v2715
        %v2717 = vrot.slane %v2547, %v2716
        %v2718 = vlaneseq
        %v2719 = vshrl.u32 %v2718, 7
        %v2720 = vsub.s32 0, %v2719
        %v2721 = vrot.slane %v2548, %v2720
        %v2722 = vlaneseq
        %v2723 = vshrl.u32 %v2722, 7
        %v2724 = vsub.s32 4, %v2723
        %v2725 = vrot.slane %v2548, %v2724
        %v2730 = vmul.f32 %v2704, %v2713
        %v2731 = vmul.f32 %v2705, %v2717
        %v2732 = vmul.f32 %v2706, %v2721
        %v2733 = vmul.f32 %v2707, %v2725
        %v2738 = vrot.slane %v2730, 1
        %v2739 = vrot.slane %v2731, 1
        %v2740 = vrot.slane %v2732, 1
        %v2741 = vrot.slane %v2733, 1
        %v2746 = vadd.f32 %v2650, %v2738
        %v2747 = vadd.f32 %v2651, %v2739
        %v2748 = vadd.f32 %v2652, %v2740
        %v2749 = vadd.f32 %v2653, %v2741
        %v2750 = vadd.f32 %v2535, %v2547
        %v2751 = vadd.f32 %v2536, %v2548
        %vm2752 = vcmask 1040384
        %v2753 = vsel %vm2752, %v2746, 0.0
        %v2754 = vsel %vm2752, %v2747, 0.0
        %v2755 = vadd.f32 %v2753, %v2754
        %v2756 = vsel %vm2752, %v2748, 0.0
        %v2757 = vadd.f32 %v2755, %v2756
        %v2758 = vsel %vm2752, %v2749, 0.0
        %v2759 = vadd.f32 %v2757, %v2758
        %2760 = vadd.xlane.f32.xlu0 %v2759
        %v2761 = vpop.xlane.xlu0 %2760
        %v2762 = vrot.slane %v2761, 4
        %v2763 = vadd.f32 %v2761, %v2762
        %v2764 = vrot.slane %v2763, 2
        %v2765 = vadd.f32 %v2763, %v2764
        %v2766 = vrot.slane %v2765, 1
        %v2767 = vadd.f32 %v2765, %v2766
        %s2768 = vtos %v2767
        %v2771 = vlaneseq
        %v2772 = vshrl.u32 %v2771, 7
        %v2773 = vsub.s32 0, %v2772
        %v2774 = vrot.slane %v2750, %v2773
        %v2775 = vlaneseq
        %v2776 = vshrl.u32 %v2775, 7
        %v2777 = vsub.s32 4, %v2776
        %v2778 = vrot.slane %v2750, %v2777
        %v2779 = vlaneseq
        %v2780 = vshrl.u32 %v2779, 7
        %v2781 = vsub.s32 0, %v2780
        %v2782 = vrot.slane %v2751, %v2781
        %v2783 = vlaneseq
        %v2784 = vshrl.u32 %v2783, 7
        %v2785 = vsub.s32 4, %v2784
        %v2786 = vrot.slane %v2751, %v2785
        %v2791 = vsel %vm2752, %v2774, 0.0
        %v2792 = vsel %vm2752, %v2778, 0.0
        %v2793 = vadd.f32 %v2791, %v2792
        %v2794 = vsel %vm2752, %v2782, 0.0
        %v2795 = vadd.f32 %v2793, %v2794
        %v2796 = vsel %vm2752, %v2786, 0.0
        %v2797 = vadd.f32 %v2795, %v2796
        %2798 = vadd.xlane.f32.xlu0 %v2797
        %v2799 = vpop.xlane.xlu0 %2798
        %v2800 = vrot.slane %v2799, 4
        %v2801 = vadd.f32 %v2799, %v2800
        %v2802 = vrot.slane %v2801, 2
        %v2803 = vadd.f32 %v2801, %v2802
        %v2804 = vrot.slane %v2803, 1
        %v2805 = vadd.f32 %v2803, %v2804
        %s2806 = vtos %v2805
        %v2807 = vmul.f32 %v1596, %v1635
        %v2808 = vmul.f32 %v1598, %v1636
        %v2809 = vmul.f32 %v1600, %v1637
        %v2810 = vmul.f32 %v1602, %v1638
        %v2811 = vmul.f32 %v1604, %v1639
        %v2812 = vmul.f32 %v2807, %v1686
        %v2813 = vmul.f32 %v2808, %v1694
        %v2814 = vmul.f32 %v2809, %v1695
        %v2815 = vmul.f32 %v2810, %v1696
        %v2816 = vmul.f32 %v2811, %v1692
        %v2817 = vmul.f32 %v2807, %v1728
        %v2818 = vmul.f32 %v2808, %v1736
        %v2819 = vmul.f32 %v2809, %v1737
        %v2820 = vmul.f32 %v2810, %v1738
        %v2821 = vmul.f32 %v2811, %v1734
        %v2822 = vmul.f32 %v2807, %v1770
        %v2823 = vmul.f32 %v2808, %v1778
        %v2824 = vmul.f32 %v2809, %v1779
        %v2825 = vmul.f32 %v2810, %v1780
        %v2826 = vmul.f32 %v2811, %v1776
        %v2827 = vmul.f32 %v2807, %v1812
        %v2828 = vmul.f32 %v2808, %v1820
        %v2829 = vmul.f32 %v2809, %v1821
        %v2830 = vmul.f32 %v2810, %v1822
        %v2831 = vmul.f32 %v2811, %v1818
        %v2832 = vmul.f32 %v2807, %v1854
        %v2833 = vmul.f32 %v2808, %v1862
        %v2834 = vmul.f32 %v2809, %v1863
        %v2835 = vmul.f32 %v2810, %v1864
        %v2836 = vmul.f32 %v2811, %v1860
        %v2837 = vmul.f32 %v2807, %v1896
        %v2838 = vmul.f32 %v2808, %v1904
        %v2839 = vmul.f32 %v2809, %v1905
        %v2840 = vmul.f32 %v2810, %v1906
        %v2841 = vmul.f32 %v2811, %v1902
        %v2842 = vmul.f32 %v2807, %v1938
        %v2843 = vmul.f32 %v2808, %v1946
        %v2844 = vmul.f32 %v2809, %v1947
        %v2845 = vmul.f32 %v2810, %v1948
        %v2846 = vmul.f32 %v2811, %v1944
        %v2847 = vmul.f32 %v2807, %v1980
        %v2848 = vmul.f32 %v2808, %v1988
        %v2849 = vmul.f32 %v2809, %v1989
        %v2850 = vmul.f32 %v2810, %v1990
        %v2851 = vmul.f32 %v2811, %v1986
        %v2852 = vmul.f32 %v2807, %v2022
        %v2853 = vmul.f32 %v2808, %v2030
        %v2854 = vmul.f32 %v2809, %v2031
        %v2855 = vmul.f32 %v2810, %v2032
        %v2856 = vmul.f32 %v2811, %v2028
        %2862 = vrot.lane.b32.xlu0 %v2817, 127
        %v2863 = vpop.permute.xlu0 %2862
        %2864 = vrot.lane.b32.xlu0 %v2818, 127
        %v2865 = vpop.permute.xlu0 %2864
        %2866 = vrot.lane.b32.xlu0 %v2819, 127
        %v2867 = vpop.permute.xlu0 %2866
        %2868 = vrot.lane.b32.xlu0 %v2820, 127
        %v2869 = vpop.permute.xlu0 %2868
        %2870 = vrot.lane.b32.xlu0 %v2821, 127
        %v2871 = vpop.permute.xlu0 %2870
        %v2872 = vsel %vm2058, %v2863, %v2865
        %v2873 = vsel %vm2058, %v2865, %v2867
        %v2874 = vsel %vm2058, %v2867, %v2869
        %v2875 = vsel %vm2058, %v2869, %v2871
        %2881 = vrot.lane.b32.xlu0 %v2822, 126
        %v2882 = vpop.permute.xlu0 %2881
        %2883 = vrot.lane.b32.xlu0 %v2823, 126
        %v2884 = vpop.permute.xlu0 %2883
        %2885 = vrot.lane.b32.xlu0 %v2824, 126
        %v2886 = vpop.permute.xlu0 %2885
        %2887 = vrot.lane.b32.xlu0 %v2825, 126
        %v2888 = vpop.permute.xlu0 %2887
        %2889 = vrot.lane.b32.xlu0 %v2826, 126
        %v2890 = vpop.permute.xlu0 %2889
        %v2891 = vsel %vm2078, %v2882, %v2884
        %v2892 = vsel %vm2078, %v2884, %v2886
        %v2893 = vsel %vm2078, %v2886, %v2888
        %v2894 = vsel %vm2078, %v2888, %v2890
        %2900 = vrot.lane.b32.xlu0 %v2827, 112
        %v2901 = vpop.permute.xlu0 %2900
        %2902 = vrot.lane.b32.xlu0 %v2828, 112
        %v2903 = vpop.permute.xlu0 %2902
        %2904 = vrot.lane.b32.xlu0 %v2829, 112
        %v2905 = vpop.permute.xlu0 %2904
        %2906 = vrot.lane.b32.xlu0 %v2830, 112
        %v2907 = vpop.permute.xlu0 %2906
        %2908 = vrot.lane.b32.xlu0 %v2831, 112
        %v2909 = vpop.permute.xlu0 %2908
        %v2910 = vsel %vm2098, %v2901, %v2903
        %v2911 = vsel %vm2098, %v2903, %v2905
        %v2912 = vsel %vm2098, %v2905, %v2907
        %v2913 = vsel %vm2098, %v2907, %v2909
        %2919 = vrot.lane.b32.xlu0 %v2832, 111
        %v2920 = vpop.permute.xlu0 %2919
        %2921 = vrot.lane.b32.xlu0 %v2833, 111
        %v2922 = vpop.permute.xlu0 %2921
        %2923 = vrot.lane.b32.xlu0 %v2834, 111
        %v2924 = vpop.permute.xlu0 %2923
        %2925 = vrot.lane.b32.xlu0 %v2835, 111
        %v2926 = vpop.permute.xlu0 %2925
        %2927 = vrot.lane.b32.xlu0 %v2836, 111
        %v2928 = vpop.permute.xlu0 %2927
        %v2929 = vsel %vm2118, %v2920, %v2922
        %v2930 = vsel %vm2118, %v2922, %v2924
        %v2931 = vsel %vm2118, %v2924, %v2926
        %v2932 = vsel %vm2118, %v2926, %v2928
        %2938 = vrot.lane.b32.xlu0 %v2837, 110
        %v2939 = vpop.permute.xlu0 %2938
        %2940 = vrot.lane.b32.xlu0 %v2838, 110
        %v2941 = vpop.permute.xlu0 %2940
        %2942 = vrot.lane.b32.xlu0 %v2839, 110
        %v2943 = vpop.permute.xlu0 %2942
        %2944 = vrot.lane.b32.xlu0 %v2840, 110
        %v2945 = vpop.permute.xlu0 %2944
        %2946 = vrot.lane.b32.xlu0 %v2841, 110
        %v2947 = vpop.permute.xlu0 %2946
        %v2948 = vsel %vm2138, %v2939, %v2941
        %v2949 = vsel %vm2138, %v2941, %v2943
        %v2950 = vsel %vm2138, %v2943, %v2945
        %v2951 = vsel %vm2138, %v2945, %v2947
        %2957 = vrot.lane.b32.xlu0 %v2842, 96
        %v2958 = vpop.permute.xlu0 %2957
        %2959 = vrot.lane.b32.xlu0 %v2843, 96
        %v2960 = vpop.permute.xlu0 %2959
        %2961 = vrot.lane.b32.xlu0 %v2844, 96
        %v2962 = vpop.permute.xlu0 %2961
        %2963 = vrot.lane.b32.xlu0 %v2845, 96
        %v2964 = vpop.permute.xlu0 %2963
        %2965 = vrot.lane.b32.xlu0 %v2846, 96
        %v2966 = vpop.permute.xlu0 %2965
        %v2967 = vsel %vm2158, %v2958, %v2960
        %v2968 = vsel %vm2158, %v2960, %v2962
        %v2969 = vsel %vm2158, %v2962, %v2964
        %v2970 = vsel %vm2158, %v2964, %v2966
        %2976 = vrot.lane.b32.xlu0 %v2847, 95
        %v2977 = vpop.permute.xlu0 %2976
        %2978 = vrot.lane.b32.xlu0 %v2848, 95
        %v2979 = vpop.permute.xlu0 %2978
        %2980 = vrot.lane.b32.xlu0 %v2849, 95
        %v2981 = vpop.permute.xlu0 %2980
        %2982 = vrot.lane.b32.xlu0 %v2850, 95
        %v2983 = vpop.permute.xlu0 %2982
        %2984 = vrot.lane.b32.xlu0 %v2851, 95
        %v2985 = vpop.permute.xlu0 %2984
        %v2986 = vsel %vm2178, %v2977, %v2979
        %v2987 = vsel %vm2178, %v2979, %v2981
        %v2988 = vsel %vm2178, %v2981, %v2983
        %v2989 = vsel %vm2178, %v2983, %v2985
        %2995 = vrot.lane.b32.xlu0 %v2852, 94
        %v2996 = vpop.permute.xlu0 %2995
        %2997 = vrot.lane.b32.xlu0 %v2853, 94
        %v2998 = vpop.permute.xlu0 %2997
        %2999 = vrot.lane.b32.xlu0 %v2854, 94
        %v3000 = vpop.permute.xlu0 %2999
        %3001 = vrot.lane.b32.xlu0 %v2855, 94
        %v3002 = vpop.permute.xlu0 %3001
        %3003 = vrot.lane.b32.xlu0 %v2856, 94
        %v3004 = vpop.permute.xlu0 %3003
        %v3005 = vsel %vm2198, %v2996, %v2998
        %v3006 = vsel %vm2198, %v2998, %v3000
        %v3007 = vsel %vm2198, %v3000, %v3002
        %v3008 = vsel %vm2198, %v3002, %v3004
        %3014 = vrot.lane.b32.xlu0 %v2812, 81
        %v3015 = vpop.permute.xlu0 %3014
        %3016 = vrot.lane.b32.xlu0 %v2813, 81
        %v3017 = vpop.permute.xlu0 %3016
        %3018 = vrot.lane.b32.xlu0 %v2814, 81
        %v3019 = vpop.permute.xlu0 %3018
        %3020 = vrot.lane.b32.xlu0 %v2815, 81
        %v3021 = vpop.permute.xlu0 %3020
        %3022 = vrot.lane.b32.xlu0 %v2816, 81
        %v3023 = vpop.permute.xlu0 %3022
        %3024 = vrot.lane.b32.xlu0 %v2872, 81
        %v3025 = vpop.permute.xlu0 %3024
        %3026 = vrot.lane.b32.xlu0 %v2873, 81
        %v3027 = vpop.permute.xlu0 %3026
        %3028 = vrot.lane.b32.xlu0 %v2874, 81
        %v3029 = vpop.permute.xlu0 %3028
        %3030 = vrot.lane.b32.xlu0 %v2875, 81
        %v3031 = vpop.permute.xlu0 %3030
        %3032 = vrot.lane.b32.xlu0 %v2871, 81
        %v3033 = vpop.permute.xlu0 %3032
        %3034 = vrot.lane.b32.xlu0 %v2891, 81
        %v3035 = vpop.permute.xlu0 %3034
        %3036 = vrot.lane.b32.xlu0 %v2892, 81
        %v3037 = vpop.permute.xlu0 %3036
        %3038 = vrot.lane.b32.xlu0 %v2893, 81
        %v3039 = vpop.permute.xlu0 %3038
        %3040 = vrot.lane.b32.xlu0 %v2894, 81
        %v3041 = vpop.permute.xlu0 %3040
        %3042 = vrot.lane.b32.xlu0 %v2890, 81
        %v3043 = vpop.permute.xlu0 %3042
        %3044 = vrot.lane.b32.xlu0 %v2910, 81
        %v3045 = vpop.permute.xlu0 %3044
        %3046 = vrot.lane.b32.xlu0 %v2911, 81
        %v3047 = vpop.permute.xlu0 %3046
        %3048 = vrot.lane.b32.xlu0 %v2912, 81
        %v3049 = vpop.permute.xlu0 %3048
        %3050 = vrot.lane.b32.xlu0 %v2913, 81
        %v3051 = vpop.permute.xlu0 %3050
        %3052 = vrot.lane.b32.xlu0 %v2909, 81
        %v3053 = vpop.permute.xlu0 %3052
        %3054 = vrot.lane.b32.xlu0 %v2929, 81
        %v3055 = vpop.permute.xlu0 %3054
        %3056 = vrot.lane.b32.xlu0 %v2930, 81
        %v3057 = vpop.permute.xlu0 %3056
        %3058 = vrot.lane.b32.xlu0 %v2931, 81
        %v3059 = vpop.permute.xlu0 %3058
        %3060 = vrot.lane.b32.xlu0 %v2932, 81
        %v3061 = vpop.permute.xlu0 %3060
        %3062 = vrot.lane.b32.xlu0 %v2928, 81
        %v3063 = vpop.permute.xlu0 %3062
        %3064 = vrot.lane.b32.xlu0 %v2948, 81
        %v3065 = vpop.permute.xlu0 %3064
        %3066 = vrot.lane.b32.xlu0 %v2949, 81
        %v3067 = vpop.permute.xlu0 %3066
        %3068 = vrot.lane.b32.xlu0 %v2950, 81
        %v3069 = vpop.permute.xlu0 %3068
        %3070 = vrot.lane.b32.xlu0 %v2951, 81
        %v3071 = vpop.permute.xlu0 %3070
        %3072 = vrot.lane.b32.xlu0 %v2947, 81
        %v3073 = vpop.permute.xlu0 %3072
        %3074 = vrot.lane.b32.xlu0 %v2967, 81
        %v3075 = vpop.permute.xlu0 %3074
        %3076 = vrot.lane.b32.xlu0 %v2968, 81
        %v3077 = vpop.permute.xlu0 %3076
        %3078 = vrot.lane.b32.xlu0 %v2969, 81
        %v3079 = vpop.permute.xlu0 %3078
        %3080 = vrot.lane.b32.xlu0 %v2970, 81
        %v3081 = vpop.permute.xlu0 %3080
        %3082 = vrot.lane.b32.xlu0 %v2966, 81
        %v3083 = vpop.permute.xlu0 %3082
        %3084 = vrot.lane.b32.xlu0 %v2986, 81
        %v3085 = vpop.permute.xlu0 %3084
        %3086 = vrot.lane.b32.xlu0 %v2987, 81
        %v3087 = vpop.permute.xlu0 %3086
        %3088 = vrot.lane.b32.xlu0 %v2988, 81
        %v3089 = vpop.permute.xlu0 %3088
        %3090 = vrot.lane.b32.xlu0 %v2989, 81
        %v3091 = vpop.permute.xlu0 %3090
        %3092 = vrot.lane.b32.xlu0 %v2985, 81
        %v3093 = vpop.permute.xlu0 %3092
        %3094 = vrot.lane.b32.xlu0 %v3005, 81
        %v3095 = vpop.permute.xlu0 %3094
        %3096 = vrot.lane.b32.xlu0 %v3006, 81
        %v3097 = vpop.permute.xlu0 %3096
        %3098 = vrot.lane.b32.xlu0 %v3007, 81
        %v3099 = vpop.permute.xlu0 %3098
        %3100 = vrot.lane.b32.xlu0 %v3008, 81
        %v3101 = vpop.permute.xlu0 %3100
        %3102 = vrot.lane.b32.xlu0 %v3004, 81
        %v3103 = vpop.permute.xlu0 %3102
        %v3104 = vsel %vm2029, %v3015, %v3017
        %v3105 = vsel %vm2029, %v3017, %v3019
        %v3106 = vsel %vm2029, %v3019, %v3021
        %v3107 = vsel %vm2029, %v3021, %v3023
        %v3108 = vsel %vm2029, %v3025, %v3027
        %v3109 = vsel %vm2029, %v3027, %v3029
        %v3110 = vsel %vm2029, %v3029, %v3031
        %v3111 = vsel %vm2029, %v3031, %v3033
        %v3112 = vsel %vm2029, %v3035, %v3037
        %v3113 = vsel %vm2029, %v3037, %v3039
        %v3114 = vsel %vm2029, %v3039, %v3041
        %v3115 = vsel %vm2029, %v3041, %v3043
        %v3116 = vsel %vm2029, %v3045, %v3047
        %v3117 = vsel %vm2029, %v3047, %v3049
        %v3118 = vsel %vm2029, %v3049, %v3051
        %v3119 = vsel %vm2029, %v3051, %v3053
        %v3120 = vsel %vm2029, %v3055, %v3057
        %v3121 = vsel %vm2029, %v3057, %v3059
        %v3122 = vsel %vm2029, %v3059, %v3061
        %v3123 = vsel %vm2029, %v3061, %v3063
        %v3124 = vsel %vm2029, %v3065, %v3067
        %v3125 = vsel %vm2029, %v3067, %v3069
        %v3126 = vsel %vm2029, %v3069, %v3071
        %v3127 = vsel %vm2029, %v3071, %v3073
        %v3128 = vsel %vm2029, %v3075, %v3077
        %v3129 = vsel %vm2029, %v3077, %v3079
        %v3130 = vsel %vm2029, %v3079, %v3081
        %v3131 = vsel %vm2029, %v3081, %v3083
        %v3132 = vsel %vm2029, %v3085, %v3087
        %v3133 = vsel %vm2029, %v3087, %v3089
        %v3134 = vsel %vm2029, %v3089, %v3091
        %v3135 = vsel %vm2029, %v3091, %v3093
        %v3136 = vsel %vm2029, %v3095, %v3097
        %v3137 = vsel %vm2029, %v3097, %v3099
        %v3138 = vsel %vm2029, %v3099, %v3101
        %v3139 = vsel %vm2029, %v3101, %v3103
        %3176 = vmatprep.subr.mxu0 0.0
        %3177 = vmatpush1.msra.mxu0 0.0
        %3178 = vmatprep.subr.mxu0 0.0
        %3179 = vmatpush1.msra.mxu0 0.0
        %3180 = vmatprep.subr.mxu0 0.0
        %3181 = vmatpush1.msra.mxu0 0.0
        %3182 = vmatprep.subr.mxu0 0.0
        %3183 = vmatpush1.msra.mxu0 0.0
        %3184 = vmatprep.subr.mxu0 0.0
        %3185 = vmatpush1.msra.mxu0 0.0
        %3186 = vmatprep.subr.mxu0 0.0
        %3187 = vmatpush1.msra.mxu0 0.0
        %3188 = vmatprep.subr.mxu0 0.0
        %3189 = vmatpush1.msra.mxu0 0.0
        %3190 = vmatprep.subr.mxu0 %v3137
        %3191 = vmatpush1.msra.mxu0 %v3136
        %3192 = vmatprep.subr.mxu0 %v3133
        %3193 = vmatpush1.msra.mxu0 %v3132
        %3194 = vmatprep.subr.mxu0 %v3129
        %3195 = vmatpush1.msra.mxu0 %v3128
        %3196 = vmatprep.subr.mxu0 %v3125
        %3197 = vmatpush1.msra.mxu0 %v3124
        %3198 = vmatprep.subr.mxu0 %v3121
        %3199 = vmatpush1.msra.mxu0 %v3120
        %3200 = vmatprep.subr.mxu0 %v3117
        %3201 = vmatpush1.msra.mxu0 %v3116
        %3202 = vmatprep.subr.mxu0 %v3113
        %3203 = vmatpush1.msra.mxu0 %v3112
        %3204 = vmatprep.subr.mxu0 %v3109
        %3205 = vmatpush1.msra.mxu0 %v3108
        %3206 = vmatprep.subr.mxu0 %v3105
        %3207 = vmatpush1.msra.mxu0 %v3104
        %3208 = vmatprep.subr.mxu0 0.0
        %3209 = vmatpush2.msra.mxu0 0.0
        %3210 = vmatprep.subr.mxu0 0.0
        %3211 = vmatpush2.msra.mxu0 0.0
        %3212 = vmatprep.subr.mxu0 0.0
        %3213 = vmatpush2.msra.mxu0 0.0
        %3214 = vmatprep.subr.mxu0 0.0
        %3215 = vmatpush2.msra.mxu0 0.0
        %3216 = vmatprep.subr.mxu0 0.0
        %3217 = vmatpush2.msra.mxu0 0.0
        %3218 = vmatprep.subr.mxu0 0.0
        %3219 = vmatpush2.msra.mxu0 0.0
        %3220 = vmatprep.subr.mxu0 0.0
        %3221 = vmatpush2.msra.mxu0 0.0
        %3222 = vmatprep.subr.mxu0 0.0
        %3223 = vmatpush2.msra.mxu0 0.0
        %3224 = vmatprep.subr.mxu0 0.0
        %3225 = vmatpush2.msra.mxu0 0.0
        %3226 = vmatprep.subr.mxu0 0.0
        %3227 = vmatpush2.msra.mxu0 0.0
        %3228 = vmatprep.subr.mxu0 0.0
        %3229 = vmatpush2.msra.mxu0 0.0
        %3230 = vmatprep.subr.mxu0 0.0
        %3231 = vmatpush2.msra.mxu0 0.0
        %3232 = vmatprep.subr.mxu0 0.0
        %3233 = vmatpush2.msra.mxu0 0.0
        %3234 = vmatprep.subr.mxu0 0.0
        %3235 = vmatpush2.msra.mxu0 0.0
        %3236 = vmatprep.subr.mxu0 0.0
        %3237 = vmatpush2.msra.mxu0 0.0
        %3238 = vmatprep.subr.mxu0 0.0
        %3239 = vmatpush2.msra.mxu0 0.0
        %3240 = vmatprep.mubr.f32.mxu0 0.0
        %3241 = vmatmul.mubr.f32.gmra.mxu0 %v2377
        %v3242 = vpop.f32.mrf.mxu0
        %v3243 = vadd.f32 %v2206, %v3242
        %v3244 = vpop.f32.mrf.mxu0
        %v3245 = vadd.f32 %v2206, %v3244
        %3246 = vdwg.mxu0
        %3247 = vmatprep.subr.mxu0 0.0
        %3248 = vmatpush1.msra.mxu0 0.0
        %3249 = vmatprep.subr.mxu0 0.0
        %3250 = vmatpush1.msra.mxu0 0.0
        %3251 = vmatprep.subr.mxu0 0.0
        %3252 = vmatpush1.msra.mxu0 0.0
        %3253 = vmatprep.subr.mxu0 0.0
        %3254 = vmatpush1.msra.mxu0 0.0
        %3255 = vmatprep.subr.mxu0 0.0
        %3256 = vmatpush1.msra.mxu0 0.0
        %3257 = vmatprep.subr.mxu0 0.0
        %3258 = vmatpush1.msra.mxu0 0.0
        %3259 = vmatprep.subr.mxu0 0.0
        %3260 = vmatpush1.msra.mxu0 0.0
        %3261 = vmatprep.subr.mxu0 %v3139
        %3262 = vmatpush1.msra.mxu0 %v3138
        %3263 = vmatprep.subr.mxu0 %v3135
        %3264 = vmatpush1.msra.mxu0 %v3134
        %3265 = vmatprep.subr.mxu0 %v3131
        %3266 = vmatpush1.msra.mxu0 %v3130
        %3267 = vmatprep.subr.mxu0 %v3127
        %3268 = vmatpush1.msra.mxu0 %v3126
        %3269 = vmatprep.subr.mxu0 %v3123
        %3270 = vmatpush1.msra.mxu0 %v3122
        %3271 = vmatprep.subr.mxu0 %v3119
        %3272 = vmatpush1.msra.mxu0 %v3118
        %3273 = vmatprep.subr.mxu0 %v3115
        %3274 = vmatpush1.msra.mxu0 %v3114
        %3275 = vmatprep.subr.mxu0 %v3111
        %3276 = vmatpush1.msra.mxu0 %v3110
        %3277 = vmatprep.subr.mxu0 %v3107
        %3278 = vmatpush1.msra.mxu0 %v3106
        %3279 = vmatprep.subr.mxu0 0.0
        %3280 = vmatpush2.msra.mxu0 0.0
        %3281 = vmatprep.subr.mxu0 0.0
        %3282 = vmatpush2.msra.mxu0 0.0
        %3283 = vmatprep.subr.mxu0 0.0
        %3284 = vmatpush2.msra.mxu0 0.0
        %3285 = vmatprep.subr.mxu0 0.0
        %3286 = vmatpush2.msra.mxu0 0.0
        %3287 = vmatprep.subr.mxu0 0.0
        %3288 = vmatpush2.msra.mxu0 0.0
        %3289 = vmatprep.subr.mxu0 0.0
        %3290 = vmatpush2.msra.mxu0 0.0
        %3291 = vmatprep.subr.mxu0 0.0
        %3292 = vmatpush2.msra.mxu0 0.0
        %3293 = vmatprep.subr.mxu0 0.0
        %3294 = vmatpush2.msra.mxu0 0.0
        %3295 = vmatprep.subr.mxu0 0.0
        %3296 = vmatpush2.msra.mxu0 0.0
        %3297 = vmatprep.subr.mxu0 0.0
        %3298 = vmatpush2.msra.mxu0 0.0
        %3299 = vmatprep.subr.mxu0 0.0
        %3300 = vmatpush2.msra.mxu0 0.0
        %3301 = vmatprep.subr.mxu0 0.0
        %3302 = vmatpush2.msra.mxu0 0.0
        %3303 = vmatprep.subr.mxu0 0.0
        %3304 = vmatpush2.msra.mxu0 0.0
        %3305 = vmatprep.subr.mxu0 0.0
        %3306 = vmatpush2.msra.mxu0 0.0
        %3307 = vmatprep.subr.mxu0 0.0
        %3308 = vmatpush2.msra.mxu0 0.0
        %3309 = vmatprep.subr.mxu0 0.0
        %3310 = vmatpush2.msra.mxu0 0.0
        %3311 = vmatprep.mubr.f32.mxu0 0.0
        %3312 = vmatmul.mubr.f32.gmra.mxu0 %v2377
        %v3313 = vpop.f32.mrf.mxu0
        %v3314 = vadd.f32 %v2206, %v3313
        %v3315 = vpop.f32.mrf.mxu0
        %v3316 = vadd.f32 %v2206, %v3315
        %3317 = vdwg.mxu0
        %vm3318 = vcmp.gt.f32.partialorder %v1652, 0.1
        %vm3319 = vcmp.gt.f32.partialorder %v1653, 0.1
        %v3320 = vsel %vm3318, 1, 0
        %v3321 = vsel %vm3319, 1, 0
        %v3322 = vrot.slane %v3320, 5
        %v3323 = vrot.slane %v3322, 4
        %v3324 = vrot.slane %v3321, 5
        %v3325 = vrot.slane %v3324, 4
        %vm3326 = vcmp.ne.s32.totalorder %v3323, 0
        %vm3327 = vcmp.ne.s32.totalorder %v3325, 0
        %vm3328 = vmand %vm3318, %vm3326
        %vm3329 = vmand %vm3319, %vm3327
        %v3330 = vsel %vm3328, 1, 0
        %v3331 = vsel %vm3329, 1, 0
        %v3332 = vcvt.s32.f32 %v3330
        %v3333 = vcvt.s32.f32 %v3331
        %v3334 = vrot.slane %v3320, 6
        %v3335 = vrot.slane %v3334, 4
        %v3336 = vrot.slane %v3321, 6
        %v3337 = vrot.slane %v3336, 4
        %vm3338 = vcmp.ne.s32.totalorder %v3335, 0
        %vm3339 = vcmp.ne.s32.totalorder %v3337, 0
        %vm3340 = vmand %vm3318, %vm3338
        %vm3341 = vmand %vm3319, %vm3339
        %v3342 = vsel %vm3340, 1, 0
        %v3343 = vsel %vm3341, 1, 0
        %v3344 = vcvt.s32.f32 %v3342
        %v3345 = vcvt.s32.f32 %v3343
        %v3346 = vadd.f32 %v1652, 1e-06
        %v3347 = vadd.f32 %v1653, 1e-06
        %v3348 = vlog2.pop %v3346
        %v3349 = vmul.f32 %v3348, 0.6931472
        %v3350 = vlog2.pop %v3347
        %v3351 = vmul.f32 %v3350, 0.6931472
        %v3354 = vrot.slane %v3349, 5
        %v3355 = vrot.slane %v3354, 4
        %v3356 = vrot.slane %v3351, 5
        %v3357 = vrot.slane %v3356, 4
        %v3360 = vsub.f32 %v3349, %v3355
        %v3361 = vsub.f32 %v3351, %v3357
        %v3362 = vrot.slane %v3349, 6
        %v3363 = vrot.slane %v3362, 4
        %v3364 = vrot.slane %v3351, 6
        %v3365 = vrot.slane %v3364, 4
        %v3368 = vsub.f32 %v3349, %v3363
        %v3369 = vsub.f32 %v3351, %v3365
        %v3372 = vlaneseq
        %v3373 = vshrl.u32 %v3372, 7
        %v3374 = vsub.s32 0, %v3373
        %v3375 = vrot.slane %v3360, %v3374
        %v3376 = vlaneseq
        %v3377 = vshrl.u32 %v3376, 7
        %v3378 = vsub.s32 4, %v3377
        %v3379 = vrot.slane %v3360, %v3378
        %v3380 = vlaneseq
        %v3381 = vshrl.u32 %v3380, 7
        %v3382 = vsub.s32 0, %v3381
        %v3383 = vrot.slane %v3361, %v3382
        %v3384 = vlaneseq
        %v3385 = vshrl.u32 %v3384, 7
        %v3386 = vsub.s32 4, %v3385
        %v3387 = vrot.slane %v3361, %v3386
        %v3392 = vsub.f32 %v3243, %v3375
        %v3393 = vsub.f32 %v3245, %v3379
        %v3394 = vsub.f32 %v3314, %v3383
        %v3395 = vsub.f32 %v3316, %v3387
        %v3396 = vand.u32 2147483647, %v3392
        %v3397 = vand.u32 2147483647, %v3393
        %v3398 = vand.u32 2147483647, %v3394
        %v3399 = vand.u32 2147483647, %v3395
        %vm3400 = vcmp.lt.f32.partialorder %v3396, 0.01
        %vm3401 = vcmp.lt.f32.partialorder %v3397, 0.01
        %vm3402 = vcmp.lt.f32.partialorder %v3398, 0.01
        %vm3403 = vcmp.lt.f32.partialorder %v3399, 0.01
        %v3404 = vmul.f32 %v3396, 0.5
        %v3405 = vmul.f32 %v3397, 0.5
        %v3406 = vmul.f32 %v3398, 0.5
        %v3407 = vmul.f32 %v3399, 0.5
        %v3408 = vmul.f32 %v3404, %v3396
        %v3409 = vmul.f32 %v3405, %v3397
        %v3410 = vmul.f32 %v3406, %v3398
        %v3411 = vmul.f32 %v3407, %v3399
        %v3412 = vmul.f32 %v3408, %v2615
        %v3413 = vmul.f32 %v3409, %v2615
        %v3414 = vmul.f32 %v3410, %v2615
        %v3415 = vmul.f32 %v3411, %v2615
        %v3416 = vsub.f32 %v3396, 0.005
        %v3417 = vsub.f32 %v3397, 0.005
        %v3418 = vsub.f32 %v3398, 0.005
        %v3419 = vsub.f32 %v3399, 0.005
        %v3420 = vsel %vm3400, %v3412, %v3416
        %v3421 = vsel %vm3401, %v3413, %v3417
        %v3422 = vsel %vm3402, %v3414, %v3418
        %v3423 = vsel %vm3403, %v3415, %v3419
        %v3426 = vlaneseq
        %v3427 = vshrl.u32 %v3426, 7
        %v3428 = vsub.s32 0, %v3427
        %v3429 = vrot.slane %v3332, %v3428
        %v3430 = vlaneseq
        %v3431 = vshrl.u32 %v3430, 7
        %v3432 = vsub.s32 4, %v3431
        %v3433 = vrot.slane %v3332, %v3432
        %v3434 = vlaneseq
        %v3435 = vshrl.u32 %v3434, 7
        %v3436 = vsub.s32 0, %v3435
        %v3437 = vrot.slane %v3333, %v3436
        %v3438 = vlaneseq
        %v3439 = vshrl.u32 %v3438, 7
        %v3440 = vsub.s32 4, %v3439
        %v3441 = vrot.slane %v3333, %v3440
        %v3446 = vmul.f32 %v3420, %v3429
        %v3447 = vmul.f32 %v3421, %v3433
        %v3448 = vmul.f32 %v3422, %v3437
        %v3449 = vmul.f32 %v3423, %v3441
        %v3452 = vlaneseq
        %v3453 = vshrl.u32 %v3452, 7
        %v3454 = vsub.s32 0, %v3453
        %v3455 = vrot.slane %v3368, %v3454
        %v3456 = vlaneseq
        %v3457 = vshrl.u32 %v3456, 7
        %v3458 = vsub.s32 4, %v3457
        %v3459 = vrot.slane %v3368, %v3458
        %v3460 = vlaneseq
        %v3461 = vshrl.u32 %v3460, 7
        %v3462 = vsub.s32 0, %v3461
        %v3463 = vrot.slane %v3369, %v3462
        %v3464 = vlaneseq
        %v3465 = vshrl.u32 %v3464, 7
        %v3466 = vsub.s32 4, %v3465
        %v3467 = vrot.slane %v3369, %v3466
        %v3472 = vsub.f32 %v3243, %v3455
        %v3473 = vsub.f32 %v3245, %v3459
        %v3474 = vsub.f32 %v3314, %v3463
        %v3475 = vsub.f32 %v3316, %v3467
        %v3476 = vand.u32 2147483647, %v3472
        %v3477 = vand.u32 2147483647, %v3473
        %v3478 = vand.u32 2147483647, %v3474
        %v3479 = vand.u32 2147483647, %v3475
        %vm3480 = vcmp.lt.f32.partialorder %v3476, 0.01
        %vm3481 = vcmp.lt.f32.partialorder %v3477, 0.01
        %vm3482 = vcmp.lt.f32.partialorder %v3478, 0.01
        %vm3483 = vcmp.lt.f32.partialorder %v3479, 0.01
        %v3484 = vmul.f32 %v3476, 0.5
        %v3485 = vmul.f32 %v3477, 0.5
        %v3486 = vmul.f32 %v3478, 0.5
        %v3487 = vmul.f32 %v3479, 0.5
        %v3488 = vmul.f32 %v3484, %v3476
        %v3489 = vmul.f32 %v3485, %v3477
        %v3490 = vmul.f32 %v3486, %v3478
        %v3491 = vmul.f32 %v3487, %v3479
        %v3492 = vmul.f32 %v3488, %v2615
        %v3493 = vmul.f32 %v3489, %v2615
        %v3494 = vmul.f32 %v3490, %v2615
        %v3495 = vmul.f32 %v3491, %v2615
        %v3496 = vsub.f32 %v3476, 0.005
        %v3497 = vsub.f32 %v3477, 0.005
        %v3498 = vsub.f32 %v3478, 0.005
        %v3499 = vsub.f32 %v3479, 0.005
        %v3500 = vsel %vm3480, %v3492, %v3496
        %v3501 = vsel %vm3481, %v3493, %v3497
        %v3502 = vsel %vm3482, %v3494, %v3498
        %v3503 = vsel %vm3483, %v3495, %v3499
        %v3506 = vlaneseq
        %v3507 = vshrl.u32 %v3506, 7
        %v3508 = vsub.s32 0, %v3507
        %v3509 = vrot.slane %v3344, %v3508
        %v3510 = vlaneseq
        %v3511 = vshrl.u32 %v3510, 7
        %v3512 = vsub.s32 4, %v3511
        %v3513 = vrot.slane %v3344, %v3512
        %v3514 = vlaneseq
        %v3515 = vshrl.u32 %v3514, 7
        %v3516 = vsub.s32 0, %v3515
        %v3517 = vrot.slane %v3345, %v3516
        %v3518 = vlaneseq
        %v3519 = vshrl.u32 %v3518, 7
        %v3520 = vsub.s32 4, %v3519
        %v3521 = vrot.slane %v3345, %v3520
        %v3526 = vmul.f32 %v3500, %v3509
        %v3527 = vmul.f32 %v3501, %v3513
        %v3528 = vmul.f32 %v3502, %v3517
        %v3529 = vmul.f32 %v3503, %v3521
        %v3534 = vrot.slane %v3526, 1
        %v3535 = vrot.slane %v3527, 1
        %v3536 = vrot.slane %v3528, 1
        %v3537 = vrot.slane %v3529, 1
        %v3542 = vadd.f32 %v3446, %v3534
        %v3543 = vadd.f32 %v3447, %v3535
        %v3544 = vadd.f32 %v3448, %v3536
        %v3545 = vadd.f32 %v3449, %v3537
        %v3546 = vadd.f32 %v3332, %v3344
        %v3547 = vadd.f32 %v3333, %v3345
        %v3548 = vsel %vm2752, %v3542, 0.0
        %v3549 = vsel %vm2752, %v3543, 0.0
        %v3550 = vadd.f32 %v3548, %v3549
        %v3551 = vsel %vm2752, %v3544, 0.0
        %v3552 = vadd.f32 %v3550, %v3551
        %v3553 = vsel %vm2752, %v3545, 0.0
        %v3554 = vadd.f32 %v3552, %v3553
        %3555 = vadd.xlane.f32.xlu0 %v3554
        %v3556 = vpop.xlane.xlu0 %3555
        %v3557 = vrot.slane %v3556, 4
        %v3558 = vadd.f32 %v3556, %v3557
        %v3559 = vrot.slane %v3558, 2
        %v3560 = vadd.f32 %v3558, %v3559
        %v3561 = vrot.slane %v3560, 1
        %v3562 = vadd.f32 %v3560, %v3561
        %s3563 = vtos %v3562
        %v3566 = vlaneseq
        %v3567 = vshrl.u32 %v3566, 7
        %v3568 = vsub.s32 0, %v3567
        %v3569 = vrot.slane %v3546, %v3568
        %v3570 = vlaneseq
        %v3571 = vshrl.u32 %v3570, 7
        %v3572 = vsub.s32 4, %v3571
        %v3573 = vrot.slane %v3546, %v3572
        %v3574 = vlaneseq
        %v3575 = vshrl.u32 %v3574, 7
        %v3576 = vsub.s32 0, %v3575
        %v3577 = vrot.slane %v3547, %v3576
        %v3578 = vlaneseq
        %v3579 = vshrl.u32 %v3578, 7
        %v3580 = vsub.s32 4, %v3579
        %v3581 = vrot.slane %v3547, %v3580
        %v3586 = vsel %vm2752, %v3569, 0.0
        %v3587 = vsel %vm2752, %v3573, 0.0
        %v3588 = vadd.f32 %v3586, %v3587
        %v3589 = vsel %vm2752, %v3577, 0.0
        %v3590 = vadd.f32 %v3588, %v3589
        %v3591 = vsel %vm2752, %v3581, 0.0
        %v3592 = vadd.f32 %v3590, %v3591
        %3593 = vadd.xlane.f32.xlu0 %v3592
        %v3594 = vpop.xlane.xlu0 %3593
        %v3595 = vrot.slane %v3594, 4
        %v3596 = vadd.f32 %v3594, %v3595
        %v3597 = vrot.slane %v3596, 2
        %v3598 = vadd.f32 %v3596, %v3597
        %v3599 = vrot.slane %v3598, 1
        %v3600 = vadd.f32 %v3598, %v3599
        %s3601 = vtos %v3600
        %v3602 = vmul.f32 %v1606, %v1635
        %v3603 = vmul.f32 %v1608, %v1636
        %v3604 = vmul.f32 %v1610, %v1637
        %v3605 = vmul.f32 %v1612, %v1638
        %v3606 = vmul.f32 %v1614, %v1639
        %v3607 = vmul.f32 %v3602, %v1686
        %v3608 = vmul.f32 %v3603, %v1694
        %v3609 = vmul.f32 %v3604, %v1695
        %v3610 = vmul.f32 %v3605, %v1696
        %v3611 = vmul.f32 %v3606, %v1692
        %v3612 = vmul.f32 %v3602, %v1728
        %v3613 = vmul.f32 %v3603, %v1736
        %v3614 = vmul.f32 %v3604, %v1737
        %v3615 = vmul.f32 %v3605, %v1738
        %v3616 = vmul.f32 %v3606, %v1734
        %v3617 = vmul.f32 %v3602, %v1770
        %v3618 = vmul.f32 %v3603, %v1778
        %v3619 = vmul.f32 %v3604, %v1779
        %v3620 = vmul.f32 %v3605, %v1780
        %v3621 = vmul.f32 %v3606, %v1776
        %v3622 = vmul.f32 %v3602, %v1812
        %v3623 = vmul.f32 %v3603, %v1820
        %v3624 = vmul.f32 %v3604, %v1821
        %v3625 = vmul.f32 %v3605, %v1822
        %v3626 = vmul.f32 %v3606, %v1818
        %v3627 = vmul.f32 %v3602, %v1854
        %v3628 = vmul.f32 %v3603, %v1862
        %v3629 = vmul.f32 %v3604, %v1863
        %v3630 = vmul.f32 %v3605, %v1864
        %v3631 = vmul.f32 %v3606, %v1860
        %v3632 = vmul.f32 %v3602, %v1896
        %v3633 = vmul.f32 %v3603, %v1904
        %v3634 = vmul.f32 %v3604, %v1905
        %v3635 = vmul.f32 %v3605, %v1906
        %v3636 = vmul.f32 %v3606, %v1902
        %v3637 = vmul.f32 %v3602, %v1938
        %v3638 = vmul.f32 %v3603, %v1946
        %v3639 = vmul.f32 %v3604, %v1947
        %v3640 = vmul.f32 %v3605, %v1948
        %v3641 = vmul.f32 %v3606, %v1944
        %v3642 = vmul.f32 %v3602, %v1980
        %v3643 = vmul.f32 %v3603, %v1988
        %v3644 = vmul.f32 %v3604, %v1989
        %v3645 = vmul.f32 %v3605, %v1990
        %v3646 = vmul.f32 %v3606, %v1986
        %v3647 = vmul.f32 %v3602, %v2022
        %v3648 = vmul.f32 %v3603, %v2030
        %v3649 = vmul.f32 %v3604, %v2031
        %v3650 = vmul.f32 %v3605, %v2032
        %v3651 = vmul.f32 %v3606, %v2028
        %3657 = vrot.lane.b32.xlu0 %v3612, 127
        %v3658 = vpop.permute.xlu0 %3657
        %3659 = vrot.lane.b32.xlu0 %v3613, 127
        %v3660 = vpop.permute.xlu0 %3659
        %3661 = vrot.lane.b32.xlu0 %v3614, 127
        %v3662 = vpop.permute.xlu0 %3661
        %3663 = vrot.lane.b32.xlu0 %v3615, 127
        %v3664 = vpop.permute.xlu0 %3663
        %3665 = vrot.lane.b32.xlu0 %v3616, 127
        %v3666 = vpop.permute.xlu0 %3665
        %v3667 = vsel %vm2058, %v3658, %v3660
        %v3668 = vsel %vm2058, %v3660, %v3662
        %v3669 = vsel %vm2058, %v3662, %v3664
        %v3670 = vsel %vm2058, %v3664, %v3666
        %3676 = vrot.lane.b32.xlu0 %v3617, 126
        %v3677 = vpop.permute.xlu0 %3676
        %3678 = vrot.lane.b32.xlu0 %v3618, 126
        %v3679 = vpop.permute.xlu0 %3678
        %3680 = vrot.lane.b32.xlu0 %v3619, 126
        %v3681 = vpop.permute.xlu0 %3680
        %3682 = vrot.lane.b32.xlu0 %v3620, 126
        %v3683 = vpop.permute.xlu0 %3682
        %3684 = vrot.lane.b32.xlu0 %v3621, 126
        %v3685 = vpop.permute.xlu0 %3684
        %v3686 = vsel %vm2078, %v3677, %v3679
        %v3687 = vsel %vm2078, %v3679, %v3681
        %v3688 = vsel %vm2078, %v3681, %v3683
        %v3689 = vsel %vm2078, %v3683, %v3685
        %3695 = vrot.lane.b32.xlu0 %v3622, 112
        %v3696 = vpop.permute.xlu0 %3695
        %3697 = vrot.lane.b32.xlu0 %v3623, 112
        %v3698 = vpop.permute.xlu0 %3697
        %3699 = vrot.lane.b32.xlu0 %v3624, 112
        %v3700 = vpop.permute.xlu0 %3699
        %3701 = vrot.lane.b32.xlu0 %v3625, 112
        %v3702 = vpop.permute.xlu0 %3701
        %3703 = vrot.lane.b32.xlu0 %v3626, 112
        %v3704 = vpop.permute.xlu0 %3703
        %v3705 = vsel %vm2098, %v3696, %v3698
        %v3706 = vsel %vm2098, %v3698, %v3700
        %v3707 = vsel %vm2098, %v3700, %v3702
        %v3708 = vsel %vm2098, %v3702, %v3704
        %3714 = vrot.lane.b32.xlu0 %v3627, 111
        %v3715 = vpop.permute.xlu0 %3714
        %3716 = vrot.lane.b32.xlu0 %v3628, 111
        %v3717 = vpop.permute.xlu0 %3716
        %3718 = vrot.lane.b32.xlu0 %v3629, 111
        %v3719 = vpop.permute.xlu0 %3718
        %3720 = vrot.lane.b32.xlu0 %v3630, 111
        %v3721 = vpop.permute.xlu0 %3720
        %3722 = vrot.lane.b32.xlu0 %v3631, 111
        %v3723 = vpop.permute.xlu0 %3722
        %v3724 = vsel %vm2118, %v3715, %v3717
        %v3725 = vsel %vm2118, %v3717, %v3719
        %v3726 = vsel %vm2118, %v3719, %v3721
        %v3727 = vsel %vm2118, %v3721, %v3723
        %3733 = vrot.lane.b32.xlu0 %v3632, 110
        %v3734 = vpop.permute.xlu0 %3733
        %3735 = vrot.lane.b32.xlu0 %v3633, 110
        %v3736 = vpop.permute.xlu0 %3735
        %3737 = vrot.lane.b32.xlu0 %v3634, 110
        %v3738 = vpop.permute.xlu0 %3737
        %3739 = vrot.lane.b32.xlu0 %v3635, 110
        %v3740 = vpop.permute.xlu0 %3739
        %3741 = vrot.lane.b32.xlu0 %v3636, 110
        %v3742 = vpop.permute.xlu0 %3741
        %v3743 = vsel %vm2138, %v3734, %v3736
        %v3744 = vsel %vm2138, %v3736, %v3738
        %v3745 = vsel %vm2138, %v3738, %v3740
        %v3746 = vsel %vm2138, %v3740, %v3742
        %3752 = vrot.lane.b32.xlu0 %v3637, 96
        %v3753 = vpop.permute.xlu0 %3752
        %3754 = vrot.lane.b32.xlu0 %v3638, 96
        %v3755 = vpop.permute.xlu0 %3754
        %3756 = vrot.lane.b32.xlu0 %v3639, 96
        %v3757 = vpop.permute.xlu0 %3756
        %3758 = vrot.lane.b32.xlu0 %v3640, 96
        %v3759 = vpop.permute.xlu0 %3758
        %3760 = vrot.lane.b32.xlu0 %v3641, 96
        %v3761 = vpop.permute.xlu0 %3760
        %v3762 = vsel %vm2158, %v3753, %v3755
        %v3763 = vsel %vm2158, %v3755, %v3757
        %v3764 = vsel %vm2158, %v3757, %v3759
        %v3765 = vsel %vm2158, %v3759, %v3761
        %3771 = vrot.lane.b32.xlu0 %v3642, 95
        %v3772 = vpop.permute.xlu0 %3771
        %3773 = vrot.lane.b32.xlu0 %v3643, 95
        %v3774 = vpop.permute.xlu0 %3773
        %3775 = vrot.lane.b32.xlu0 %v3644, 95
        %v3776 = vpop.permute.xlu0 %3775
        %3777 = vrot.lane.b32.xlu0 %v3645, 95
        %v3778 = vpop.permute.xlu0 %3777
        %3779 = vrot.lane.b32.xlu0 %v3646, 95
        %v3780 = vpop.permute.xlu0 %3779
        %v3781 = vsel %vm2178, %v3772, %v3774
        %v3782 = vsel %vm2178, %v3774, %v3776
        %v3783 = vsel %vm2178, %v3776, %v3778
        %v3784 = vsel %vm2178, %v3778, %v3780
        %3790 = vrot.lane.b32.xlu0 %v3647, 94
        %v3791 = vpop.permute.xlu0 %3790
        %3792 = vrot.lane.b32.xlu0 %v3648, 94
        %v3793 = vpop.permute.xlu0 %3792
        %3794 = vrot.lane.b32.xlu0 %v3649, 94
        %v3795 = vpop.permute.xlu0 %3794
        %3796 = vrot.lane.b32.xlu0 %v3650, 94
        %v3797 = vpop.permute.xlu0 %3796
        %3798 = vrot.lane.b32.xlu0 %v3651, 94
        %v3799 = vpop.permute.xlu0 %3798
        %v3800 = vsel %vm2198, %v3791, %v3793
        %v3801 = vsel %vm2198, %v3793, %v3795
        %v3802 = vsel %vm2198, %v3795, %v3797
        %v3803 = vsel %vm2198, %v3797, %v3799
        %3809 = vrot.lane.b32.xlu0 %v3607, 81
        %v3810 = vpop.permute.xlu0 %3809
        %3811 = vrot.lane.b32.xlu0 %v3608, 81
        %v3812 = vpop.permute.xlu0 %3811
        %3813 = vrot.lane.b32.xlu0 %v3609, 81
        %v3814 = vpop.permute.xlu0 %3813
        %3815 = vrot.lane.b32.xlu0 %v3610, 81
        %v3816 = vpop.permute.xlu0 %3815
        %3817 = vrot.lane.b32.xlu0 %v3611, 81
        %v3818 = vpop.permute.xlu0 %3817
        %3819 = vrot.lane.b32.xlu0 %v3667, 81
        %v3820 = vpop.permute.xlu0 %3819
        %3821 = vrot.lane.b32.xlu0 %v3668, 81
        %v3822 = vpop.permute.xlu0 %3821
        %3823 = vrot.lane.b32.xlu0 %v3669, 81
        %v3824 = vpop.permute.xlu0 %3823
        %3825 = vrot.lane.b32.xlu0 %v3670, 81
        %v3826 = vpop.permute.xlu0 %3825
        %3827 = vrot.lane.b32.xlu0 %v3666, 81
        %v3828 = vpop.permute.xlu0 %3827
        %3829 = vrot.lane.b32.xlu0 %v3686, 81
        %v3830 = vpop.permute.xlu0 %3829
        %3831 = vrot.lane.b32.xlu0 %v3687, 81
        %v3832 = vpop.permute.xlu0 %3831
        %3833 = vrot.lane.b32.xlu0 %v3688, 81
        %v3834 = vpop.permute.xlu0 %3833
        %3835 = vrot.lane.b32.xlu0 %v3689, 81
        %v3836 = vpop.permute.xlu0 %3835
        %3837 = vrot.lane.b32.xlu0 %v3685, 81
        %v3838 = vpop.permute.xlu0 %3837
        %3839 = vrot.lane.b32.xlu0 %v3705, 81
        %v3840 = vpop.permute.xlu0 %3839
        %3841 = vrot.lane.b32.xlu0 %v3706, 81
        %v3842 = vpop.permute.xlu0 %3841
        %3843 = vrot.lane.b32.xlu0 %v3707, 81
        %v3844 = vpop.permute.xlu0 %3843
        %3845 = vrot.lane.b32.xlu0 %v3708, 81
        %v3846 = vpop.permute.xlu0 %3845
        %3847 = vrot.lane.b32.xlu0 %v3704, 81
        %v3848 = vpop.permute.xlu0 %3847
        %3849 = vrot.lane.b32.xlu0 %v3724, 81
        %v3850 = vpop.permute.xlu0 %3849
        %3851 = vrot.lane.b32.xlu0 %v3725, 81
        %v3852 = vpop.permute.xlu0 %3851
        %3853 = vrot.lane.b32.xlu0 %v3726, 81
        %v3854 = vpop.permute.xlu0 %3853
        %3855 = vrot.lane.b32.xlu0 %v3727, 81
        %v3856 = vpop.permute.xlu0 %3855
        %3857 = vrot.lane.b32.xlu0 %v3723, 81
        %v3858 = vpop.permute.xlu0 %3857
        %3859 = vrot.lane.b32.xlu0 %v3743, 81
        %v3860 = vpop.permute.xlu0 %3859
        %3861 = vrot.lane.b32.xlu0 %v3744, 81
        %v3862 = vpop.permute.xlu0 %3861
        %3863 = vrot.lane.b32.xlu0 %v3745, 81
        %v3864 = vpop.permute.xlu0 %3863
        %3865 = vrot.lane.b32.xlu0 %v3746, 81
        %v3866 = vpop.permute.xlu0 %3865
        %3867 = vrot.lane.b32.xlu0 %v3742, 81
        %v3868 = vpop.permute.xlu0 %3867
        %3869 = vrot.lane.b32.xlu0 %v3762, 81
        %v3870 = vpop.permute.xlu0 %3869
        %3871 = vrot.lane.b32.xlu0 %v3763, 81
        %v3872 = vpop.permute.xlu0 %3871
        %3873 = vrot.lane.b32.xlu0 %v3764, 81
        %v3874 = vpop.permute.xlu0 %3873
        %3875 = vrot.lane.b32.xlu0 %v3765, 81
        %v3876 = vpop.permute.xlu0 %3875
        %3877 = vrot.lane.b32.xlu0 %v3761, 81
        %v3878 = vpop.permute.xlu0 %3877
        %3879 = vrot.lane.b32.xlu0 %v3781, 81
        %v3880 = vpop.permute.xlu0 %3879
        %3881 = vrot.lane.b32.xlu0 %v3782, 81
        %v3882 = vpop.permute.xlu0 %3881
        %3883 = vrot.lane.b32.xlu0 %v3783, 81
        %v3884 = vpop.permute.xlu0 %3883
        %3885 = vrot.lane.b32.xlu0 %v3784, 81
        %v3886 = vpop.permute.xlu0 %3885
        %3887 = vrot.lane.b32.xlu0 %v3780, 81
        %v3888 = vpop.permute.xlu0 %3887
        %3889 = vrot.lane.b32.xlu0 %v3800, 81
        %v3890 = vpop.permute.xlu0 %3889
        %3891 = vrot.lane.b32.xlu0 %v3801, 81
        %v3892 = vpop.permute.xlu0 %3891
        %3893 = vrot.lane.b32.xlu0 %v3802, 81
        %v3894 = vpop.permute.xlu0 %3893
        %3895 = vrot.lane.b32.xlu0 %v3803, 81
        %v3896 = vpop.permute.xlu0 %3895
        %3897 = vrot.lane.b32.xlu0 %v3799, 81
        %v3898 = vpop.permute.xlu0 %3897
        %v3899 = vsel %vm2029, %v3810, %v3812
        %v3900 = vsel %vm2029, %v3812, %v3814
        %v3901 = vsel %vm2029, %v3814, %v3816
        %v3902 = vsel %vm2029, %v3816, %v3818
        %v3903 = vsel %vm2029, %v3820, %v3822
        %v3904 = vsel %vm2029, %v3822, %v3824
        %v3905 = vsel %vm2029, %v3824, %v3826
        %v3906 = vsel %vm2029, %v3826, %v3828
        %v3907 = vsel %vm2029, %v3830, %v3832
        %v3908 = vsel %vm2029, %v3832, %v3834
        %v3909 = vsel %vm2029, %v3834, %v3836
        %v3910 = vsel %vm2029, %v3836, %v3838
        %v3911 = vsel %vm2029, %v3840, %v3842
        %v3912 = vsel %vm2029, %v3842, %v3844
        %v3913 = vsel %vm2029, %v3844, %v3846
        %v3914 = vsel %vm2029, %v3846, %v3848
        %v3915 = vsel %vm2029, %v3850, %v3852
        %v3916 = vsel %vm2029, %v3852, %v3854
        %v3917 = vsel %vm2029, %v3854, %v3856
        %v3918 = vsel %vm2029, %v3856, %v3858
        %v3919 = vsel %vm2029, %v3860, %v3862
        %v3920 = vsel %vm2029, %v3862, %v3864
        %v3921 = vsel %vm2029, %v3864, %v3866
        %v3922 = vsel %vm2029, %v3866, %v3868
        %v3923 = vsel %vm2029, %v3870, %v3872
        %v3924 = vsel %vm2029, %v3872, %v3874
        %v3925 = vsel %vm2029, %v3874, %v3876
        %v3926 = vsel %vm2029, %v3876, %v3878
        %v3927 = vsel %vm2029, %v3880, %v3882
        %v3928 = vsel %vm2029, %v3882, %v3884
        %v3929 = vsel %vm2029, %v3884, %v3886
        %v3930 = vsel %vm2029, %v3886, %v3888
        %v3931 = vsel %vm2029, %v3890, %v3892
        %v3932 = vsel %vm2029, %v3892, %v3894
        %v3933 = vsel %vm2029, %v3894, %v3896
        %v3934 = vsel %vm2029, %v3896, %v3898
        %3971 = vmatprep.subr.mxu0 0.0
        %3972 = vmatpush1.msra.mxu0 0.0
        %3973 = vmatprep.subr.mxu0 0.0
        %3974 = vmatpush1.msra.mxu0 0.0
        %3975 = vmatprep.subr.mxu0 0.0
        %3976 = vmatpush1.msra.mxu0 0.0
        %3977 = vmatprep.subr.mxu0 0.0
        %3978 = vmatpush1.msra.mxu0 0.0
        %3979 = vmatprep.subr.mxu0 0.0
        %3980 = vmatpush1.msra.mxu0 0.0
        %3981 = vmatprep.subr.mxu0 0.0
        %3982 = vmatpush1.msra.mxu0 0.0
        %3983 = vmatprep.subr.mxu0 0.0
        %3984 = vmatpush1.msra.mxu0 0.0
        %3985 = vmatprep.subr.mxu0 %v3932
        %3986 = vmatpush1.msra.mxu0 %v3931
        %3987 = vmatprep.subr.mxu0 %v3928
        %3988 = vmatpush1.msra.mxu0 %v3927
        %3989 = vmatprep.subr.mxu0 %v3924
        %3990 = vmatpush1.msra.mxu0 %v3923
        %3991 = vmatprep.subr.mxu0 %v3920
        %3992 = vmatpush1.msra.mxu0 %v3919
        %3993 = vmatprep.subr.mxu0 %v3916
        %3994 = vmatpush1.msra.mxu0 %v3915
        %3995 = vmatprep.subr.mxu0 %v3912
        %3996 = vmatpush1.msra.mxu0 %v3911
        %3997 = vmatprep.subr.mxu0 %v3908
        %3998 = vmatpush1.msra.mxu0 %v3907
        %3999 = vmatprep.subr.mxu0 %v3904
        %4000 = vmatpush1.msra.mxu0 %v3903
        %4001 = vmatprep.subr.mxu0 %v3900
        %4002 = vmatpush1.msra.mxu0 %v3899
        %4003 = vmatprep.subr.mxu0 0.0
        %4004 = vmatpush2.msra.mxu0 0.0
        %4005 = vmatprep.subr.mxu0 0.0
        %4006 = vmatpush2.msra.mxu0 0.0
        %4007 = vmatprep.subr.mxu0 0.0
        %4008 = vmatpush2.msra.mxu0 0.0
        %4009 = vmatprep.subr.mxu0 0.0
        %4010 = vmatpush2.msra.mxu0 0.0
        %4011 = vmatprep.subr.mxu0 0.0
        %4012 = vmatpush2.msra.mxu0 0.0
        %4013 = vmatprep.subr.mxu0 0.0
        %4014 = vmatpush2.msra.mxu0 0.0
        %4015 = vmatprep.subr.mxu0 0.0
        %4016 = vmatpush2.msra.mxu0 0.0
        %4017 = vmatprep.subr.mxu0 0.0
        %4018 = vmatpush2.msra.mxu0 0.0
        %4019 = vmatprep.subr.mxu0 0.0
        %4020 = vmatpush2.msra.mxu0 0.0
        %4021 = vmatprep.subr.mxu0 0.0
        %4022 = vmatpush2.msra.mxu0 0.0
        %4023 = vmatprep.subr.mxu0 0.0
        %4024 = vmatpush2.msra.mxu0 0.0
        %4025 = vmatprep.subr.mxu0 0.0
        %4026 = vmatpush2.msra.mxu0 0.0
        %4027 = vmatprep.subr.mxu0 0.0
        %4028 = vmatpush2.msra.mxu0 0.0
        %4029 = vmatprep.subr.mxu0 0.0
        %4030 = vmatpush2.msra.mxu0 0.0
        %4031 = vmatprep.subr.mxu0 0.0
        %4032 = vmatpush2.msra.mxu0 0.0
        %4033 = vmatprep.subr.mxu0 0.0
        %4034 = vmatpush2.msra.mxu0 0.0
        %4035 = vmatprep.mubr.f32.mxu0 0.0
        %4036 = vmatmul.mubr.f32.gmra.mxu0 %v2377
        %v4037 = vpop.f32.mrf.mxu0
        %v4038 = vadd.f32 %v2206, %v4037
        %v4039 = vpop.f32.mrf.mxu0
        %v4040 = vadd.f32 %v2206, %v4039
        %4041 = vdwg.mxu0
        %4042 = vmatprep.subr.mxu0 0.0
        %4043 = vmatpush1.msra.mxu0 0.0
        %4044 = vmatprep.subr.mxu0 0.0
        %4045 = vmatpush1.msra.mxu0 0.0
        %4046 = vmatprep.subr.mxu0 0.0
        %4047 = vmatpush1.msra.mxu0 0.0
        %4048 = vmatprep.subr.mxu0 0.0
        %4049 = vmatpush1.msra.mxu0 0.0
        %4050 = vmatprep.subr.mxu0 0.0
        %4051 = vmatpush1.msra.mxu0 0.0
        %4052 = vmatprep.subr.mxu0 0.0
        %4053 = vmatpush1.msra.mxu0 0.0
        %4054 = vmatprep.subr.mxu0 0.0
        %4055 = vmatpush1.msra.mxu0 0.0
        %4056 = vmatprep.subr.mxu0 %v3934
        %4057 = vmatpush1.msra.mxu0 %v3933
        %4058 = vmatprep.subr.mxu0 %v3930
        %4059 = vmatpush1.msra.mxu0 %v3929
        %4060 = vmatprep.subr.mxu0 %v3926
        %4061 = vmatpush1.msra.mxu0 %v3925
        %4062 = vmatprep.subr.mxu0 %v3922
        %4063 = vmatpush1.msra.mxu0 %v3921
        %4064 = vmatprep.subr.mxu0 %v3918
        %4065 = vmatpush1.msra.mxu0 %v3917
        %4066 = vmatprep.subr.mxu0 %v3914
        %4067 = vmatpush1.msra.mxu0 %v3913
        %4068 = vmatprep.subr.mxu0 %v3910
        %4069 = vmatpush1.msra.mxu0 %v3909
        %4070 = vmatprep.subr.mxu0 %v3906
        %4071 = vmatpush1.msra.mxu0 %v3905
        %4072 = vmatprep.subr.mxu0 %v3902
        %4073 = vmatpush1.msra.mxu0 %v3901
        %4074 = vmatprep.subr.mxu0 0.0
        %4075 = vmatpush2.msra.mxu0 0.0
        %4076 = vmatprep.subr.mxu0 0.0
        %4077 = vmatpush2.msra.mxu0 0.0
        %4078 = vmatprep.subr.mxu0 0.0
        %4079 = vmatpush2.msra.mxu0 0.0
        %4080 = vmatprep.subr.mxu0 0.0
        %4081 = vmatpush2.msra.mxu0 0.0
        %4082 = vmatprep.subr.mxu0 0.0
        %4083 = vmatpush2.msra.mxu0 0.0
        %4084 = vmatprep.subr.mxu0 0.0
        %4085 = vmatpush2.msra.mxu0 0.0
        %4086 = vmatprep.subr.mxu0 0.0
        %4087 = vmatpush2.msra.mxu0 0.0
        %4088 = vmatprep.subr.mxu0 0.0
        %4089 = vmatpush2.msra.mxu0 0.0
        %4090 = vmatprep.subr.mxu0 0.0
        %4091 = vmatpush2.msra.mxu0 0.0
        %4092 = vmatprep.subr.mxu0 0.0
        %4093 = vmatpush2.msra.mxu0 0.0
        %4094 = vmatprep.subr.mxu0 0.0
        %4095 = vmatpush2.msra.mxu0 0.0
        %4096 = vmatprep.subr.mxu0 0.0
        %4097 = vmatpush2.msra.mxu0 0.0
        %4098 = vmatprep.subr.mxu0 0.0
        %4099 = vmatpush2.msra.mxu0 0.0
        %4100 = vmatprep.subr.mxu0 0.0
        %4101 = vmatpush2.msra.mxu0 0.0
        %4102 = vmatprep.subr.mxu0 0.0
        %4103 = vmatpush2.msra.mxu0 0.0
        %4104 = vmatprep.subr.mxu0 0.0
        %4105 = vmatpush2.msra.mxu0 0.0
        %4106 = vmatprep.mubr.f32.mxu0 0.0
        %4107 = vmatmul.mubr.f32.gmra.mxu0 %v2377
        %v4108 = vpop.f32.mrf.mxu0
        %v4109 = vadd.f32 %v2206, %v4108
        %v4110 = vpop.f32.mrf.mxu0
        %v4111 = vadd.f32 %v2206, %v4110
        %4112 = vdwg.mxu0
        %vm4113 = vcmp.gt.f32.partialorder %v1654, 0.1
        %vm4114 = vcmp.gt.f32.partialorder %v1655, 0.1
        %v4115 = vsel %vm4113, 1, 0
        %v4116 = vsel %vm4114, 1, 0
        %v4117 = vrot.slane %v4115, 5
        %v4118 = vrot.slane %v4117, 4
        %v4119 = vrot.slane %v4116, 5
        %v4120 = vrot.slane %v4119, 4
        %vm4121 = vcmp.ne.s32.totalorder %v4118, 0
        %vm4122 = vcmp.ne.s32.totalorder %v4120, 0
        %vm4123 = vmand %vm4113, %vm4121
        %vm4124 = vmand %vm4114, %vm4122
        %v4125 = vsel %vm4123, 1, 0
        %v4126 = vsel %vm4124, 1, 0
        %v4127 = vcvt.s32.f32 %v4125
        %v4128 = vcvt.s32.f32 %v4126
        %v4129 = vrot.slane %v4115, 6
        %v4130 = vrot.slane %v4129, 4
        %v4131 = vrot.slane %v4116, 6
        %v4132 = vrot.slane %v4131, 4
        %vm4133 = vcmp.ne.s32.totalorder %v4130, 0
        %vm4134 = vcmp.ne.s32.totalorder %v4132, 0
        %vm4135 = vmand %vm4113, %vm4133
        %vm4136 = vmand %vm4114, %vm4134
        %v4137 = vsel %vm4135, 1, 0
        %v4138 = vsel %vm4136, 1, 0
        %v4139 = vcvt.s32.f32 %v4137
        %v4140 = vcvt.s32.f32 %v4138
        %v4141 = vadd.f32 %v1654, 1e-06
        %v4142 = vadd.f32 %v1655, 1e-06
        %v4143 = vlog2.pop %v4141
        %v4144 = vmul.f32 %v4143, 0.6931472
        %v4145 = vlog2.pop %v4142
        %v4146 = vmul.f32 %v4145, 0.6931472
        %v4149 = vrot.slane %v4144, 5
        %v4150 = vrot.slane %v4149, 4
        %v4151 = vrot.slane %v4146, 5
        %v4152 = vrot.slane %v4151, 4
        %v4155 = vsub.f32 %v4144, %v4150
        %v4156 = vsub.f32 %v4146, %v4152
        %v4157 = vrot.slane %v4144, 6
        %v4158 = vrot.slane %v4157, 4
        %v4159 = vrot.slane %v4146, 6
        %v4160 = vrot.slane %v4159, 4
        %v4163 = vsub.f32 %v4144, %v4158
        %v4164 = vsub.f32 %v4146, %v4160
        %v4167 = vlaneseq
        %v4168 = vshrl.u32 %v4167, 7
        %v4169 = vsub.s32 0, %v4168
        %v4170 = vrot.slane %v4155, %v4169
        %v4171 = vlaneseq
        %v4172 = vshrl.u32 %v4171, 7
        %v4173 = vsub.s32 4, %v4172
        %v4174 = vrot.slane %v4155, %v4173
        %v4175 = vlaneseq
        %v4176 = vshrl.u32 %v4175, 7
        %v4177 = vsub.s32 0, %v4176
        %v4178 = vrot.slane %v4156, %v4177
        %v4179 = vlaneseq
        %v4180 = vshrl.u32 %v4179, 7
        %v4181 = vsub.s32 4, %v4180
        %v4182 = vrot.slane %v4156, %v4181
        %v4187 = vsub.f32 %v4038, %v4170
        %v4188 = vsub.f32 %v4040, %v4174
        %v4189 = vsub.f32 %v4109, %v4178
        %v4190 = vsub.f32 %v4111, %v4182
        %v4191 = vand.u32 2147483647, %v4187
        %v4192 = vand.u32 2147483647, %v4188
        %v4193 = vand.u32 2147483647, %v4189
        %v4194 = vand.u32 2147483647, %v4190
        %vm4195 = vcmp.lt.f32.partialorder %v4191, 0.01
        %vm4196 = vcmp.lt.f32.partialorder %v4192, 0.01
        %vm4197 = vcmp.lt.f32.partialorder %v4193, 0.01
        %vm4198 = vcmp.lt.f32.partialorder %v4194, 0.01
        %v4199 = vmul.f32 %v4191, 0.5
        %v4200 = vmul.f32 %v4192, 0.5
        %v4201 = vmul.f32 %v4193, 0.5
        %v4202 = vmul.f32 %v4194, 0.5
        %v4203 = vmul.f32 %v4199, %v4191
        %v4204 = vmul.f32 %v4200, %v4192
        %v4205 = vmul.f32 %v4201, %v4193
        %v4206 = vmul.f32 %v4202, %v4194
        %v4207 = vmul.f32 %v4203, %v2615
        %v4208 = vmul.f32 %v4204, %v2615
        %v4209 = vmul.f32 %v4205, %v2615
        %v4210 = vmul.f32 %v4206, %v2615
        %v4211 = vsub.f32 %v4191, 0.005
        %v4212 = vsub.f32 %v4192, 0.005
        %v4213 = vsub.f32 %v4193, 0.005
        %v4214 = vsub.f32 %v4194, 0.005
        %v4215 = vsel %vm4195, %v4207, %v4211
        %v4216 = vsel %vm4196, %v4208, %v4212
        %v4217 = vsel %vm4197, %v4209, %v4213
        %v4218 = vsel %vm4198, %v4210, %v4214
        %v4221 = vlaneseq
        %v4222 = vshrl.u32 %v4221, 7
        %v4223 = vsub.s32 0, %v4222
        %v4224 = vrot.slane %v4127, %v4223
        %v4225 = vlaneseq
        %v4226 = vshrl.u32 %v4225, 7
        %v4227 = vsub.s32 4, %v4226
        %v4228 = vrot.slane %v4127, %v4227
        %v4229 = vlaneseq
        %v4230 = vshrl.u32 %v4229, 7
        %v4231 = vsub.s32 0, %v4230
        %v4232 = vrot.slane %v4128, %v4231
        %v4233 = vlaneseq
        %v4234 = vshrl.u32 %v4233, 7
        %v4235 = vsub.s32 4, %v4234
        %v4236 = vrot.slane %v4128, %v4235
        %v4241 = vmul.f32 %v4215, %v4224
        %v4242 = vmul.f32 %v4216, %v4228
        %v4243 = vmul.f32 %v4217, %v4232
        %v4244 = vmul.f32 %v4218, %v4236
        %v4247 = vlaneseq
        %v4248 = vshrl.u32 %v4247, 7
        %v4249 = vsub.s32 0, %v4248
        %v4250 = vrot.slane %v4163, %v4249
        %v4251 = vlaneseq
        %v4252 = vshrl.u32 %v4251, 7
        %v4253 = vsub.s32 4, %v4252
        %v4254 = vrot.slane %v4163, %v4253
        %v4255 = vlaneseq
        %v4256 = vshrl.u32 %v4255, 7
        %v4257 = vsub.s32 0, %v4256
        %v4258 = vrot.slane %v4164, %v4257
        %v4259 = vlaneseq
        %v4260 = vshrl.u32 %v4259, 7
        %v4261 = vsub.s32 4, %v4260
        %v4262 = vrot.slane %v4164, %v4261
        %v4267 = vsub.f32 %v4038, %v4250
        %v4268 = vsub.f32 %v4040, %v4254
        %v4269 = vsub.f32 %v4109, %v4258
        %v4270 = vsub.f32 %v4111, %v4262
        %v4271 = vand.u32 2147483647, %v4267
        %v4272 = vand.u32 2147483647, %v4268
        %v4273 = vand.u32 2147483647, %v4269
        %v4274 = vand.u32 2147483647, %v4270
        %vm4275 = vcmp.lt.f32.partialorder %v4271, 0.01
        %vm4276 = vcmp.lt.f32.partialorder %v4272, 0.01
        %vm4277 = vcmp.lt.f32.partialorder %v4273, 0.01
        %vm4278 = vcmp.lt.f32.partialorder %v4274, 0.01
        %v4279 = vmul.f32 %v4271, 0.5
        %v4280 = vmul.f32 %v4272, 0.5
        %v4281 = vmul.f32 %v4273, 0.5
        %v4282 = vmul.f32 %v4274, 0.5
        %v4283 = vmul.f32 %v4279, %v4271
        %v4284 = vmul.f32 %v4280, %v4272
        %v4285 = vmul.f32 %v4281, %v4273
        %v4286 = vmul.f32 %v4282, %v4274
        %v4287 = vmul.f32 %v4283, %v2615
        %v4288 = vmul.f32 %v4284, %v2615
        %v4289 = vmul.f32 %v4285, %v2615
        %v4290 = vmul.f32 %v4286, %v2615
        %v4291 = vsub.f32 %v4271, 0.005
        %v4292 = vsub.f32 %v4272, 0.005
        %v4293 = vsub.f32 %v4273, 0.005
        %v4294 = vsub.f32 %v4274, 0.005
        %v4295 = vsel %vm4275, %v4287, %v4291
        %v4296 = vsel %vm4276, %v4288, %v4292
        %v4297 = vsel %vm4277, %v4289, %v4293
        %v4298 = vsel %vm4278, %v4290, %v4294
        %v4301 = vlaneseq
        %v4302 = vshrl.u32 %v4301, 7
        %v4303 = vsub.s32 0, %v4302
        %v4304 = vrot.slane %v4139, %v4303
        %v4305 = vlaneseq
        %v4306 = vshrl.u32 %v4305, 7
        %v4307 = vsub.s32 4, %v4306
        %v4308 = vrot.slane %v4139, %v4307
        %v4309 = vlaneseq
        %v4310 = vshrl.u32 %v4309, 7
        %v4311 = vsub.s32 0, %v4310
        %v4312 = vrot.slane %v4140, %v4311
        %v4313 = vlaneseq
        %v4314 = vshrl.u32 %v4313, 7
        %v4315 = vsub.s32 4, %v4314
        %v4316 = vrot.slane %v4140, %v4315
        %v4321 = vmul.f32 %v4295, %v4304
        %v4322 = vmul.f32 %v4296, %v4308
        %v4323 = vmul.f32 %v4297, %v4312
        %v4324 = vmul.f32 %v4298, %v4316
        %v4329 = vrot.slane %v4321, 1
        %v4330 = vrot.slane %v4322, 1
        %v4331 = vrot.slane %v4323, 1
        %v4332 = vrot.slane %v4324, 1
        %v4337 = vadd.f32 %v4241, %v4329
        %v4338 = vadd.f32 %v4242, %v4330
        %v4339 = vadd.f32 %v4243, %v4331
        %v4340 = vadd.f32 %v4244, %v4332
        %v4341 = vadd.f32 %v4127, %v4139
        %v4342 = vadd.f32 %v4128, %v4140
        %v4343 = vsel %vm2752, %v4337, 0.0
        %v4344 = vsel %vm2752, %v4338, 0.0
        %v4345 = vadd.f32 %v4343, %v4344
        %v4346 = vsel %vm2752, %v4339, 0.0
        %v4347 = vadd.f32 %v4345, %v4346
        %v4348 = vsel %vm2752, %v4340, 0.0
        %v4349 = vadd.f32 %v4347, %v4348
        %4350 = vadd.xlane.f32.xlu0 %v4349
        %v4351 = vpop.xlane.xlu0 %4350
        %v4352 = vrot.slane %v4351, 4
        %v4353 = vadd.f32 %v4351, %v4352
        %v4354 = vrot.slane %v4353, 2
        %v4355 = vadd.f32 %v4353, %v4354
        %v4356 = vrot.slane %v4355, 1
        %v4357 = vadd.f32 %v4355, %v4356
        %s4358 = vtos %v4357
        %v4361 = vlaneseq
        %v4362 = vshrl.u32 %v4361, 7
        %v4363 = vsub.s32 0, %v4362
        %v4364 = vrot.slane %v4341, %v4363
        %v4365 = vlaneseq
        %v4366 = vshrl.u32 %v4365, 7
        %v4367 = vsub.s32 4, %v4366
        %v4368 = vrot.slane %v4341, %v4367
        %v4369 = vlaneseq
        %v4370 = vshrl.u32 %v4369, 7
        %v4371 = vsub.s32 0, %v4370
        %v4372 = vrot.slane %v4342, %v4371
        %v4373 = vlaneseq
        %v4374 = vshrl.u32 %v4373, 7
        %v4375 = vsub.s32 4, %v4374
        %v4376 = vrot.slane %v4342, %v4375
        %v4381 = vsel %vm2752, %v4364, 0.0
        %v4382 = vsel %vm2752, %v4368, 0.0
        %v4383 = vadd.f32 %v4381, %v4382
        %v4384 = vsel %vm2752, %v4372, 0.0
        %v4385 = vadd.f32 %v4383, %v4384
        %v4386 = vsel %vm2752, %v4376, 0.0
        %v4387 = vadd.f32 %v4385, %v4386
        %4388 = vadd.xlane.f32.xlu0 %v4387
        %v4389 = vpop.xlane.xlu0 %4388
        %v4390 = vrot.slane %v4389, 4
        %v4391 = vadd.f32 %v4389, %v4390
        %v4392 = vrot.slane %v4391, 2
        %v4393 = vadd.f32 %v4391, %v4392
        %v4394 = vrot.slane %v4393, 1
        %v4395 = vadd.f32 %v4393, %v4394
        %s4396 = vtos %v4395
        %v4397 = vmul.f32 %v1616, %v1635
        %v4398 = vmul.f32 %v1618, %v1636
        %v4399 = vmul.f32 %v1620, %v1637
        %v4400 = vmul.f32 %v1622, %v1638
        %v4401 = vmul.f32 %v1624, %v1639
        %v4402 = vmul.f32 %v4397, %v1686
        %v4403 = vmul.f32 %v4398, %v1694
        %v4404 = vmul.f32 %v4399, %v1695
        %v4405 = vmul.f32 %v4400, %v1696
        %v4406 = vmul.f32 %v4401, %v1692
        %v4407 = vmul.f32 %v4397, %v1728
        %v4408 = vmul.f32 %v4398, %v1736
        %v4409 = vmul.f32 %v4399, %v1737
        %v4410 = vmul.f32 %v4400, %v1738
        %v4411 = vmul.f32 %v4401, %v1734
        %v4412 = vmul.f32 %v4397, %v1770
        %v4413 = vmul.f32 %v4398, %v1778
        %v4414 = vmul.f32 %v4399, %v1779
        %v4415 = vmul.f32 %v4400, %v1780
        %v4416 = vmul.f32 %v4401, %v1776
        %v4417 = vmul.f32 %v4397, %v1812
        %v4418 = vmul.f32 %v4398, %v1820
        %v4419 = vmul.f32 %v4399, %v1821
        %v4420 = vmul.f32 %v4400, %v1822
        %v4421 = vmul.f32 %v4401, %v1818
        %v4422 = vmul.f32 %v4397, %v1854
        %v4423 = vmul.f32 %v4398, %v1862
        %v4424 = vmul.f32 %v4399, %v1863
        %v4425 = vmul.f32 %v4400, %v1864
        %v4426 = vmul.f32 %v4401, %v1860
        %v4427 = vmul.f32 %v4397, %v1896
        %v4428 = vmul.f32 %v4398, %v1904
        %v4429 = vmul.f32 %v4399, %v1905
        %v4430 = vmul.f32 %v4400, %v1906
        %v4431 = vmul.f32 %v4401, %v1902
        %v4432 = vmul.f32 %v4397, %v1938
        %v4433 = vmul.f32 %v4398, %v1946
        %v4434 = vmul.f32 %v4399, %v1947
        %v4435 = vmul.f32 %v4400, %v1948
        %v4436 = vmul.f32 %v4401, %v1944
        %v4437 = vmul.f32 %v4397, %v1980
        %v4438 = vmul.f32 %v4398, %v1988
        %v4439 = vmul.f32 %v4399, %v1989
        %v4440 = vmul.f32 %v4400, %v1990
        %v4441 = vmul.f32 %v4401, %v1986
        %v4442 = vmul.f32 %v4397, %v2022
        %v4443 = vmul.f32 %v4398, %v2030
        %v4444 = vmul.f32 %v4399, %v2031
        %v4445 = vmul.f32 %v4400, %v2032
        %v4446 = vmul.f32 %v4401, %v2028
        %4452 = vrot.lane.b32.xlu0 %v4407, 127
        %v4453 = vpop.permute.xlu0 %4452
        %4454 = vrot.lane.b32.xlu0 %v4408, 127
        %v4455 = vpop.permute.xlu0 %4454
        %4456 = vrot.lane.b32.xlu0 %v4409, 127
        %v4457 = vpop.permute.xlu0 %4456
        %4458 = vrot.lane.b32.xlu0 %v4410, 127
        %v4459 = vpop.permute.xlu0 %4458
        %4460 = vrot.lane.b32.xlu0 %v4411, 127
        %v4461 = vpop.permute.xlu0 %4460
        %v4462 = vsel %vm2058, %v4453, %v4455
        %v4463 = vsel %vm2058, %v4455, %v4457
        %v4464 = vsel %vm2058, %v4457, %v4459
        %v4465 = vsel %vm2058, %v4459, %v4461
        %4471 = vrot.lane.b32.xlu0 %v4412, 126
        %v4472 = vpop.permute.xlu0 %4471
        %4473 = vrot.lane.b32.xlu0 %v4413, 126
        %v4474 = vpop.permute.xlu0 %4473
        %4475 = vrot.lane.b32.xlu0 %v4414, 126
        %v4476 = vpop.permute.xlu0 %4475
        %4477 = vrot.lane.b32.xlu0 %v4415, 126
        %v4478 = vpop.permute.xlu0 %4477
        %4479 = vrot.lane.b32.xlu0 %v4416, 126
        %v4480 = vpop.permute.xlu0 %4479
        %v4481 = vsel %vm2078, %v4472, %v4474
        %v4482 = vsel %vm2078, %v4474, %v4476
        %v4483 = vsel %vm2078, %v4476, %v4478
        %v4484 = vsel %vm2078, %v4478, %v4480
        %4490 = vrot.lane.b32.xlu0 %v4417, 112
        %v4491 = vpop.permute.xlu0 %4490
        %4492 = vrot.lane.b32.xlu0 %v4418, 112
        %v4493 = vpop.permute.xlu0 %4492
        %4494 = vrot.lane.b32.xlu0 %v4419, 112
        %v4495 = vpop.permute.xlu0 %4494
        %4496 = vrot.lane.b32.xlu0 %v4420, 112
        %v4497 = vpop.permute.xlu0 %4496
        %4498 = vrot.lane.b32.xlu0 %v4421, 112
        %v4499 = vpop.permute.xlu0 %4498
        %v4500 = vsel %vm2098, %v4491, %v4493
        %v4501 = vsel %vm2098, %v4493, %v4495
        %v4502 = vsel %vm2098, %v4495, %v4497
        %v4503 = vsel %vm2098, %v4497, %v4499
        %4509 = vrot.lane.b32.xlu0 %v4422, 111
        %v4510 = vpop.permute.xlu0 %4509
        %4511 = vrot.lane.b32.xlu0 %v4423, 111
        %v4512 = vpop.permute.xlu0 %4511
        %4513 = vrot.lane.b32.xlu0 %v4424, 111
        %v4514 = vpop.permute.xlu0 %4513
        %4515 = vrot.lane.b32.xlu0 %v4425, 111
        %v4516 = vpop.permute.xlu0 %4515
        %4517 = vrot.lane.b32.xlu0 %v4426, 111
        %v4518 = vpop.permute.xlu0 %4517
        %v4519 = vsel %vm2118, %v4510, %v4512
        %v4520 = vsel %vm2118, %v4512, %v4514
        %v4521 = vsel %vm2118, %v4514, %v4516
        %v4522 = vsel %vm2118, %v4516, %v4518
        %4528 = vrot.lane.b32.xlu0 %v4427, 110
        %v4529 = vpop.permute.xlu0 %4528
        %4530 = vrot.lane.b32.xlu0 %v4428, 110
        %v4531 = vpop.permute.xlu0 %4530
        %4532 = vrot.lane.b32.xlu0 %v4429, 110
        %v4533 = vpop.permute.xlu0 %4532
        %4534 = vrot.lane.b32.xlu0 %v4430, 110
        %v4535 = vpop.permute.xlu0 %4534
        %4536 = vrot.lane.b32.xlu0 %v4431, 110
        %v4537 = vpop.permute.xlu0 %4536
        %v4538 = vsel %vm2138, %v4529, %v4531
        %v4539 = vsel %vm2138, %v4531, %v4533
        %v4540 = vsel %vm2138, %v4533, %v4535
        %v4541 = vsel %vm2138, %v4535, %v4537
        %4547 = vrot.lane.b32.xlu0 %v4432, 96
        %v4548 = vpop.permute.xlu0 %4547
        %4549 = vrot.lane.b32.xlu0 %v4433, 96
        %v4550 = vpop.permute.xlu0 %4549
        %4551 = vrot.lane.b32.xlu0 %v4434, 96
        %v4552 = vpop.permute.xlu0 %4551
        %4553 = vrot.lane.b32.xlu0 %v4435, 96
        %v4554 = vpop.permute.xlu0 %4553
        %4555 = vrot.lane.b32.xlu0 %v4436, 96
        %v4556 = vpop.permute.xlu0 %4555
        %v4557 = vsel %vm2158, %v4548, %v4550
        %v4558 = vsel %vm2158, %v4550, %v4552
        %v4559 = vsel %vm2158, %v4552, %v4554
        %v4560 = vsel %vm2158, %v4554, %v4556
        %4566 = vrot.lane.b32.xlu0 %v4437, 95
        %v4567 = vpop.permute.xlu0 %4566
        %4568 = vrot.lane.b32.xlu0 %v4438, 95
        %v4569 = vpop.permute.xlu0 %4568
        %4570 = vrot.lane.b32.xlu0 %v4439, 95
        %v4571 = vpop.permute.xlu0 %4570
        %4572 = vrot.lane.b32.xlu0 %v4440, 95
        %v4573 = vpop.permute.xlu0 %4572
        %4574 = vrot.lane.b32.xlu0 %v4441, 95
        %v4575 = vpop.permute.xlu0 %4574
        %v4576 = vsel %vm2178, %v4567, %v4569
        %v4577 = vsel %vm2178, %v4569, %v4571
        %v4578 = vsel %vm2178, %v4571, %v4573
        %v4579 = vsel %vm2178, %v4573, %v4575
        %4585 = vrot.lane.b32.xlu0 %v4442, 94
        %v4586 = vpop.permute.xlu0 %4585
        %4587 = vrot.lane.b32.xlu0 %v4443, 94
        %v4588 = vpop.permute.xlu0 %4587
        %4589 = vrot.lane.b32.xlu0 %v4444, 94
        %v4590 = vpop.permute.xlu0 %4589
        %4591 = vrot.lane.b32.xlu0 %v4445, 94
        %v4592 = vpop.permute.xlu0 %4591
        %4593 = vrot.lane.b32.xlu0 %v4446, 94
        %v4594 = vpop.permute.xlu0 %4593
        %v4595 = vsel %vm2198, %v4586, %v4588
        %v4596 = vsel %vm2198, %v4588, %v4590
        %v4597 = vsel %vm2198, %v4590, %v4592
        %v4598 = vsel %vm2198, %v4592, %v4594
        %4604 = vrot.lane.b32.xlu0 %v4402, 81
        %v4605 = vpop.permute.xlu0 %4604
        %4606 = vrot.lane.b32.xlu0 %v4403, 81
        %v4607 = vpop.permute.xlu0 %4606
        %4608 = vrot.lane.b32.xlu0 %v4404, 81
        %v4609 = vpop.permute.xlu0 %4608
        %4610 = vrot.lane.b32.xlu0 %v4405, 81
        %v4611 = vpop.permute.xlu0 %4610
        %4612 = vrot.lane.b32.xlu0 %v4406, 81
        %v4613 = vpop.permute.xlu0 %4612
        %4614 = vrot.lane.b32.xlu0 %v4462, 81
        %v4615 = vpop.permute.xlu0 %4614
        %4616 = vrot.lane.b32.xlu0 %v4463, 81
        %v4617 = vpop.permute.xlu0 %4616
        %4618 = vrot.lane.b32.xlu0 %v4464, 81
        %v4619 = vpop.permute.xlu0 %4618
        %4620 = vrot.lane.b32.xlu0 %v4465, 81
        %v4621 = vpop.permute.xlu0 %4620
        %4622 = vrot.lane.b32.xlu0 %v4461, 81
        %v4623 = vpop.permute.xlu0 %4622
        %4624 = vrot.lane.b32.xlu0 %v4481, 81
        %v4625 = vpop.permute.xlu0 %4624
        %4626 = vrot.lane.b32.xlu0 %v4482, 81
        %v4627 = vpop.permute.xlu0 %4626
        %4628 = vrot.lane.b32.xlu0 %v4483, 81
        %v4629 = vpop.permute.xlu0 %4628
        %4630 = vrot.lane.b32.xlu0 %v4484, 81
        %v4631 = vpop.permute.xlu0 %4630
        %4632 = vrot.lane.b32.xlu0 %v4480, 81
        %v4633 = vpop.permute.xlu0 %4632
        %4634 = vrot.lane.b32.xlu0 %v4500, 81
        %v4635 = vpop.permute.xlu0 %4634
        %4636 = vrot.lane.b32.xlu0 %v4501, 81
        %v4637 = vpop.permute.xlu0 %4636
        %4638 = vrot.lane.b32.xlu0 %v4502, 81
        %v4639 = vpop.permute.xlu0 %4638
        %4640 = vrot.lane.b32.xlu0 %v4503, 81
        %v4641 = vpop.permute.xlu0 %4640
        %4642 = vrot.lane.b32.xlu0 %v4499, 81
        %v4643 = vpop.permute.xlu0 %4642
        %4644 = vrot.lane.b32.xlu0 %v4519, 81
        %v4645 = vpop.permute.xlu0 %4644
        %4646 = vrot.lane.b32.xlu0 %v4520, 81
        %v4647 = vpop.permute.xlu0 %4646
        %4648 = vrot.lane.b32.xlu0 %v4521, 81
        %v4649 = vpop.permute.xlu0 %4648
        %4650 = vrot.lane.b32.xlu0 %v4522, 81
        %v4651 = vpop.permute.xlu0 %4650
        %4652 = vrot.lane.b32.xlu0 %v4518, 81
        %v4653 = vpop.permute.xlu0 %4652
        %4654 = vrot.lane.b32.xlu0 %v4538, 81
        %v4655 = vpop.permute.xlu0 %4654
        %4656 = vrot.lane.b32.xlu0 %v4539, 81
        %v4657 = vpop.permute.xlu0 %4656
        %4658 = vrot.lane.b32.xlu0 %v4540, 81
        %v4659 = vpop.permute.xlu0 %4658
        %4660 = vrot.lane.b32.xlu0 %v4541, 81
        %v4661 = vpop.permute.xlu0 %4660
        %4662 = vrot.lane.b32.xlu0 %v4537, 81
        %v4663 = vpop.permute.xlu0 %4662
        %4664 = vrot.lane.b32.xlu0 %v4557, 81
        %v4665 = vpop.permute.xlu0 %4664
        %4666 = vrot.lane.b32.xlu0 %v4558, 81
        %v4667 = vpop.permute.xlu0 %4666
        %4668 = vrot.lane.b32.xlu0 %v4559, 81
        %v4669 = vpop.permute.xlu0 %4668
        %4670 = vrot.lane.b32.xlu0 %v4560, 81
        %v4671 = vpop.permute.xlu0 %4670
        %4672 = vrot.lane.b32.xlu0 %v4556, 81
        %v4673 = vpop.permute.xlu0 %4672
        %4674 = vrot.lane.b32.xlu0 %v4576, 81
        %v4675 = vpop.permute.xlu0 %4674
        %4676 = vrot.lane.b32.xlu0 %v4577, 81
        %v4677 = vpop.permute.xlu0 %4676
        %4678 = vrot.lane.b32.xlu0 %v4578, 81
        %v4679 = vpop.permute.xlu0 %4678
        %4680 = vrot.lane.b32.xlu0 %v4579, 81
        %v4681 = vpop.permute.xlu0 %4680
        %4682 = vrot.lane.b32.xlu0 %v4575, 81
        %v4683 = vpop.permute.xlu0 %4682
        %4684 = vrot.lane.b32.xlu0 %v4595, 81
        %v4685 = vpop.permute.xlu0 %4684
        %4686 = vrot.lane.b32.xlu0 %v4596, 81
        %v4687 = vpop.permute.xlu0 %4686
        %4688 = vrot.lane.b32.xlu0 %v4597, 81
        %v4689 = vpop.permute.xlu0 %4688
        %4690 = vrot.lane.b32.xlu0 %v4598, 81
        %v4691 = vpop.permute.xlu0 %4690
        %4692 = vrot.lane.b32.xlu0 %v4594, 81
        %v4693 = vpop.permute.xlu0 %4692
        %v4694 = vsel %vm2029, %v4605, %v4607
        %v4695 = vsel %vm2029, %v4607, %v4609
        %v4696 = vsel %vm2029, %v4609, %v4611
        %v4697 = vsel %vm2029, %v4611, %v4613
        %v4698 = vsel %vm2029, %v4615, %v4617
        %v4699 = vsel %vm2029, %v4617, %v4619
        %v4700 = vsel %vm2029, %v4619, %v4621
        %v4701 = vsel %vm2029, %v4621, %v4623
        %v4702 = vsel %vm2029, %v4625, %v4627
        %v4703 = vsel %vm2029, %v4627, %v4629
        %v4704 = vsel %vm2029, %v4629, %v4631
        %v4705 = vsel %vm2029, %v4631, %v4633
        %v4706 = vsel %vm2029, %v4635, %v4637
        %v4707 = vsel %vm2029, %v4637, %v4639
        %v4708 = vsel %vm2029, %v4639, %v4641
        %v4709 = vsel %vm2029, %v4641, %v4643
        %v4710 = vsel %vm2029, %v4645, %v4647
        %v4711 = vsel %vm2029, %v4647, %v4649
        %v4712 = vsel %vm2029, %v4649, %v4651
        %v4713 = vsel %vm2029, %v4651, %v4653
        %v4714 = vsel %vm2029, %v4655, %v4657
        %v4715 = vsel %vm2029, %v4657, %v4659
        %v4716 = vsel %vm2029, %v4659, %v4661
        %v4717 = vsel %vm2029, %v4661, %v4663
        %v4718 = vsel %vm2029, %v4665, %v4667
        %v4719 = vsel %vm2029, %v4667, %v4669
        %v4720 = vsel %vm2029, %v4669, %v4671
        %v4721 = vsel %vm2029, %v4671, %v4673
        %v4722 = vsel %vm2029, %v4675, %v4677
        %v4723 = vsel %vm2029, %v4677, %v4679
        %v4724 = vsel %vm2029, %v4679, %v4681
        %v4725 = vsel %vm2029, %v4681, %v4683
        %v4726 = vsel %vm2029, %v4685, %v4687
        %v4727 = vsel %vm2029, %v4687, %v4689
        %v4728 = vsel %vm2029, %v4689, %v4691
        %v4729 = vsel %vm2029, %v4691, %v4693
        %4766 = vmatprep.subr.mxu0 0.0
        %4767 = vmatpush1.msra.mxu0 0.0
        %4768 = vmatprep.subr.mxu0 0.0
        %4769 = vmatpush1.msra.mxu0 0.0
        %4770 = vmatprep.subr.mxu0 0.0
        %4771 = vmatpush1.msra.mxu0 0.0
        %4772 = vmatprep.subr.mxu0 0.0
        %4773 = vmatpush1.msra.mxu0 0.0
        %4774 = vmatprep.subr.mxu0 0.0
        %4775 = vmatpush1.msra.mxu0 0.0
        %4776 = vmatprep.subr.mxu0 0.0
        %4777 = vmatpush1.msra.mxu0 0.0
        %4778 = vmatprep.subr.mxu0 0.0
        %4779 = vmatpush1.msra.mxu0 0.0
        %4780 = vmatprep.subr.mxu0 %v4727
        %4781 = vmatpush1.msra.mxu0 %v4726
        %4782 = vmatprep.subr.mxu0 %v4723
        %4783 = vmatpush1.msra.mxu0 %v4722
        %4784 = vmatprep.subr.mxu0 %v4719
        %4785 = vmatpush1.msra.mxu0 %v4718
        %4786 = vmatprep.subr.mxu0 %v4715
        %4787 = vmatpush1.msra.mxu0 %v4714
        %4788 = vmatprep.subr.mxu0 %v4711
        %4789 = vmatpush1.msra.mxu0 %v4710
        %4790 = vmatprep.subr.mxu0 %v4707
        %4791 = vmatpush1.msra.mxu0 %v4706
        %4792 = vmatprep.subr.mxu0 %v4703
        %4793 = vmatpush1.msra.mxu0 %v4702
        %4794 = vmatprep.subr.mxu0 %v4699
        %4795 = vmatpush1.msra.mxu0 %v4698
        %4796 = vmatprep.subr.mxu0 %v4695
        %4797 = vmatpush1.msra.mxu0 %v4694
        %4798 = vmatprep.subr.mxu0 0.0
        %4799 = vmatpush2.msra.mxu0 0.0
        %4800 = vmatprep.subr.mxu0 0.0
        %4801 = vmatpush2.msra.mxu0 0.0
        %4802 = vmatprep.subr.mxu0 0.0
        %4803 = vmatpush2.msra.mxu0 0.0
        %4804 = vmatprep.subr.mxu0 0.0
        %4805 = vmatpush2.msra.mxu0 0.0
        %4806 = vmatprep.subr.mxu0 0.0
        %4807 = vmatpush2.msra.mxu0 0.0
        %4808 = vmatprep.subr.mxu0 0.0
        %4809 = vmatpush2.msra.mxu0 0.0
        %4810 = vmatprep.subr.mxu0 0.0
        %4811 = vmatpush2.msra.mxu0 0.0
        %4812 = vmatprep.subr.mxu0 0.0
        %4813 = vmatpush2.msra.mxu0 0.0
        %4814 = vmatprep.subr.mxu0 0.0
        %4815 = vmatpush2.msra.mxu0 0.0
        %4816 = vmatprep.subr.mxu0 0.0
        %4817 = vmatpush2.msra.mxu0 0.0
        %4818 = vmatprep.subr.mxu0 0.0
        %4819 = vmatpush2.msra.mxu0 0.0
        %4820 = vmatprep.subr.mxu0 0.0
        %4821 = vmatpush2.msra.mxu0 0.0
        %4822 = vmatprep.subr.mxu0 0.0
        %4823 = vmatpush2.msra.mxu0 0.0
        %4824 = vmatprep.subr.mxu0 0.0
        %4825 = vmatpush2.msra.mxu0 0.0
        %4826 = vmatprep.subr.mxu0 0.0
        %4827 = vmatpush2.msra.mxu0 0.0
        %4828 = vmatprep.subr.mxu0 0.0
        %4829 = vmatpush2.msra.mxu0 0.0
        %4830 = vmatprep.mubr.f32.mxu0 0.0
        %4831 = vmatmul.mubr.f32.gmra.mxu0 %v2377
        %v4832 = vpop.f32.mrf.mxu0
        %v4833 = vadd.f32 %v2206, %v4832
        %v4834 = vpop.f32.mrf.mxu0
        %v4835 = vadd.f32 %v2206, %v4834
        %4836 = vdwg.mxu0
        %4837 = vmatprep.subr.mxu0 0.0
        %4838 = vmatpush1.msra.mxu0 0.0
        %4839 = vmatprep.subr.mxu0 0.0
        %4840 = vmatpush1.msra.mxu0 0.0
        %4841 = vmatprep.subr.mxu0 0.0
        %4842 = vmatpush1.msra.mxu0 0.0
        %4843 = vmatprep.subr.mxu0 0.0
        %4844 = vmatpush1.msra.mxu0 0.0
        %4845 = vmatprep.subr.mxu0 0.0
        %4846 = vmatpush1.msra.mxu0 0.0
        %4847 = vmatprep.subr.mxu0 0.0
        %4848 = vmatpush1.msra.mxu0 0.0
        %4849 = vmatprep.subr.mxu0 0.0
        %4850 = vmatpush1.msra.mxu0 0.0
        %4851 = vmatprep.subr.mxu0 %v4729
        %4852 = vmatpush1.msra.mxu0 %v4728
        %4853 = vmatprep.subr.mxu0 %v4725
        %4854 = vmatpush1.msra.mxu0 %v4724
        %4855 = vmatprep.subr.mxu0 %v4721
        %4856 = vmatpush1.msra.mxu0 %v4720
        %4857 = vmatprep.subr.mxu0 %v4717
        %4858 = vmatpush1.msra.mxu0 %v4716
        %4859 = vmatprep.subr.mxu0 %v4713
        %4860 = vmatpush1.msra.mxu0 %v4712
        %4861 = vmatprep.subr.mxu0 %v4709
        %4862 = vmatpush1.msra.mxu0 %v4708
        %4863 = vmatprep.subr.mxu0 %v4705
        %4864 = vmatpush1.msra.mxu0 %v4704
        %4865 = vmatprep.subr.mxu0 %v4701
        %4866 = vmatpush1.msra.mxu0 %v4700
        %4867 = vmatprep.subr.mxu0 %v4697
        %4868 = vmatpush1.msra.mxu0 %v4696
        %4869 = vmatprep.subr.mxu0 0.0
        %4870 = vmatpush2.msra.mxu0 0.0
        %4871 = vmatprep.subr.mxu0 0.0
        %4872 = vmatpush2.msra.mxu0 0.0
        %4873 = vmatprep.subr.mxu0 0.0
        %4874 = vmatpush2.msra.mxu0 0.0
        %4875 = vmatprep.subr.mxu0 0.0
        %4876 = vmatpush2.msra.mxu0 0.0
        %4877 = vmatprep.subr.mxu0 0.0
        %4878 = vmatpush2.msra.mxu0 0.0
        %4879 = vmatprep.subr.mxu0 0.0
        %4880 = vmatpush2.msra.mxu0 0.0
        %4881 = vmatprep.subr.mxu0 0.0
        %4882 = vmatpush2.msra.mxu0 0.0
        %4883 = vmatprep.subr.mxu0 0.0
        %4884 = vmatpush2.msra.mxu0 0.0
        %4885 = vmatprep.subr.mxu0 0.0
        %4886 = vmatpush2.msra.mxu0 0.0
        %4887 = vmatprep.subr.mxu0 0.0
        %4888 = vmatpush2.msra.mxu0 0.0
        %4889 = vmatprep.subr.mxu0 0.0
        %4890 = vmatpush2.msra.mxu0 0.0
        %4891 = vmatprep.subr.mxu0 0.0
        %4892 = vmatpush2.msra.mxu0 0.0
        %4893 = vmatprep.subr.mxu0 0.0
        %4894 = vmatpush2.msra.mxu0 0.0
        %4895 = vmatprep.subr.mxu0 0.0
        %4896 = vmatpush2.msra.mxu0 0.0
        %4897 = vmatprep.subr.mxu0 0.0
        %4898 = vmatpush2.msra.mxu0 0.0
        %4899 = vmatprep.subr.mxu0 0.0
        %4900 = vmatpush2.msra.mxu0 0.0
        %4901 = vmatprep.mubr.f32.mxu0 0.0
        %4902 = vmatmul.mubr.f32.gmra.mxu0 %v2377
        %v4903 = vpop.f32.mrf.mxu0
        %v4904 = vadd.f32 %v2206, %v4903
        %v4905 = vpop.f32.mrf.mxu0
        %v4906 = vadd.f32 %v2206, %v4905
        %4907 = vdwg.mxu0
        %vm4908 = vcmp.gt.f32.partialorder %v1656, 0.1
        %vm4909 = vcmp.gt.f32.partialorder %v1657, 0.1
        %v4910 = vsel %vm4908, 1, 0
        %v4911 = vsel %vm4909, 1, 0
        %v4912 = vrot.slane %v4910, 5
        %v4913 = vrot.slane %v4912, 4
        %v4914 = vrot.slane %v4911, 5
        %v4915 = vrot.slane %v4914, 4
        %vm4916 = vcmp.ne.s32.totalorder %v4913, 0
        %vm4917 = vcmp.ne.s32.totalorder %v4915, 0
        %vm4918 = vmand %vm4908, %vm4916
        %vm4919 = vmand %vm4909, %vm4917
        %v4920 = vsel %vm4918, 1, 0
        %v4921 = vsel %vm4919, 1, 0
        %v4922 = vcvt.s32.f32 %v4920
        %v4923 = vcvt.s32.f32 %v4921
        %v4924 = vrot.slane %v4910, 6
        %v4925 = vrot.slane %v4924, 4
        %v4926 = vrot.slane %v4911, 6
        %v4927 = vrot.slane %v4926, 4
        %vm4928 = vcmp.ne.s32.totalorder %v4925, 0
        %vm4929 = vcmp.ne.s32.totalorder %v4927, 0
        %vm4930 = vmand %vm4908, %vm4928
        %vm4931 = vmand %vm4909, %vm4929
        %v4932 = vsel %vm4930, 1, 0
        %v4933 = vsel %vm4931, 1, 0
        %v4934 = vcvt.s32.f32 %v4932
        %v4935 = vcvt.s32.f32 %v4933
        %v4936 = vadd.f32 %v1656, 1e-06
        %v4937 = vadd.f32 %v1657, 1e-06
        %v4938 = vlog2.pop %v4936
        %v4939 = vmul.f32 %v4938, 0.6931472
        %v4940 = vlog2.pop %v4937
        %v4941 = vmul.f32 %v4940, 0.6931472
        %v4944 = vrot.slane %v4939, 5
        %v4945 = vrot.slane %v4944, 4
        %v4946 = vrot.slane %v4941, 5
        %v4947 = vrot.slane %v4946, 4
        %v4950 = vsub.f32 %v4939, %v4945
        %v4951 = vsub.f32 %v4941, %v4947
        %v4952 = vrot.slane %v4939, 6
        %v4953 = vrot.slane %v4952, 4
        %v4954 = vrot.slane %v4941, 6
        %v4955 = vrot.slane %v4954, 4
        %v4958 = vsub.f32 %v4939, %v4953
        %v4959 = vsub.f32 %v4941, %v4955
        %v4962 = vlaneseq
        %v4963 = vshrl.u32 %v4962, 7
        %v4964 = vsub.s32 0, %v4963
        %v4965 = vrot.slane %v4950, %v4964
        %v4966 = vlaneseq
        %v4967 = vshrl.u32 %v4966, 7
        %v4968 = vsub.s32 4, %v4967
        %v4969 = vrot.slane %v4950, %v4968
        %v4970 = vlaneseq
        %v4971 = vshrl.u32 %v4970, 7
        %v4972 = vsub.s32 0, %v4971
        %v4973 = vrot.slane %v4951, %v4972
        %v4974 = vlaneseq
        %v4975 = vshrl.u32 %v4974, 7
        %v4976 = vsub.s32 4, %v4975
        %v4977 = vrot.slane %v4951, %v4976
        %v4982 = vsub.f32 %v4833, %v4965
        %v4983 = vsub.f32 %v4835, %v4969
        %v4984 = vsub.f32 %v4904, %v4973
        %v4985 = vsub.f32 %v4906, %v4977
        %v4986 = vand.u32 2147483647, %v4982
        %v4987 = vand.u32 2147483647, %v4983
        %v4988 = vand.u32 2147483647, %v4984
        %v4989 = vand.u32 2147483647, %v4985
        %vm4990 = vcmp.lt.f32.partialorder %v4986, 0.01
        %vm4991 = vcmp.lt.f32.partialorder %v4987, 0.01
        %vm4992 = vcmp.lt.f32.partialorder %v4988, 0.01
        %vm4993 = vcmp.lt.f32.partialorder %v4989, 0.01
        %v4994 = vmul.f32 %v4986, 0.5
        %v4995 = vmul.f32 %v4987, 0.5
        %v4996 = vmul.f32 %v4988, 0.5
        %v4997 = vmul.f32 %v4989, 0.5
        %v4998 = vmul.f32 %v4994, %v4986
        %v4999 = vmul.f32 %v4995, %v4987
        %v5000 = vmul.f32 %v4996, %v4988
        %v5001 = vmul.f32 %v4997, %v4989
        %v5002 = vmul.f32 %v4998, %v2615
        %v5003 = vmul.f32 %v4999, %v2615
        %v5004 = vmul.f32 %v5000, %v2615
        %v5005 = vmul.f32 %v5001, %v2615
        %v5006 = vsub.f32 %v4986, 0.005
        %v5007 = vsub.f32 %v4987, 0.005
        %v5008 = vsub.f32 %v4988, 0.005
        %v5009 = vsub.f32 %v4989, 0.005
        %v5010 = vsel %vm4990, %v5002, %v5006
        %v5011 = vsel %vm4991, %v5003, %v5007
        %v5012 = vsel %vm4992, %v5004, %v5008
        %v5013 = vsel %vm4993, %v5005, %v5009
        %v5016 = vlaneseq
        %v5017 = vshrl.u32 %v5016, 7
        %v5018 = vsub.s32 0, %v5017
        %v5019 = vrot.slane %v4922, %v5018
        %v5020 = vlaneseq
        %v5021 = vshrl.u32 %v5020, 7
        %v5022 = vsub.s32 4, %v5021
        %v5023 = vrot.slane %v4922, %v5022
        %v5024 = vlaneseq
        %v5025 = vshrl.u32 %v5024, 7
        %v5026 = vsub.s32 0, %v5025
        %v5027 = vrot.slane %v4923, %v5026
        %v5028 = vlaneseq
        %v5029 = vshrl.u32 %v5028, 7
        %v5030 = vsub.s32 4, %v5029
        %v5031 = vrot.slane %v4923, %v5030
        %v5036 = vmul.f32 %v5010, %v5019
        %v5037 = vmul.f32 %v5011, %v5023
        %v5038 = vmul.f32 %v5012, %v5027
        %v5039 = vmul.f32 %v5013, %v5031
        %v5042 = vlaneseq
        %v5043 = vshrl.u32 %v5042, 7
        %v5044 = vsub.s32 0, %v5043
        %v5045 = vrot.slane %v4958, %v5044
        %v5046 = vlaneseq
        %v5047 = vshrl.u32 %v5046, 7
        %v5048 = vsub.s32 4, %v5047
        %v5049 = vrot.slane %v4958, %v5048
        %v5050 = vlaneseq
        %v5051 = vshrl.u32 %v5050, 7
        %v5052 = vsub.s32 0, %v5051
        %v5053 = vrot.slane %v4959, %v5052
        %v5054 = vlaneseq
        %v5055 = vshrl.u32 %v5054, 7
        %v5056 = vsub.s32 4, %v5055
        %v5057 = vrot.slane %v4959, %v5056
        %v5062 = vsub.f32 %v4833, %v5045
        %v5063 = vsub.f32 %v4835, %v5049
        %v5064 = vsub.f32 %v4904, %v5053
        %v5065 = vsub.f32 %v4906, %v5057
        %v5066 = vand.u32 2147483647, %v5062
        %v5067 = vand.u32 2147483647, %v5063
        %v5068 = vand.u32 2147483647, %v5064
        %v5069 = vand.u32 2147483647, %v5065
        %vm5070 = vcmp.lt.f32.partialorder %v5066, 0.01
        %vm5071 = vcmp.lt.f32.partialorder %v5067, 0.01
        %vm5072 = vcmp.lt.f32.partialorder %v5068, 0.01
        %vm5073 = vcmp.lt.f32.partialorder %v5069, 0.01
        %v5074 = vmul.f32 %v5066, 0.5
        %v5075 = vmul.f32 %v5067, 0.5
        %v5076 = vmul.f32 %v5068, 0.5
        %v5077 = vmul.f32 %v5069, 0.5
        %v5078 = vmul.f32 %v5074, %v5066
        %v5079 = vmul.f32 %v5075, %v5067
        %v5080 = vmul.f32 %v5076, %v5068
        %v5081 = vmul.f32 %v5077, %v5069
        %v5082 = vmul.f32 %v5078, %v2615
        %v5083 = vmul.f32 %v5079, %v2615
        %v5084 = vmul.f32 %v5080, %v2615
        %v5085 = vmul.f32 %v5081, %v2615
        %v5086 = vsub.f32 %v5066, 0.005
        %v5087 = vsub.f32 %v5067, 0.005
        %v5088 = vsub.f32 %v5068, 0.005
        %v5089 = vsub.f32 %v5069, 0.005
        %v5090 = vsel %vm5070, %v5082, %v5086
        %v5091 = vsel %vm5071, %v5083, %v5087
        %v5092 = vsel %vm5072, %v5084, %v5088
        %v5093 = vsel %vm5073, %v5085, %v5089
        %v5096 = vlaneseq
        %v5097 = vshrl.u32 %v5096, 7
        %v5098 = vsub.s32 0, %v5097
        %v5099 = vrot.slane %v4934, %v5098
        %v5100 = vlaneseq
        %v5101 = vshrl.u32 %v5100, 7
        %v5102 = vsub.s32 4, %v5101
        %v5103 = vrot.slane %v4934, %v5102
        %v5104 = vlaneseq
        %v5105 = vshrl.u32 %v5104, 7
        %v5106 = vsub.s32 0, %v5105
        %v5107 = vrot.slane %v4935, %v5106
        %v5108 = vlaneseq
        %v5109 = vshrl.u32 %v5108, 7
        %v5110 = vsub.s32 4, %v5109
        %v5111 = vrot.slane %v4935, %v5110
        %v5116 = vmul.f32 %v5090, %v5099
        %v5117 = vmul.f32 %v5091, %v5103
        %v5118 = vmul.f32 %v5092, %v5107
        %v5119 = vmul.f32 %v5093, %v5111
        %v5124 = vrot.slane %v5116, 1
        %v5125 = vrot.slane %v5117, 1
        %v5126 = vrot.slane %v5118, 1
        %v5127 = vrot.slane %v5119, 1
        %v5132 = vadd.f32 %v5036, %v5124
        %v5133 = vadd.f32 %v5037, %v5125
        %v5134 = vadd.f32 %v5038, %v5126
        %v5135 = vadd.f32 %v5039, %v5127
        %v5136 = vadd.f32 %v4922, %v4934
        %v5137 = vadd.f32 %v4923, %v4935
        %v5138 = vsel %vm2752, %v5132, 0.0
        %v5139 = vsel %vm2752, %v5133, 0.0
        %v5140 = vadd.f32 %v5138, %v5139
        %v5141 = vsel %vm2752, %v5134, 0.0
        %v5142 = vadd.f32 %v5140, %v5141
        %v5143 = vsel %vm2752, %v5135, 0.0
        %v5144 = vadd.f32 %v5142, %v5143
        %5145 = vadd.xlane.f32.xlu0 %v5144
        %v5146 = vpop.xlane.xlu0 %5145
        %v5147 = vrot.slane %v5146, 4
        %v5148 = vadd.f32 %v5146, %v5147
        %v5149 = vrot.slane %v5148, 2
        %v5150 = vadd.f32 %v5148, %v5149
        %v5151 = vrot.slane %v5150, 1
        %v5152 = vadd.f32 %v5150, %v5151
        %s5153 = vtos %v5152
        %v5156 = vlaneseq
        %v5157 = vshrl.u32 %v5156, 7
        %v5158 = vsub.s32 0, %v5157
        %v5159 = vrot.slane %v5136, %v5158
        %v5160 = vlaneseq
        %v5161 = vshrl.u32 %v5160, 7
        %v5162 = vsub.s32 4, %v5161
        %v5163 = vrot.slane %v5136, %v5162
        %v5164 = vlaneseq
        %v5165 = vshrl.u32 %v5164, 7
        %v5166 = vsub.s32 0, %v5165
        %v5167 = vrot.slane %v5137, %v5166
        %v5168 = vlaneseq
        %v5169 = vshrl.u32 %v5168, 7
        %v5170 = vsub.s32 4, %v5169
        %v5171 = vrot.slane %v5137, %v5170
        %v5176 = vsel %vm2752, %v5159, 0.0
        %v5177 = vsel %vm2752, %v5163, 0.0
        %v5178 = vadd.f32 %v5176, %v5177
        %v5179 = vsel %vm2752, %v5167, 0.0
        %v5180 = vadd.f32 %v5178, %v5179
        %v5181 = vsel %vm2752, %v5171, 0.0
        %v5182 = vadd.f32 %v5180, %v5181
        %5183 = vadd.xlane.f32.xlu0 %v5182
        %v5184 = vpop.xlane.xlu0 %5183
        %v5185 = vrot.slane %v5184, 4
        %v5186 = vadd.f32 %v5184, %v5185
        %v5187 = vrot.slane %v5186, 2
        %v5188 = vadd.f32 %v5186, %v5187
        %v5189 = vrot.slane %v5188, 1
        %v5190 = vadd.f32 %v5188, %v5189
        %s5191 = vtos %v5190
        %v5192 = vmul.f32 %v1626, %v1635
        %v5193 = vmul.f32 %v1628, %v1636
        %v5194 = vmul.f32 %v1630, %v1637
        %v5195 = vmul.f32 %v1632, %v1638
        %v5196 = vmul.f32 %v1634, %v1639
        %v5197 = vmul.f32 %v5192, %v1686
        %v5198 = vmul.f32 %v5193, %v1694
        %v5199 = vmul.f32 %v5194, %v1695
        %v5200 = vmul.f32 %v5195, %v1696
        %v5201 = vmul.f32 %v5196, %v1692
        %v5202 = vmul.f32 %v5192, %v1728
        %v5203 = vmul.f32 %v5193, %v1736
        %v5204 = vmul.f32 %v5194, %v1737
        %v5205 = vmul.f32 %v5195, %v1738
        %v5206 = vmul.f32 %v5196, %v1734
        %v5207 = vmul.f32 %v5192, %v1770
        %v5208 = vmul.f32 %v5193, %v1778
        %v5209 = vmul.f32 %v5194, %v1779
        %v5210 = vmul.f32 %v5195, %v1780
        %v5211 = vmul.f32 %v5196, %v1776
        %v5212 = vmul.f32 %v5192, %v1812
        %v5213 = vmul.f32 %v5193, %v1820
        %v5214 = vmul.f32 %v5194, %v1821
        %v5215 = vmul.f32 %v5195, %v1822
        %v5216 = vmul.f32 %v5196, %v1818
        %v5217 = vmul.f32 %v5192, %v1854
        %v5218 = vmul.f32 %v5193, %v1862
        %v5219 = vmul.f32 %v5194, %v1863
        %v5220 = vmul.f32 %v5195, %v1864
        %v5221 = vmul.f32 %v5196, %v1860
        %v5222 = vmul.f32 %v5192, %v1896
        %v5223 = vmul.f32 %v5193, %v1904
        %v5224 = vmul.f32 %v5194, %v1905
        %v5225 = vmul.f32 %v5195, %v1906
        %v5226 = vmul.f32 %v5196, %v1902
        %v5227 = vmul.f32 %v5192, %v1938
        %v5228 = vmul.f32 %v5193, %v1946
        %v5229 = vmul.f32 %v5194, %v1947
        %v5230 = vmul.f32 %v5195, %v1948
        %v5231 = vmul.f32 %v5196, %v1944
        %v5232 = vmul.f32 %v5192, %v1980
        %v5233 = vmul.f32 %v5193, %v1988
        %v5234 = vmul.f32 %v5194, %v1989
        %v5235 = vmul.f32 %v5195, %v1990
        %v5236 = vmul.f32 %v5196, %v1986
        %v5237 = vmul.f32 %v5192, %v2022
        %v5238 = vmul.f32 %v5193, %v2030
        %v5239 = vmul.f32 %v5194, %v2031
        %v5240 = vmul.f32 %v5195, %v2032
        %v5241 = vmul.f32 %v5196, %v2028
        %5247 = vrot.lane.b32.xlu0 %v5202, 127
        %v5248 = vpop.permute.xlu0 %5247
        %5249 = vrot.lane.b32.xlu0 %v5203, 127
        %v5250 = vpop.permute.xlu0 %5249
        %5251 = vrot.lane.b32.xlu0 %v5204, 127
        %v5252 = vpop.permute.xlu0 %5251
        %5253 = vrot.lane.b32.xlu0 %v5205, 127
        %v5254 = vpop.permute.xlu0 %5253
        %5255 = vrot.lane.b32.xlu0 %v5206, 127
        %v5256 = vpop.permute.xlu0 %5255
        %v5257 = vsel %vm2058, %v5248, %v5250
        %v5258 = vsel %vm2058, %v5250, %v5252
        %v5259 = vsel %vm2058, %v5252, %v5254
        %v5260 = vsel %vm2058, %v5254, %v5256
        %5266 = vrot.lane.b32.xlu0 %v5207, 126
        %v5267 = vpop.permute.xlu0 %5266
        %5268 = vrot.lane.b32.xlu0 %v5208, 126
        %v5269 = vpop.permute.xlu0 %5268
        %5270 = vrot.lane.b32.xlu0 %v5209, 126
        %v5271 = vpop.permute.xlu0 %5270
        %5272 = vrot.lane.b32.xlu0 %v5210, 126
        %v5273 = vpop.permute.xlu0 %5272
        %5274 = vrot.lane.b32.xlu0 %v5211, 126
        %v5275 = vpop.permute.xlu0 %5274
        %v5276 = vsel %vm2078, %v5267, %v5269
        %v5277 = vsel %vm2078, %v5269, %v5271
        %v5278 = vsel %vm2078, %v5271, %v5273
        %v5279 = vsel %vm2078, %v5273, %v5275
        %5285 = vrot.lane.b32.xlu0 %v5212, 112
        %v5286 = vpop.permute.xlu0 %5285
        %5287 = vrot.lane.b32.xlu0 %v5213, 112
        %v5288 = vpop.permute.xlu0 %5287
        %5289 = vrot.lane.b32.xlu0 %v5214, 112
        %v5290 = vpop.permute.xlu0 %5289
        %5291 = vrot.lane.b32.xlu0 %v5215, 112
        %v5292 = vpop.permute.xlu0 %5291
        %5293 = vrot.lane.b32.xlu0 %v5216, 112
        %v5294 = vpop.permute.xlu0 %5293
        %v5295 = vsel %vm2098, %v5286, %v5288
        %v5296 = vsel %vm2098, %v5288, %v5290
        %v5297 = vsel %vm2098, %v5290, %v5292
        %v5298 = vsel %vm2098, %v5292, %v5294
        %5304 = vrot.lane.b32.xlu0 %v5217, 111
        %v5305 = vpop.permute.xlu0 %5304
        %5306 = vrot.lane.b32.xlu0 %v5218, 111
        %v5307 = vpop.permute.xlu0 %5306
        %5308 = vrot.lane.b32.xlu0 %v5219, 111
        %v5309 = vpop.permute.xlu0 %5308
        %5310 = vrot.lane.b32.xlu0 %v5220, 111
        %v5311 = vpop.permute.xlu0 %5310
        %5312 = vrot.lane.b32.xlu0 %v5221, 111
        %v5313 = vpop.permute.xlu0 %5312
        %v5314 = vsel %vm2118, %v5305, %v5307
        %v5315 = vsel %vm2118, %v5307, %v5309
        %v5316 = vsel %vm2118, %v5309, %v5311
        %v5317 = vsel %vm2118, %v5311, %v5313
        %5323 = vrot.lane.b32.xlu0 %v5222, 110
        %v5324 = vpop.permute.xlu0 %5323
        %5325 = vrot.lane.b32.xlu0 %v5223, 110
        %v5326 = vpop.permute.xlu0 %5325
        %5327 = vrot.lane.b32.xlu0 %v5224, 110
        %v5328 = vpop.permute.xlu0 %5327
        %5329 = vrot.lane.b32.xlu0 %v5225, 110
        %v5330 = vpop.permute.xlu0 %5329
        %5331 = vrot.lane.b32.xlu0 %v5226, 110
        %v5332 = vpop.permute.xlu0 %5331
        %v5333 = vsel %vm2138, %v5324, %v5326
        %v5334 = vsel %vm2138, %v5326, %v5328
        %v5335 = vsel %vm2138, %v5328, %v5330
        %v5336 = vsel %vm2138, %v5330, %v5332
        %5342 = vrot.lane.b32.xlu0 %v5227, 96
        %v5343 = vpop.permute.xlu0 %5342
        %5344 = vrot.lane.b32.xlu0 %v5228, 96
        %v5345 = vpop.permute.xlu0 %5344
        %5346 = vrot.lane.b32.xlu0 %v5229, 96
        %v5347 = vpop.permute.xlu0 %5346
        %5348 = vrot.lane.b32.xlu0 %v5230, 96
        %v5349 = vpop.permute.xlu0 %5348
        %5350 = vrot.lane.b32.xlu0 %v5231, 96
        %v5351 = vpop.permute.xlu0 %5350
        %v5352 = vsel %vm2158, %v5343, %v5345
        %v5353 = vsel %vm2158, %v5345, %v5347
        %v5354 = vsel %vm2158, %v5347, %v5349
        %v5355 = vsel %vm2158, %v5349, %v5351
        %5361 = vrot.lane.b32.xlu0 %v5232, 95
        %v5362 = vpop.permute.xlu0 %5361
        %5363 = vrot.lane.b32.xlu0 %v5233, 95
        %v5364 = vpop.permute.xlu0 %5363
        %5365 = vrot.lane.b32.xlu0 %v5234, 95
        %v5366 = vpop.permute.xlu0 %5365
        %5367 = vrot.lane.b32.xlu0 %v5235, 95
        %v5368 = vpop.permute.xlu0 %5367
        %5369 = vrot.lane.b32.xlu0 %v5236, 95
        %v5370 = vpop.permute.xlu0 %5369
        %v5371 = vsel %vm2178, %v5362, %v5364
        %v5372 = vsel %vm2178, %v5364, %v5366
        %v5373 = vsel %vm2178, %v5366, %v5368
        %v5374 = vsel %vm2178, %v5368, %v5370
        %5380 = vrot.lane.b32.xlu0 %v5237, 94
        %v5381 = vpop.permute.xlu0 %5380
        %5382 = vrot.lane.b32.xlu0 %v5238, 94
        %v5383 = vpop.permute.xlu0 %5382
        %5384 = vrot.lane.b32.xlu0 %v5239, 94
        %v5385 = vpop.permute.xlu0 %5384
        %5386 = vrot.lane.b32.xlu0 %v5240, 94
        %v5387 = vpop.permute.xlu0 %5386
        %5388 = vrot.lane.b32.xlu0 %v5241, 94
        %v5389 = vpop.permute.xlu0 %5388
        %v5390 = vsel %vm2198, %v5381, %v5383
        %v5391 = vsel %vm2198, %v5383, %v5385
        %v5392 = vsel %vm2198, %v5385, %v5387
        %v5393 = vsel %vm2198, %v5387, %v5389
        %5399 = vrot.lane.b32.xlu0 %v5197, 81
        %v5400 = vpop.permute.xlu0 %5399
        %5401 = vrot.lane.b32.xlu0 %v5198, 81
        %v5402 = vpop.permute.xlu0 %5401
        %5403 = vrot.lane.b32.xlu0 %v5199, 81
        %v5404 = vpop.permute.xlu0 %5403
        %5405 = vrot.lane.b32.xlu0 %v5200, 81
        %v5406 = vpop.permute.xlu0 %5405
        %5407 = vrot.lane.b32.xlu0 %v5201, 81
        %v5408 = vpop.permute.xlu0 %5407
        %5409 = vrot.lane.b32.xlu0 %v5257, 81
        %v5410 = vpop.permute.xlu0 %5409
        %5411 = vrot.lane.b32.xlu0 %v5258, 81
        %v5412 = vpop.permute.xlu0 %5411
        %5413 = vrot.lane.b32.xlu0 %v5259, 81
        %v5414 = vpop.permute.xlu0 %5413
        %5415 = vrot.lane.b32.xlu0 %v5260, 81
        %v5416 = vpop.permute.xlu0 %5415
        %5417 = vrot.lane.b32.xlu0 %v5256, 81
        %v5418 = vpop.permute.xlu0 %5417
        %5419 = vrot.lane.b32.xlu0 %v5276, 81
        %v5420 = vpop.permute.xlu0 %5419
        %5421 = vrot.lane.b32.xlu0 %v5277, 81
        %v5422 = vpop.permute.xlu0 %5421
        %5423 = vrot.lane.b32.xlu0 %v5278, 81
        %v5424 = vpop.permute.xlu0 %5423
        %5425 = vrot.lane.b32.xlu0 %v5279, 81
        %v5426 = vpop.permute.xlu0 %5425
        %5427 = vrot.lane.b32.xlu0 %v5275, 81
        %v5428 = vpop.permute.xlu0 %5427
        %5429 = vrot.lane.b32.xlu0 %v5295, 81
        %v5430 = vpop.permute.xlu0 %5429
        %5431 = vrot.lane.b32.xlu0 %v5296, 81
        %v5432 = vpop.permute.xlu0 %5431
        %5433 = vrot.lane.b32.xlu0 %v5297, 81
        %v5434 = vpop.permute.xlu0 %5433
        %5435 = vrot.lane.b32.xlu0 %v5298, 81
        %v5436 = vpop.permute.xlu0 %5435
        %5437 = vrot.lane.b32.xlu0 %v5294, 81
        %v5438 = vpop.permute.xlu0 %5437
        %5439 = vrot.lane.b32.xlu0 %v5314, 81
        %v5440 = vpop.permute.xlu0 %5439
        %5441 = vrot.lane.b32.xlu0 %v5315, 81
        %v5442 = vpop.permute.xlu0 %5441
        %5443 = vrot.lane.b32.xlu0 %v5316, 81
        %v5444 = vpop.permute.xlu0 %5443
        %5445 = vrot.lane.b32.xlu0 %v5317, 81
        %v5446 = vpop.permute.xlu0 %5445
        %5447 = vrot.lane.b32.xlu0 %v5313, 81
        %v5448 = vpop.permute.xlu0 %5447
        %5449 = vrot.lane.b32.xlu0 %v5333, 81
        %v5450 = vpop.permute.xlu0 %5449
        %5451 = vrot.lane.b32.xlu0 %v5334, 81
        %v5452 = vpop.permute.xlu0 %5451
        %5453 = vrot.lane.b32.xlu0 %v5335, 81
        %v5454 = vpop.permute.xlu0 %5453
        %5455 = vrot.lane.b32.xlu0 %v5336, 81
        %v5456 = vpop.permute.xlu0 %5455
        %5457 = vrot.lane.b32.xlu0 %v5332, 81
        %v5458 = vpop.permute.xlu0 %5457
        %5459 = vrot.lane.b32.xlu0 %v5352, 81
        %v5460 = vpop.permute.xlu0 %5459
        %5461 = vrot.lane.b32.xlu0 %v5353, 81
        %v5462 = vpop.permute.xlu0 %5461
        %5463 = vrot.lane.b32.xlu0 %v5354, 81
        %v5464 = vpop.permute.xlu0 %5463
        %5465 = vrot.lane.b32.xlu0 %v5355, 81
        %v5466 = vpop.permute.xlu0 %5465
        %5467 = vrot.lane.b32.xlu0 %v5351, 81
        %v5468 = vpop.permute.xlu0 %5467
        %5469 = vrot.lane.b32.xlu0 %v5371, 81
        %v5470 = vpop.permute.xlu0 %5469
        %5471 = vrot.lane.b32.xlu0 %v5372, 81
        %v5472 = vpop.permute.xlu0 %5471
        %5473 = vrot.lane.b32.xlu0 %v5373, 81
        %v5474 = vpop.permute.xlu0 %5473
        %5475 = vrot.lane.b32.xlu0 %v5374, 81
        %v5476 = vpop.permute.xlu0 %5475
        %5477 = vrot.lane.b32.xlu0 %v5370, 81
        %v5478 = vpop.permute.xlu0 %5477
        %5479 = vrot.lane.b32.xlu0 %v5390, 81
        %v5480 = vpop.permute.xlu0 %5479
        %5481 = vrot.lane.b32.xlu0 %v5391, 81
        %v5482 = vpop.permute.xlu0 %5481
        %5483 = vrot.lane.b32.xlu0 %v5392, 81
        %v5484 = vpop.permute.xlu0 %5483
        %5485 = vrot.lane.b32.xlu0 %v5393, 81
        %v5486 = vpop.permute.xlu0 %5485
        %5487 = vrot.lane.b32.xlu0 %v5389, 81
        %v5488 = vpop.permute.xlu0 %5487
        %v5489 = vsel %vm2029, %v5400, %v5402
        %v5490 = vsel %vm2029, %v5402, %v5404
        %v5491 = vsel %vm2029, %v5404, %v5406
        %v5492 = vsel %vm2029, %v5406, %v5408
        %v5493 = vsel %vm2029, %v5410, %v5412
        %v5494 = vsel %vm2029, %v5412, %v5414
        %v5495 = vsel %vm2029, %v5414, %v5416
        %v5496 = vsel %vm2029, %v5416, %v5418
        %v5497 = vsel %vm2029, %v5420, %v5422
        %v5498 = vsel %vm2029, %v5422, %v5424
        %v5499 = vsel %vm2029, %v5424, %v5426
        %v5500 = vsel %vm2029, %v5426, %v5428
        %v5501 = vsel %vm2029, %v5430, %v5432
        %v5502 = vsel %vm2029, %v5432, %v5434
        %v5503 = vsel %vm2029, %v5434, %v5436
        %v5504 = vsel %vm2029, %v5436, %v5438
        %v5505 = vsel %vm2029, %v5440, %v5442
        %v5506 = vsel %vm2029, %v5442, %v5444
        %v5507 = vsel %vm2029, %v5444, %v5446
        %v5508 = vsel %vm2029, %v5446, %v5448
        %v5509 = vsel %vm2029, %v5450, %v5452
        %v5510 = vsel %vm2029, %v5452, %v5454
        %v5511 = vsel %vm2029, %v5454, %v5456
        %v5512 = vsel %vm2029, %v5456, %v5458
        %v5513 = vsel %vm2029, %v5460, %v5462
        %v5514 = vsel %vm2029, %v5462, %v5464
        %v5515 = vsel %vm2029, %v5464, %v5466
        %v5516 = vsel %vm2029, %v5466, %v5468
        %v5517 = vsel %vm2029, %v5470, %v5472
        %v5518 = vsel %vm2029, %v5472, %v5474
        %v5519 = vsel %vm2029, %v5474, %v5476
        %v5520 = vsel %vm2029, %v5476, %v5478
        %v5521 = vsel %vm2029, %v5480, %v5482
        %v5522 = vsel %vm2029, %v5482, %v5484
        %v5523 = vsel %vm2029, %v5484, %v5486
        %v5524 = vsel %vm2029, %v5486, %v5488
        %5561 = vmatprep.subr.mxu0 0.0
        %5562 = vmatpush1.msra.mxu0 0.0
        %5563 = vmatprep.subr.mxu0 0.0
        %5564 = vmatpush1.msra.mxu0 0.0
        %5565 = vmatprep.subr.mxu0 0.0
        %5566 = vmatpush1.msra.mxu0 0.0
        %5567 = vmatprep.subr.mxu0 0.0
        %5568 = vmatpush1.msra.mxu0 0.0
        %5569 = vmatprep.subr.mxu0 0.0
        %5570 = vmatpush1.msra.mxu0 0.0
        %5571 = vmatprep.subr.mxu0 0.0
        %5572 = vmatpush1.msra.mxu0 0.0
        %5573 = vmatprep.subr.mxu0 0.0
        %5574 = vmatpush1.msra.mxu0 0.0
        %5575 = vmatprep.subr.mxu0 %v5522
        %5576 = vmatpush1.msra.mxu0 %v5521
        %5577 = vmatprep.subr.mxu0 %v5518
        %5578 = vmatpush1.msra.mxu0 %v5517
        %5579 = vmatprep.subr.mxu0 %v5514
        %5580 = vmatpush1.msra.mxu0 %v5513
        %5581 = vmatprep.subr.mxu0 %v5510
        %5582 = vmatpush1.msra.mxu0 %v5509
        %5583 = vmatprep.subr.mxu0 %v5506
        %5584 = vmatpush1.msra.mxu0 %v5505
        %5585 = vmatprep.subr.mxu0 %v5502
        %5586 = vmatpush1.msra.mxu0 %v5501
        %5587 = vmatprep.subr.mxu0 %v5498
        %5588 = vmatpush1.msra.mxu0 %v5497
        %5589 = vmatprep.subr.mxu0 %v5494
        %5590 = vmatpush1.msra.mxu0 %v5493
        %5591 = vmatprep.subr.mxu0 %v5490
        %5592 = vmatpush1.msra.mxu0 %v5489
        %5593 = vmatprep.subr.mxu0 0.0
        %5594 = vmatpush2.msra.mxu0 0.0
        %5595 = vmatprep.subr.mxu0 0.0
        %5596 = vmatpush2.msra.mxu0 0.0
        %5597 = vmatprep.subr.mxu0 0.0
        %5598 = vmatpush2.msra.mxu0 0.0
        %5599 = vmatprep.subr.mxu0 0.0
        %5600 = vmatpush2.msra.mxu0 0.0
        %5601 = vmatprep.subr.mxu0 0.0
        %5602 = vmatpush2.msra.mxu0 0.0
        %5603 = vmatprep.subr.mxu0 0.0
        %5604 = vmatpush2.msra.mxu0 0.0
        %5605 = vmatprep.subr.mxu0 0.0
        %5606 = vmatpush2.msra.mxu0 0.0
        %5607 = vmatprep.subr.mxu0 0.0
        %5608 = vmatpush2.msra.mxu0 0.0
        %5609 = vmatprep.subr.mxu0 0.0
        %5610 = vmatpush2.msra.mxu0 0.0
        %5611 = vmatprep.subr.mxu0 0.0
        %5612 = vmatpush2.msra.mxu0 0.0
        %5613 = vmatprep.subr.mxu0 0.0
        %5614 = vmatpush2.msra.mxu0 0.0
        %5615 = vmatprep.subr.mxu0 0.0
        %5616 = vmatpush2.msra.mxu0 0.0
        %5617 = vmatprep.subr.mxu0 0.0
        %5618 = vmatpush2.msra.mxu0 0.0
        %5619 = vmatprep.subr.mxu0 0.0
        %5620 = vmatpush2.msra.mxu0 0.0
        %5621 = vmatprep.subr.mxu0 0.0
        %5622 = vmatpush2.msra.mxu0 0.0
        %5623 = vmatprep.subr.mxu0 0.0
        %5624 = vmatpush2.msra.mxu0 0.0
        %5625 = vmatprep.mubr.f32.mxu0 0.0
        %5626 = vmatmul.mubr.f32.gmra.mxu0 %v2377
        %v5627 = vpop.f32.mrf.mxu0
        %v5628 = vadd.f32 %v2206, %v5627
        %v5629 = vpop.f32.mrf.mxu0
        %v5630 = vadd.f32 %v2206, %v5629
        %5631 = vdwg.mxu0
        %5632 = vmatprep.subr.mxu0 0.0
        %5633 = vmatpush1.msra.mxu0 0.0
        %5634 = vmatprep.subr.mxu0 0.0
        %5635 = vmatpush1.msra.mxu0 0.0
        %5636 = vmatprep.subr.mxu0 0.0
        %5637 = vmatpush1.msra.mxu0 0.0
        %5638 = vmatprep.subr.mxu0 0.0
        %5639 = vmatpush1.msra.mxu0 0.0
        %5640 = vmatprep.subr.mxu0 0.0
        %5641 = vmatpush1.msra.mxu0 0.0
        %5642 = vmatprep.subr.mxu0 0.0
        %5643 = vmatpush1.msra.mxu0 0.0
        %5644 = vmatprep.subr.mxu0 0.0
        %5645 = vmatpush1.msra.mxu0 0.0
        %5646 = vmatprep.subr.mxu0 %v5524
        %5647 = vmatpush1.msra.mxu0 %v5523
        %5648 = vmatprep.subr.mxu0 %v5520
        %5649 = vmatpush1.msra.mxu0 %v5519
        %5650 = vmatprep.subr.mxu0 %v5516
        %5651 = vmatpush1.msra.mxu0 %v5515
        %5652 = vmatprep.subr.mxu0 %v5512
        %5653 = vmatpush1.msra.mxu0 %v5511
        %5654 = vmatprep.subr.mxu0 %v5508
        %5655 = vmatpush1.msra.mxu0 %v5507
        %5656 = vmatprep.subr.mxu0 %v5504
        %5657 = vmatpush1.msra.mxu0 %v5503
        %5658 = vmatprep.subr.mxu0 %v5500
        %5659 = vmatpush1.msra.mxu0 %v5499
        %5660 = vmatprep.subr.mxu0 %v5496
        %5661 = vmatpush1.msra.mxu0 %v5495
        %5662 = vmatprep.subr.mxu0 %v5492
        %5663 = vmatpush1.msra.mxu0 %v5491
        %5664 = vmatprep.subr.mxu0 0.0
        %5665 = vmatpush2.msra.mxu0 0.0
        %5666 = vmatprep.subr.mxu0 0.0
        %5667 = vmatpush2.msra.mxu0 0.0
        %5668 = vmatprep.subr.mxu0 0.0
        %5669 = vmatpush2.msra.mxu0 0.0
        %5670 = vmatprep.subr.mxu0 0.0
        %5671 = vmatpush2.msra.mxu0 0.0
        %5672 = vmatprep.subr.mxu0 0.0
        %5673 = vmatpush2.msra.mxu0 0.0
        %5674 = vmatprep.subr.mxu0 0.0
        %5675 = vmatpush2.msra.mxu0 0.0
        %5676 = vmatprep.subr.mxu0 0.0
        %5677 = vmatpush2.msra.mxu0 0.0
        %5678 = vmatprep.subr.mxu0 0.0
        %5679 = vmatpush2.msra.mxu0 0.0
        %5680 = vmatprep.subr.mxu0 0.0
        %5681 = vmatpush2.msra.mxu0 0.0
        %5682 = vmatprep.subr.mxu0 0.0
        %5683 = vmatpush2.msra.mxu0 0.0
        %5684 = vmatprep.subr.mxu0 0.0
        %5685 = vmatpush2.msra.mxu0 0.0
        %5686 = vmatprep.subr.mxu0 0.0
        %5687 = vmatpush2.msra.mxu0 0.0
        %5688 = vmatprep.subr.mxu0 0.0
        %5689 = vmatpush2.msra.mxu0 0.0
        %5690 = vmatprep.subr.mxu0 0.0
        %5691 = vmatpush2.msra.mxu0 0.0
        %5692 = vmatprep.subr.mxu0 0.0
        %5693 = vmatpush2.msra.mxu0 0.0
        %5694 = vmatprep.subr.mxu0 0.0
        %5695 = vmatpush2.msra.mxu0 0.0
        %5696 = vmatprep.mubr.f32.mxu0 0.0
        %5697 = vmatmul.mubr.f32.gmra.mxu0 %v2377
        %v5698 = vpop.f32.mrf.mxu0
        %v5699 = vadd.f32 %v2206, %v5698
        %v5700 = vpop.f32.mrf.mxu0
        %v5701 = vadd.f32 %v2206, %v5700
        %5702 = vdwg.mxu0
        %vm5703 = vcmp.gt.f32.partialorder %v1658, 0.1
        %vm5704 = vcmp.gt.f32.partialorder %v1659, 0.1
        %v5705 = vsel %vm5703, 1, 0
        %v5706 = vsel %vm5704, 1, 0
        %v5707 = vrot.slane %v5705, 5
        %v5708 = vrot.slane %v5707, 4
        %v5709 = vrot.slane %v5706, 5
        %v5710 = vrot.slane %v5709, 4
        %vm5711 = vcmp.ne.s32.totalorder %v5708, 0
        %vm5712 = vcmp.ne.s32.totalorder %v5710, 0
        %vm5713 = vmand %vm5703, %vm5711
        %vm5714 = vmand %vm5704, %vm5712
        %v5715 = vsel %vm5713, 1, 0
        %v5716 = vsel %vm5714, 1, 0
        %v5717 = vcvt.s32.f32 %v5715
        %v5718 = vcvt.s32.f32 %v5716
        %v5719 = vrot.slane %v5705, 6
        %v5720 = vrot.slane %v5719, 4
        %v5721 = vrot.slane %v5706, 6
        %v5722 = vrot.slane %v5721, 4
        %vm5723 = vcmp.ne.s32.totalorder %v5720, 0
        %vm5724 = vcmp.ne.s32.totalorder %v5722, 0
        %vm5725 = vmand %vm5703, %vm5723
        %vm5726 = vmand %vm5704, %vm5724
        %v5727 = vsel %vm5725, 1, 0
        %v5728 = vsel %vm5726, 1, 0
        %v5729 = vcvt.s32.f32 %v5727
        %v5730 = vcvt.s32.f32 %v5728
        %v5731 = vadd.f32 %v1658, 1e-06
        %v5732 = vadd.f32 %v1659, 1e-06
        %v5733 = vlog2.pop %v5731
        %v5734 = vmul.f32 %v5733, 0.6931472
        %v5735 = vlog2.pop %v5732
        %v5736 = vmul.f32 %v5735, 0.6931472
        %v5739 = vrot.slane %v5734, 5
        %v5740 = vrot.slane %v5739, 4
        %v5741 = vrot.slane %v5736, 5
        %v5742 = vrot.slane %v5741, 4
        %v5745 = vsub.f32 %v5734, %v5740
        %v5746 = vsub.f32 %v5736, %v5742
        %v5747 = vrot.slane %v5734, 6
        %v5748 = vrot.slane %v5747, 4
        %v5749 = vrot.slane %v5736, 6
        %v5750 = vrot.slane %v5749, 4
        %v5753 = vsub.f32 %v5734, %v5748
        %v5754 = vsub.f32 %v5736, %v5750
        %v5757 = vlaneseq
        %v5758 = vshrl.u32 %v5757, 7
        %v5759 = vsub.s32 0, %v5758
        %v5760 = vrot.slane %v5745, %v5759
        %v5761 = vlaneseq
        %v5762 = vshrl.u32 %v5761, 7
        %v5763 = vsub.s32 4, %v5762
        %v5764 = vrot.slane %v5745, %v5763
        %v5765 = vlaneseq
        %v5766 = vshrl.u32 %v5765, 7
        %v5767 = vsub.s32 0, %v5766
        %v5768 = vrot.slane %v5746, %v5767
        %v5769 = vlaneseq
        %v5770 = vshrl.u32 %v5769, 7
        %v5771 = vsub.s32 4, %v5770
        %v5772 = vrot.slane %v5746, %v5771
        %v5777 = vsub.f32 %v5628, %v5760
        %v5778 = vsub.f32 %v5630, %v5764
        %v5779 = vsub.f32 %v5699, %v5768
        %v5780 = vsub.f32 %v5701, %v5772
        %v5781 = vand.u32 2147483647, %v5777
        %v5782 = vand.u32 2147483647, %v5778
        %v5783 = vand.u32 2147483647, %v5779
        %v5784 = vand.u32 2147483647, %v5780
        %vm5785 = vcmp.lt.f32.partialorder %v5781, 0.01
        %vm5786 = vcmp.lt.f32.partialorder %v5782, 0.01
        %vm5787 = vcmp.lt.f32.partialorder %v5783, 0.01
        %vm5788 = vcmp.lt.f32.partialorder %v5784, 0.01
        %v5789 = vmul.f32 %v5781, 0.5
        %v5790 = vmul.f32 %v5782, 0.5
        %v5791 = vmul.f32 %v5783, 0.5
        %v5792 = vmul.f32 %v5784, 0.5
        %v5793 = vmul.f32 %v5789, %v5781
        %v5794 = vmul.f32 %v5790, %v5782
        %v5795 = vmul.f32 %v5791, %v5783
        %v5796 = vmul.f32 %v5792, %v5784
        %v5797 = vmul.f32 %v5793, %v2615
        %v5798 = vmul.f32 %v5794, %v2615
        %v5799 = vmul.f32 %v5795, %v2615
        %v5800 = vmul.f32 %v5796, %v2615
        %v5801 = vsub.f32 %v5781, 0.005
        %v5802 = vsub.f32 %v5782, 0.005
        %v5803 = vsub.f32 %v5783, 0.005
        %v5804 = vsub.f32 %v5784, 0.005
        %v5805 = vsel %vm5785, %v5797, %v5801
        %v5806 = vsel %vm5786, %v5798, %v5802
        %v5807 = vsel %vm5787, %v5799, %v5803
        %v5808 = vsel %vm5788, %v5800, %v5804
        %v5811 = vlaneseq
        %v5812 = vshrl.u32 %v5811, 7
        %v5813 = vsub.s32 0, %v5812
        %v5814 = vrot.slane %v5717, %v5813
        %v5815 = vlaneseq
        %v5816 = vshrl.u32 %v5815, 7
        %v5817 = vsub.s32 4, %v5816
        %v5818 = vrot.slane %v5717, %v5817
        %v5819 = vlaneseq
        %v5820 = vshrl.u32 %v5819, 7
        %v5821 = vsub.s32 0, %v5820
        %v5822 = vrot.slane %v5718, %v5821
        %v5823 = vlaneseq
        %v5824 = vshrl.u32 %v5823, 7
        %v5825 = vsub.s32 4, %v5824
        %v5826 = vrot.slane %v5718, %v5825
        %v5831 = vmul.f32 %v5805, %v5814
        %v5832 = vmul.f32 %v5806, %v5818
        %v5833 = vmul.f32 %v5807, %v5822
        %v5834 = vmul.f32 %v5808, %v5826
        %v5837 = vlaneseq
        %v5838 = vshrl.u32 %v5837, 7
        %v5839 = vsub.s32 0, %v5838
        %v5840 = vrot.slane %v5753, %v5839
        %v5841 = vlaneseq
        %v5842 = vshrl.u32 %v5841, 7
        %v5843 = vsub.s32 4, %v5842
        %v5844 = vrot.slane %v5753, %v5843
        %v5845 = vlaneseq
        %v5846 = vshrl.u32 %v5845, 7
        %v5847 = vsub.s32 0, %v5846
        %v5848 = vrot.slane %v5754, %v5847
        %v5849 = vlaneseq
        %v5850 = vshrl.u32 %v5849, 7
        %v5851 = vsub.s32 4, %v5850
        %v5852 = vrot.slane %v5754, %v5851
        %v5857 = vsub.f32 %v5628, %v5840
        %v5858 = vsub.f32 %v5630, %v5844
        %v5859 = vsub.f32 %v5699, %v5848
        %v5860 = vsub.f32 %v5701, %v5852
        %v5861 = vand.u32 2147483647, %v5857
        %v5862 = vand.u32 2147483647, %v5858
        %v5863 = vand.u32 2147483647, %v5859
        %v5864 = vand.u32 2147483647, %v5860
        %vm5865 = vcmp.lt.f32.partialorder %v5861, 0.01
        %vm5866 = vcmp.lt.f32.partialorder %v5862, 0.01
        %vm5867 = vcmp.lt.f32.partialorder %v5863, 0.01
        %vm5868 = vcmp.lt.f32.partialorder %v5864, 0.01
        %v5869 = vmul.f32 %v5861, 0.5
        %v5870 = vmul.f32 %v5862, 0.5
        %v5871 = vmul.f32 %v5863, 0.5
        %v5872 = vmul.f32 %v5864, 0.5
        %v5873 = vmul.f32 %v5869, %v5861
        %v5874 = vmul.f32 %v5870, %v5862
        %v5875 = vmul.f32 %v5871, %v5863
        %v5876 = vmul.f32 %v5872, %v5864
        %v5877 = vmul.f32 %v5873, %v2615
        %v5878 = vmul.f32 %v5874, %v2615
        %v5879 = vmul.f32 %v5875, %v2615
        %v5880 = vmul.f32 %v5876, %v2615
        %v5881 = vsub.f32 %v5861, 0.005
        %v5882 = vsub.f32 %v5862, 0.005
        %v5883 = vsub.f32 %v5863, 0.005
        %v5884 = vsub.f32 %v5864, 0.005
        %v5885 = vsel %vm5865, %v5877, %v5881
        %v5886 = vsel %vm5866, %v5878, %v5882
        %v5887 = vsel %vm5867, %v5879, %v5883
        %v5888 = vsel %vm5868, %v5880, %v5884
        %v5891 = vlaneseq
        %v5892 = vshrl.u32 %v5891, 7
        %v5893 = vsub.s32 0, %v5892
        %v5894 = vrot.slane %v5729, %v5893
        %v5895 = vlaneseq
        %v5896 = vshrl.u32 %v5895, 7
        %v5897 = vsub.s32 4, %v5896
        %v5898 = vrot.slane %v5729, %v5897
        %v5899 = vlaneseq
        %v5900 = vshrl.u32 %v5899, 7
        %v5901 = vsub.s32 0, %v5900
        %v5902 = vrot.slane %v5730, %v5901
        %v5903 = vlaneseq
        %v5904 = vshrl.u32 %v5903, 7
        %v5905 = vsub.s32 4, %v5904
        %v5906 = vrot.slane %v5730, %v5905
        %v5911 = vmul.f32 %v5885, %v5894
        %v5912 = vmul.f32 %v5886, %v5898
        %v5913 = vmul.f32 %v5887, %v5902
        %v5914 = vmul.f32 %v5888, %v5906
        %v5919 = vrot.slane %v5911, 1
        %v5920 = vrot.slane %v5912, 1
        %v5921 = vrot.slane %v5913, 1
        %v5922 = vrot.slane %v5914, 1
        %v5927 = vadd.f32 %v5831, %v5919
        %v5928 = vadd.f32 %v5832, %v5920
        %v5929 = vadd.f32 %v5833, %v5921
        %v5930 = vadd.f32 %v5834, %v5922
        %v5931 = vadd.f32 %v5717, %v5729
        %v5932 = vadd.f32 %v5718, %v5730
        %v5933 = vsel %vm2752, %v5927, 0.0
        %v5934 = vsel %vm2752, %v5928, 0.0
        %v5935 = vadd.f32 %v5933, %v5934
        %v5936 = vsel %vm2752, %v5929, 0.0
        %v5937 = vadd.f32 %v5935, %v5936
        %v5938 = vsel %vm2752, %v5930, 0.0
        %v5939 = vadd.f32 %v5937, %v5938
        %5940 = vadd.xlane.f32.xlu0 %v5939
        %v5941 = vpop.xlane.xlu0 %5940
        %v5942 = vrot.slane %v5941, 4
        %v5943 = vadd.f32 %v5941, %v5942
        %v5944 = vrot.slane %v5943, 2
        %v5945 = vadd.f32 %v5943, %v5944
        %v5946 = vrot.slane %v5945, 1
        %v5947 = vadd.f32 %v5945, %v5946
        %s5948 = vtos %v5947
        %v5951 = vlaneseq
        %v5952 = vshrl.u32 %v5951, 7
        %v5953 = vsub.s32 0, %v5952
        %v5954 = vrot.slane %v5931, %v5953
        %v5955 = vlaneseq
        %v5956 = vshrl.u32 %v5955, 7
        %v5957 = vsub.s32 4, %v5956
        %v5958 = vrot.slane %v5931, %v5957
        %v5959 = vlaneseq
        %v5960 = vshrl.u32 %v5959, 7
        %v5961 = vsub.s32 0, %v5960
        %v5962 = vrot.slane %v5932, %v5961
        %v5963 = vlaneseq
        %v5964 = vshrl.u32 %v5963, 7
        %v5965 = vsub.s32 4, %v5964
        %v5966 = vrot.slane %v5932, %v5965
        %v5971 = vsel %vm2752, %v5954, 0.0
        %v5972 = vsel %vm2752, %v5958, 0.0
        %v5973 = vadd.f32 %v5971, %v5972
        %v5974 = vsel %vm2752, %v5962, 0.0
        %v5975 = vadd.f32 %v5973, %v5974
        %v5976 = vsel %vm2752, %v5966, 0.0
        %v5977 = vadd.f32 %v5975, %v5976
        %5978 = vadd.xlane.f32.xlu0 %v5977
        %v5979 = vpop.xlane.xlu0 %5978
        %v5980 = vrot.slane %v5979, 4
        %v5981 = vadd.f32 %v5979, %v5980
        %v5982 = vrot.slane %v5981, 2
        %v5983 = vadd.f32 %v5981, %v5982
        %v5984 = vrot.slane %v5983, 1
        %v5985 = vadd.f32 %v5983, %v5984
        %s5986 = vtos %v5985
        %v5987 = vlaneseq
        %v5988 = vshrl.u32 %v5987, 7
        %v5989 = vlaneseq
        %v5990 = vand.u32 %v5989, 127
        %vm5991 = vcmp.eq.s32.totalorder %v5988, 0
        %vm5992 = vcmp.eq.s32.totalorder %v5990, 0
        %vm5993 = vmand %vm5991, %vm5992
        %v5994 = vstv %s2768
        %v5995 = vsel %vm5993, %v5994, 0.0
        %vm5996 = vcmp.eq.s32.totalorder %v5990, 1
        %vm5997 = vmand %vm5991, %vm5996
        %v5998 = vstv %s2806
        %v5999 = vsel %vm5997, %v5998, %v5995
        %vm6000 = vcmp.eq.s32.totalorder %v5988, 1
        %vm6001 = vmand %vm6000, %vm5992
        %v6002 = vstv %s3563
        %v6003 = vsel %vm6001, %v6002, %v5999
        %vm6004 = vmand %vm6000, %vm5996
        %v6005 = vstv %s3601
        %v6006 = vsel %vm6004, %v6005, %v6003
        %vm6007 = vcmp.eq.s32.totalorder %v5988, 2
        %vm6008 = vmand %vm6007, %vm5992
        %v6009 = vstv %s4358
        %v6010 = vsel %vm6008, %v6009, %v6006
        %vm6011 = vmand %vm6007, %vm5996
        %v6012 = vstv %s4396
        %v6013 = vsel %vm6011, %v6012, %v6010
        %vm6014 = vcmp.eq.s32.totalorder %v5988, 3
        %vm6015 = vmand %vm6014, %vm5992
        %v6016 = vstv %s5153
        %v6017 = vsel %vm6015, %v6016, %v6013
        %vm6018 = vmand %vm6014, %vm5996
        %v6019 = vstv %s5191
        %v6020 = vsel %vm6018, %v6019, %v6017
        %vm6021 = vcmp.eq.s32.totalorder %v5988, 4
        %vm6022 = vmand %vm6021, %vm5992
        %v6023 = vstv %s5948
        %v6024 = vsel %vm6022, %v6023, %v6020
        %vm6025 = vmand %vm6021, %vm5996
        %v6026 = vstv %s5986
        %v6027 = vsel %vm6025, %v6026, %v6024
        %6028 = vst [vmem:[%s484] sm:$0xff] %v6027
        %p6029 = scmp.lt.s32.totalorder %s19, 1
        %s6030 = scalar_select %p6029, %s19, 1
        %s6031 = smul.addr %s6030, 8
        %s6032 = scalar_lea.vmem %s8, %s6031
        // Predicated region
        $region79: #{_lambda_.1} parent=73 // pred_check
          %p6033 = pneg %p215
        $region80: #{_lambda_.1} parent=73 // pred_check_branch
          %6035 = sbr.rel (%p6033) target = $region82
        $region81: #{_lambda_.1} parent=73 // pred_region
          _
        $region82: #{_lambda_.1} parent=73 // pred_fallthru
          _
      $region74: #{_lambda_.1} parent=5 // pred_fallthru
        _
      %p6036 = scmp.le.s32.totalorder 2, %s14
      // Predicated region
      $region83: #{_lambda_.1} parent=5 // pred_check
        %p6037 = pneg %p6036
      $region84: #{_lambda_.1} parent=5 // pred_check_branch
        %6039 = sbr.rel (%p6037) target = $region86
      $region85: #{_lambda_.1} parent=5 // pred_region
        %s6040 = ssub.s32 %s14, 2
        // Predicated region
        $region87: #{_lambda_.1} parent=85 // pred_check
          %p6041 = pneg %p221
        $region88: #{_lambda_.1} parent=85 // pred_check_branch
          %6043 = sbr.rel (%p6041) target = $region90
        $region89: #{_lambda_.1} parent=85 // pred_region
          %p6044 = scmp.lt.s32.totalorder %s20, 1
          %s6045 = scalar_select %p6044, %s20, 1
          %s6046 = smul.addr %s6045, 8
          %s6047 = scalar_lea.vmem %s8, %s6046
        $region90: #{_lambda_.1} parent=85 // pred_fallthru
          _
      $region86: #{_lambda_.1} parent=5 // pred_fallthru
        _
    $region6: #{_lambda_.1} parent=1 // loop_footer
      %s18 = sadd.s32 1, %s14
    $region7: #{_lambda_.1} parent=1 // loop_footer_branch
      %13 = sbr.rel target = $region3
    $region8: #{_lambda_.1} parent=1 // loop_exit
      _

</llo_original>
